<compile_context>
chip_gen: v5e
topology: v5e:2x2
jax: 0.10.0
libtpu: 0.0.40
codegen_flags: <defaults>
</compile_context>

<pallas_src>
import functools
import math

import jax
import jax.numpy as jnp
from jax.experimental import pallas as pl
from jax.experimental.pallas import tpu as pltpu


def _layernorm(x, gamma, beta, eps):
    mu = jnp.mean(x, axis=-1, keepdims=True)
    xc = x - mu
    var = jnp.mean(xc * xc, axis=-1, keepdims=True)
    return xc * jax.lax.rsqrt(var + eps) * gamma + beta


def _gelu(x):
    # TODO(synk): HF BERT's default "gelu" is the exact erf-based version; erf
    # is not reliably lowered by Mosaic, so the tanh approximation is used.
    c = math.sqrt(2.0 / math.pi)
    return 0.5 * x * (1.0 + jnp.tanh(c * (x + 0.044715 * x * x * x)))


def adapted_bert_layer_kernel(
    x_ref,
    wq_ref, bq_ref, wk_ref, bk_ref, wv_ref, bv_ref,
    wao_ref, bao_ref, g1_ref, be1_ref,
    wi_ref, bi_ref, wo_ref, bo_ref, g2_ref, be2_ref,
    wf1_ref, bf1_ref, wf2_ref, bf2_ref, wf3_ref, bf3_ref,
    g3_ref, be3_ref,
    o_ref,
    ctx_ref,            # VMEM scratch (Bt, S, D) fp32: per-head context slab
    *, num_heads, biasoffset,
):
    Bt, S, D = x_ref.shape
    dh = D // num_heads
    scale = 1.0 / math.sqrt(dh)
    f32 = jnp.float32
    bf16 = jnp.bfloat16

    # Fold the batch tile into the matmul M dimension: all dense layers see a
    # (Bt*S, D) slab (fp32 residual path, bf16 only at the MXU operands).
    x = x_ref[...].reshape(Bt * S, D)                     # fp32
    xb = x.astype(bf16)

    # ---- BertSelfAttention (attention_mask=None, head_mask=None) ----
    q = jnp.dot(xb, wq_ref[...], preferred_element_type=f32) + bq_ref[...]
    k = jnp.dot(xb, wk_ref[...], preferred_element_type=f32) + bk_ref[...]
    v = jnp.dot(xb, wv_ref[...], preferred_element_type=f32) + bv_ref[...]

    qb = q.reshape(Bt, S, D).astype(bf16)
    kb = k.reshape(Bt, S, D).astype(bf16)
    vb = v.reshape(Bt, S, D).astype(bf16)

    for h in range(num_heads):                            # static head loop
        sl = slice(h * dh, (h + 1) * dh)
        qh = qb[:, :, sl]                                 # (Bt, S, dh)
        kh = kb[:, :, sl]
        vh = vb[:, :, sl]
        # contraction on the last axes of both operands: no XLU transpose
        s = jnp.einsum("bqd,bkd->bqk", qh, kh,
                       preferred_element_type=f32) * scale           # (Bt,S,S)
        s = s - jnp.max(s, axis=-1, keepdims=True)                    # stable
        p = jnp.exp(s)
        p = p * pl.reciprocal(jnp.sum(p, axis=-1, keepdims=True), approx=True)
        ctx_h = jnp.einsum("bqk,bkd->bqd", p.astype(bf16), vh,
                           preferred_element_type=f32)                # (Bt,S,dh)
        ctx_ref[:, :, sl] = ctx_h                         # static-offset write

    ctx = ctx_ref[...].reshape(Bt * S, D).astype(bf16)

    # ---- BertSelfOutput: dense + residual + LayerNorm (eps=1e-12) ----
    attn = jnp.dot(ctx, wao_ref[...], preferred_element_type=f32) + bao_ref[...]
    attn = _layernorm(attn + x, g1_ref[...], be1_ref[...], 1e-12)

    # ---- BertIntermediate (GELU) + BertOutput: dense + residual + LN ----
    inter = _gelu(jnp.dot(attn.astype(bf16), wi_ref[...],
                          preferred_element_type=f32) + bi_ref[...])
    layer = jnp.dot(inter.astype(bf16), wo_ref[...],
                    preferred_element_type=f32) + bo_ref[...]
    layer = _layernorm(layer + attn, g2_ref[...], be2_ref[...], 1e-12)

    # ---- GatedTransformerLayerAdapter ----
    h1 = jnp.maximum(jnp.dot(layer.astype(bf16), wf1_ref[...],
                             preferred_element_type=f32) + bf1_ref[...], 0.0)
    h1b = h1.astype(bf16)
    a = jnp.dot(h1b, wf2_ref[...], preferred_element_type=f32) + bf2_ref[...]
    zlin = (jnp.dot(h1b, wf3_ref[...], preferred_element_type=f32)
            + bf3_ref[...] + biasoffset)
    z = jax.nn.sigmoid(zlin)                              # EUP logistic
    out = a * z + layer * (1.0 - z)
    out = _layernorm(out, g3_ref[...], be3_ref[...], 1e-5)  # torch LN default eps

    # NOTE: for D >= 128 (real BERT sizes) this store is already lane-dense;
    # at the tiny demo D=32 a lane-fold would trade a masked store for an XLU
    # relayout, so the natural (Bt, S, D) layout is kept.
    o_ref[...] = out.reshape(Bt, S, D).astype(o_ref.dtype)


# positions of the dense weight matrices in the 24-entry param list (cast bf16)
_WEIGHT_IDX = frozenset({0, 2, 4, 6, 10, 12, 16, 18, 20})


def _choose_batch_tile(batch, seq, target_rows=256):
    """Fill the fused M dim (batch_tile*seq) toward target_rows while keeping
    >= 2 grid steps when possible so both v7x TensorCores get work."""
    bt = max(1, min(batch, -(-target_rows // seq)))
    while batch % bt:
        bt -= 1
    if batch // bt < 2:
        for cand in range(bt - 1, 0, -1):
            if batch % cand == 0 and batch // cand >= 2:
                if cand * seq >= 128 or cand * seq >= (batch * seq) // 2:
                    bt = cand
                    break
    return bt


def adapted_bert_encoder_layer(x, params, *, num_heads, biasoffset=-3.3,
                               batch_tile=None):
    """x: (B, S, D) fp32. params: ordered list of 24 weight/bias/LN arrays."""
    B, S, D = x.shape
    assert D % num_heads == 0
    Bt = batch_tile if batch_tile is not None else _choose_batch_tile(B, S)
    assert B % Bt == 0
    grid = (B // Bt,)

    # bf16 weights for the MXU; biases / LayerNorm params stay fp32.
    params = [p.astype(jnp.bfloat16) if i in _WEIGHT_IDX else p.astype(jnp.float32)
              for i, p in enumerate(params)]

    kernel = functools.partial(adapted_bert_layer_kernel,
                               num_heads=num_heads, biasoffset=biasoffset)

    # advisory cost estimate for XLA scheduling around the custom call
    inter_dim = params[10].shape[1]
    hdim = params[16].shape[1]
    flops = (2 * B * S * (4 * D * D + 2 * D * inter_dim + 3 * D * hdim)
             + 4 * B * S * S * D)
    transcendentals = B * num_heads * S * S + B * S * (inter_dim + D + 4)
    bytes_accessed = (2 * x.size * x.dtype.itemsize
                      + sum(int(p.size) * p.dtype.itemsize for p in params))
    cost = pl.CostEstimate(flops=int(flops),
                           transcendentals=int(transcendentals),
                           bytes_accessed=int(bytes_accessed))

    # VMEM budget: ~80% of physical capacity, capped at 100 MiB
    # (v7x: ~51 MiB, v5e/v6e: 100 MiB).
    try:
        vmem_cap = int(pltpu.get_tpu_info().vmem_capacity_bytes)
    except Exception:
        vmem_cap = 64 * 1024 * 1024
    vmem_limit = min(int(vmem_cap * 0.8), 100 * 1024 * 1024)

    def build(single_buffer_params):
        pkw = {"pipeline_mode": pl.Buffered(1)} if single_buffer_params else {}
        in_specs = [pl.BlockSpec((Bt, S, D), lambda b: (b, 0, 0))]
        for p in params:
            # constant across the grid: keep fully resident, no double buffer
            in_specs.append(pl.BlockSpec(p.shape, lambda b: (0, 0), **pkw))
        return pl.pallas_call(
            kernel,
            out_shape=jax.ShapeDtypeStruct((B, S, D), x.dtype),
            grid=grid,
            in_specs=in_specs,
            out_specs=pl.BlockSpec((Bt, S, D), lambda b: (b, 0, 0)),
            scratch_shapes=[pltpu.VMEM((Bt, S, D), jnp.float32)],
            compiler_params=pltpu.CompilerParams(
                dimension_semantics=("parallel",),
                vmem_limit_bytes=vmem_limit),
            cost_estimate=cost,
        )

    try:
        out = jax.block_until_ready(build(True)(x, *params))
    except Exception:
        # pipeline_mode=pl.Buffered(1) not supported on this jax build;
        # fall back to default double-buffered parameter specs.
        out = jax.block_until_ready(build(False)(x, *params))
    return out


def init_params(key, D, intermediate, hdim):
    """Deterministic synthetic parameters (weights already (in, out), fp32)."""
    def dense(k, n_in, n_out):
        k1, k2 = jax.random.split(k)
        w = jax.random.normal(k1, (n_in, n_out), jnp.float32) * 0.02
        b = jax.random.normal(k2, (1, n_out), jnp.float32) * 0.02
        return w, b

    ks = jax.random.split(key, 9)
    wq, bq = dense(ks[0], D, D)
    wk, bk = dense(ks[1], D, D)
    wv, bv = dense(ks[2], D, D)
    wao, bao = dense(ks[3], D, D)
    g1, be1 = jnp.ones((1, D), jnp.float32), jnp.zeros((1, D), jnp.float32)
    wi, bi = dense(ks[4], D, intermediate)
    wo, bo = dense(ks[5], intermediate, D)
    g2, be2 = jnp.ones((1, D), jnp.float32), jnp.zeros((1, D), jnp.float32)
    wf1, bf1 = dense(ks[6], D, hdim)
    wf2, bf2 = dense(ks[7], hdim, D)
    wf3, bf3 = dense(ks[8], hdim, D)
    g3, be3 = jnp.ones((1, D), jnp.float32), jnp.zeros((1, D), jnp.float32)
    return [wq, bq, wk, bk, wv, bv, wao, bao, g1, be1,
            wi, bi, wo, bo, g2, be2,
            wf1, bf1, wf2, bf2, wf3, bf3, g3, be3]


if __name__ == "__main__":
    # Small BERT-ish config consistent with the module:
    #   dim = 32 (core.output.dense.out_features), compression = 2 -> hdim = 16
    B, S, D = 2, 8, 32
    num_heads = 4
    intermediate = 64
    compression = 2
    hdim = D // compression

    key = jax.random.PRNGKey(0)
    kx, kp = jax.random.split(key)
    hidden_states = jax.random.normal(kx, (B, S, D), jnp.float32)
    params = init_params(kp, D, intermediate, hdim)

    out = adapted_bert_encoder_layer(hidden_states, params, num_heads=num_heads)
    out = jax.block_until_ready(out)

    assert out.shape == (B, S, D), out.shape
    assert bool(jnp.all(jnp.isfinite(out)))
    print("KERNEL_OK")
</pallas_src>

<mosaic_0001>
module attributes {stable_mosaic.version = 11 : i64} {
  func.func @adapted_bert_layer_kernel(%arg0: i32, %arg1: memref<1x8x32xf32, #tpu.memory_space<vmem>>, %arg2: memref<32x32xbf16, #tpu.memory_space<vmem>>, %arg3: memref<1x32xf32, #tpu.memory_space<vmem>>, %arg4: memref<32x32xbf16, #tpu.memory_space<vmem>>, %arg5: memref<1x32xf32, #tpu.memory_space<vmem>>, %arg6: memref<32x32xbf16, #tpu.memory_space<vmem>>, %arg7: memref<1x32xf32, #tpu.memory_space<vmem>>, %arg8: memref<32x32xbf16, #tpu.memory_space<vmem>>, %arg9: memref<1x32xf32, #tpu.memory_space<vmem>>, %arg10: memref<1x32xf32, #tpu.memory_space<vmem>>, %arg11: memref<1x32xf32, #tpu.memory_space<vmem>>, %arg12: memref<32x64xbf16, #tpu.memory_space<vmem>>, %arg13: memref<1x64xf32, #tpu.memory_space<vmem>>, %arg14: memref<64x32xbf16, #tpu.memory_space<vmem>>, %arg15: memref<1x32xf32, #tpu.memory_space<vmem>>, %arg16: memref<1x32xf32, #tpu.memory_space<vmem>>, %arg17: memref<1x32xf32, #tpu.memory_space<vmem>>, %arg18: memref<32x16xbf16, #tpu.memory_space<vmem>>, %arg19: memref<1x16xf32, #tpu.memory_space<vmem>>, %arg20: memref<16x32xbf16, #tpu.memory_space<vmem>>, %arg21: memref<1x32xf32, #tpu.memory_space<vmem>>, %arg22: memref<16x32xbf16, #tpu.memory_space<vmem>>, %arg23: memref<1x32xf32, #tpu.memory_space<vmem>>, %arg24: memref<1x32xf32, #tpu.memory_space<vmem>>, %arg25: memref<1x32xf32, #tpu.memory_space<vmem>>, %arg26: memref<1x8x32xf32, #tpu.memory_space<vmem>>, %arg27: memref<1x8x32xf32, #tpu.memory_space<vmem>>) attributes {dimension_semantics = [#tpu.dimension_semantics<parallel>], iteration_bounds = array<i64: 2>, scalar_prefetch = 0 : i64, scratch_operands = 1 : i64, tpu.core_type = #tpu.core_type<tc>, window_params = [{transform_indices = @transform_0, window_bounds = array<i64: 1, 8, 32>}, {pipeline_mode = #tpu.pipeline_mode<synchronous>, transform_indices = @transform_1, window_bounds = array<i64: 32, 32>}, {pipeline_mode = #tpu.pipeline_mode<synchronous>, transform_indices = @transform_2, window_bounds = array<i64: 1, 32>}, {pipeline_mode = #tpu.pipeline_mode<synchronous>, transform_indices = @transform_3, window_bounds = array<i64: 32, 32>}, {pipeline_mode = #tpu.pipeline_mode<synchronous>, transform_indices = @transform_4, window_bounds = array<i64: 1, 32>}, {pipeline_mode = #tpu.pipeline_mode<synchronous>, transform_indices = @transform_5, window_bounds = array<i64: 32, 32>}, {pipeline_mode = #tpu.pipeline_mode<synchronous>, transform_indices = @transform_6, window_bounds = array<i64: 1, 32>}, {pipeline_mode = #tpu.pipeline_mode<synchronous>, transform_indices = @transform_7, window_bounds = array<i64: 32, 32>}, {pipeline_mode = #tpu.pipeline_mode<synchronous>, transform_indices = @transform_8, window_bounds = array<i64: 1, 32>}, {pipeline_mode = #tpu.pipeline_mode<synchronous>, transform_indices = @transform_9, window_bounds = array<i64: 1, 32>}, {pipeline_mode = #tpu.pipeline_mode<synchronous>, transform_indices = @transform_10, window_bounds = array<i64: 1, 32>}, {pipeline_mode = #tpu.pipeline_mode<synchronous>, transform_indices = @transform_11, window_bounds = array<i64: 32, 64>}, {pipeline_mode = #tpu.pipeline_mode<synchronous>, transform_indices = @transform_12, window_bounds = array<i64: 1, 64>}, {pipeline_mode = #tpu.pipeline_mode<synchronous>, transform_indices = @transform_13, window_bounds = array<i64: 64, 32>}, {pipeline_mode = #tpu.pipeline_mode<synchronous>, transform_indices = @transform_14, window_bounds = array<i64: 1, 32>}, {pipeline_mode = #tpu.pipeline_mode<synchronous>, transform_indices = @transform_15, window_bounds = array<i64: 1, 32>}, {pipeline_mode = #tpu.pipeline_mode<synchronous>, transform_indices = @transform_16, window_bounds = array<i64: 1, 32>}, {pipeline_mode = #tpu.pipeline_mode<synchronous>, transform_indices = @transform_17, window_bounds = array<i64: 32, 16>}, {pipeline_mode = #tpu.pipeline_mode<synchronous>, transform_indices = @transform_18, window_bounds = array<i64: 1, 16>}, {pipeline_mode = #tpu.pipeline_mode<synchronous>, transform_indices = @transform_19, window_bounds = array<i64: 16, 32>}, {pipeline_mode = #tpu.pipeline_mode<synchronous>, transform_indices = @transform_20, window_bounds = array<i64: 1, 32>}, {pipeline_mode = #tpu.pipeline_mode<synchronous>, transform_indices = @transform_21, window_bounds = array<i64: 16, 32>}, {pipeline_mode = #tpu.pipeline_mode<synchronous>, transform_indices = @transform_22, window_bounds = array<i64: 1, 32>}, {pipeline_mode = #tpu.pipeline_mode<synchronous>, transform_indices = @transform_23, window_bounds = array<i64: 1, 32>}, {pipeline_mode = #tpu.pipeline_mode<synchronous>, transform_indices = @transform_24, window_bounds = array<i64: 1, 32>}, {transform_indices = @transform_25, window_bounds = array<i64: 1, 8, 32>}]} {
    %c0 = arith.constant 0 : index
    %c0_0 = arith.constant 0 : index
    %c0_1 = arith.constant 0 : index
    %0 = vector.load %arg1[%c0, %c0_0, %c0_1] : memref<1x8x32xf32, #tpu.memory_space<vmem>>, vector<1x8x32xf32>
    %1 = vector.shape_cast %0 : vector<1x8x32xf32> to vector<8x32xf32>
    %2 = arith.truncf %1 : vector<8x32xf32> to vector<8x32xbf16>
    %c0_2 = arith.constant 0 : index
    %c0_3 = arith.constant 0 : index
    %3 = vector.load %arg2[%c0_2, %c0_3] : memref<32x32xbf16, #tpu.memory_space<vmem>>, vector<32x32xbf16>
    %cst = arith.constant dense<0.000000e+00> : vector<8x32xf32>
    %4 = tpu.matmul %2, %3, %cst {dimension_numbers = #tpu.dot_dimension_numbers<[1], [0], [0], [1], [0, 0, 1, 1], [], []>} : vector<8x32xbf16>, vector<32x32xbf16>, vector<8x32xf32> -> vector<8x32xf32>
    %c0_4 = arith.constant 0 : index
    %c0_5 = arith.constant 0 : index
    %5 = vector.load %arg3[%c0_4, %c0_5] : memref<1x32xf32, #tpu.memory_space<vmem>>, vector<1x32xf32>
    %6 = vector.broadcast %5 : vector<1x32xf32> to vector<8x32xf32>
    %7 = arith.addf %4, %6 : vector<8x32xf32>
    %c0_6 = arith.constant 0 : index
    %c0_7 = arith.constant 0 : index
    %8 = vector.load %arg4[%c0_6, %c0_7] : memref<32x32xbf16, #tpu.memory_space<vmem>>, vector<32x32xbf16>
    %cst_8 = arith.constant dense<0.000000e+00> : vector<8x32xf32>
    %9 = tpu.matmul %2, %8, %cst_8 {dimension_numbers = #tpu.dot_dimension_numbers<[1], [0], [0], [1], [0, 0, 1, 1], [], []>} : vector<8x32xbf16>, vector<32x32xbf16>, vector<8x32xf32> -> vector<8x32xf32>
    %c0_9 = arith.constant 0 : index
    %c0_10 = arith.constant 0 : index
    %10 = vector.load %arg5[%c0_9, %c0_10] : memref<1x32xf32, #tpu.memory_space<vmem>>, vector<1x32xf32>
    %11 = vector.broadcast %10 : vector<1x32xf32> to vector<8x32xf32>
    %12 = arith.addf %9, %11 : vector<8x32xf32>
    %c0_11 = arith.constant 0 : index
    %c0_12 = arith.constant 0 : index
    %13 = vector.load %arg6[%c0_11, %c0_12] : memref<32x32xbf16, #tpu.memory_space<vmem>>, vector<32x32xbf16>
    %cst_13 = arith.constant dense<0.000000e+00> : vector<8x32xf32>
    %14 = tpu.matmul %2, %13, %cst_13 {dimension_numbers = #tpu.dot_dimension_numbers<[1], [0], [0], [1], [0, 0, 1, 1], [], []>} : vector<8x32xbf16>, vector<32x32xbf16>, vector<8x32xf32> -> vector<8x32xf32>
    %c0_14 = arith.constant 0 : index
    %c0_15 = arith.constant 0 : index
    %15 = vector.load %arg7[%c0_14, %c0_15] : memref<1x32xf32, #tpu.memory_space<vmem>>, vector<1x32xf32>
    %16 = vector.broadcast %15 : vector<1x32xf32> to vector<8x32xf32>
    %17 = arith.addf %14, %16 : vector<8x32xf32>
    %18 = vector.shape_cast %7 : vector<8x32xf32> to vector<1x8x32xf32>
    %19 = arith.truncf %18 : vector<1x8x32xf32> to vector<1x8x32xbf16>
    %20 = vector.shape_cast %12 : vector<8x32xf32> to vector<1x8x32xf32>
    %21 = arith.truncf %20 : vector<1x8x32xf32> to vector<1x8x32xbf16>
    %22 = vector.shape_cast %17 : vector<8x32xf32> to vector<1x8x32xf32>
    %23 = arith.truncf %22 : vector<1x8x32xf32> to vector<1x8x32xbf16>
    %24 = vector.extract_strided_slice %19 {offsets = [0, 0, 0], sizes = [1, 8, 8], strides = [1, 1, 1]} : vector<1x8x32xbf16> to vector<1x8x8xbf16>
    %25 = vector.extract_strided_slice %21 {offsets = [0, 0, 0], sizes = [1, 8, 8], strides = [1, 1, 1]} : vector<1x8x32xbf16> to vector<1x8x8xbf16>
    %26 = vector.extract_strided_slice %23 {offsets = [0, 0, 0], sizes = [1, 8, 8], strides = [1, 1, 1]} : vector<1x8x32xbf16> to vector<1x8x8xbf16>
    "tpu.trace_start"() <{level = 10 : i32, message = "bqd,bkd->bqk"}> : () -> ()
    %cst_16 = arith.constant dense<0.000000e+00> : vector<1x8x8xf32>
    %27 = tpu.matmul %24, %25, %cst_16 {dimension_numbers = #tpu.dot_dimension_numbers<[2], [2], [1], [1], [0, 0, 0, 1, 1, 1], [0], [0]>} : vector<1x8x8xbf16>, vector<1x8x8xbf16>, vector<1x8x8xf32> -> vector<1x8x8xf32>
    "tpu.trace_stop"() : () -> ()
    %cst_17 = arith.constant 0.353553385 : f32
    %28 = vector.broadcast %cst_17 : f32 to vector<1x8x8xf32>
    %29 = arith.mulf %27, %28 : vector<1x8x8xf32>
    %cst_18 = arith.constant dense<0xFF800000> : vector<1x8xf32>
    %30 = vector.multi_reduction <maximumf>, %29, %cst_18 [2] : vector<1x8x8xf32> to vector<1x8xf32>
    %31 = vector.shape_cast %30 : vector<1x8xf32> to vector<1x8x1xf32>
    %32 = vector.broadcast %31 : vector<1x8x1xf32> to vector<1x8x8xf32>
    %33 = arith.subf %29, %32 : vector<1x8x8xf32>
    %34 = math.exp %33 : vector<1x8x8xf32>
    %cst_19 = arith.constant dense<0.000000e+00> : vector<1x8xf32>
    %35 = vector.multi_reduction <add>, %34, %cst_19 [2] : vector<1x8x8xf32> to vector<1x8xf32>
    %36 = vector.shape_cast %35 : vector<1x8xf32> to vector<1x8x1xf32>
    %37 = tpu.reciprocal %36 {approx = true} : vector<1x8x1xf32> -> vector<1x8x1xf32>
    %38 = vector.broadcast %37 : vector<1x8x1xf32> to vector<1x8x8xf32>
    %39 = arith.mulf %34, %38 : vector<1x8x8xf32>
    %40 = arith.truncf %39 : vector<1x8x8xf32> to vector<1x8x8xbf16>
    "tpu.trace_start"() <{level = 10 : i32, message = "bqk,bkd->bqd"}> : () -> ()
    %cst_20 = arith.constant dense<0.000000e+00> : vector<1x8x8xf32>
    %41 = tpu.matmul %40, %26, %cst_20 {dimension_numbers = #tpu.dot_dimension_numbers<[2], [1], [1], [2], [0, 0, 0, 1, 1, 2], [0], [0]>} : vector<1x8x8xbf16>, vector<1x8x8xbf16>, vector<1x8x8xf32> -> vector<1x8x8xf32>
    "tpu.trace_stop"() : () -> ()
    %c0_21 = arith.constant 0 : index
    %c0_22 = arith.constant 0 : index
    %c0_23 = arith.constant 0 : index
    %42 = vector.load %arg27[%c0_21, %c0_22, %c0_23] : memref<1x8x32xf32, #tpu.memory_space<vmem>>, vector<1x8x8xf32>
    tpu.vector_store %arg27[%c0_21, %c0_22, %c0_23], %41 {strides = array<i32>} : memref<1x8x32xf32, #tpu.memory_space<vmem>>, vector<1x8x8xf32>,
    %43 = vector.extract_strided_slice %19 {offsets = [0, 0, 8], sizes = [1, 8, 8], strides = [1, 1, 1]} : vector<1x8x32xbf16> to vector<1x8x8xbf16>
    %44 = vector.extract_strided_slice %21 {offsets = [0, 0, 8], sizes = [1, 8, 8], strides = [1, 1, 1]} : vector<1x8x32xbf16> to vector<1x8x8xbf16>
    %45 = vector.extract_strided_slice %23 {offsets = [0, 0, 8], sizes = [1, 8, 8], strides = [1, 1, 1]} : vector<1x8x32xbf16> to vector<1x8x8xbf16>
    "tpu.trace_start"() <{level = 10 : i32, message = "bqd,bkd->bqk"}> : () -> ()
    %cst_24 = arith.constant dense<0.000000e+00> : vector<1x8x8xf32>
    %46 = tpu.matmul %43, %44, %cst_24 {dimension_numbers = #tpu.dot_dimension_numbers<[2], [2], [1], [1], [0, 0, 0, 1, 1, 1], [0], [0]>} : vector<1x8x8xbf16>, vector<1x8x8xbf16>, vector<1x8x8xf32> -> vector<1x8x8xf32>
    "tpu.trace_stop"() : () -> ()
    %cst_25 = arith.constant 0.353553385 : f32
    %47 = vector.broadcast %cst_25 : f32 to vector<1x8x8xf32>
    %48 = arith.mulf %46, %47 : vector<1x8x8xf32>
    %cst_26 = arith.constant dense<0xFF800000> : vector<1x8xf32>
    %49 = vector.multi_reduction <maximumf>, %48, %cst_26 [2] : vector<1x8x8xf32> to vector<1x8xf32>
    %50 = vector.shape_cast %49 : vector<1x8xf32> to vector<1x8x1xf32>
    %51 = vector.broadcast %50 : vector<1x8x1xf32> to vector<1x8x8xf32>
    %52 = arith.subf %48, %51 : vector<1x8x8xf32>
    %53 = math.exp %52 : vector<1x8x8xf32>
    %cst_27 = arith.constant dense<0.000000e+00> : vector<1x8xf32>
    %54 = vector.multi_reduction <add>, %53, %cst_27 [2] : vector<1x8x8xf32> to vector<1x8xf32>
    %55 = vector.shape_cast %54 : vector<1x8xf32> to vector<1x8x1xf32>
    %56 = tpu.reciprocal %55 {approx = true} : vector<1x8x1xf32> -> vector<1x8x1xf32>
    %57 = vector.broadcast %56 : vector<1x8x1xf32> to vector<1x8x8xf32>
    %58 = arith.mulf %53, %57 : vector<1x8x8xf32>
    %59 = arith.truncf %58 : vector<1x8x8xf32> to vector<1x8x8xbf16>
    "tpu.trace_start"() <{level = 10 : i32, message = "bqk,bkd->bqd"}> : () -> ()
    %cst_28 = arith.constant dense<0.000000e+00> : vector<1x8x8xf32>
    %60 = tpu.matmul %59, %45, %cst_28 {dimension_numbers = #tpu.dot_dimension_numbers<[2], [1], [1], [2], [0, 0, 0, 1, 1, 2], [0], [0]>} : vector<1x8x8xbf16>, vector<1x8x8xbf16>, vector<1x8x8xf32> -> vector<1x8x8xf32>
    "tpu.trace_stop"() : () -> ()
    %c0_29 = arith.constant 0 : index
    %c0_30 = arith.constant 0 : index
    %c8 = arith.constant 8 : index
    %61 = vector.load %arg27[%c0_29, %c0_30, %c8] : memref<1x8x32xf32, #tpu.memory_space<vmem>>, vector<1x8x8xf32>
    tpu.vector_store %arg27[%c0_29, %c0_30, %c8], %60 {strides = array<i32>} : memref<1x8x32xf32, #tpu.memory_space<vmem>>, vector<1x8x8xf32>,
    %62 = vector.extract_strided_slice %19 {offsets = [0, 0, 16], sizes = [1, 8, 8], strides = [1, 1, 1]} : vector<1x8x32xbf16> to vector<1x8x8xbf16>
    %63 = vector.extract_strided_slice %21 {offsets = [0, 0, 16], sizes = [1, 8, 8], strides = [1, 1, 1]} : vector<1x8x32xbf16> to vector<1x8x8xbf16>
    %64 = vector.extract_strided_slice %23 {offsets = [0, 0, 16], sizes = [1, 8, 8], strides = [1, 1, 1]} : vector<1x8x32xbf16> to vector<1x8x8xbf16>
    "tpu.trace_start"() <{level = 10 : i32, message = "bqd,bkd->bqk"}> : () -> ()
    %cst_31 = arith.constant dense<0.000000e+00> : vector<1x8x8xf32>
    %65 = tpu.matmul %62, %63, %cst_31 {dimension_numbers = #tpu.dot_dimension_numbers<[2], [2], [1], [1], [0, 0, 0, 1, 1, 1], [0], [0]>} : vector<1x8x8xbf16>, vector<1x8x8xbf16>, vector<1x8x8xf32> -> vector<1x8x8xf32>
    "tpu.trace_stop"() : () -> ()
    %cst_32 = arith.constant 0.353553385 : f32
    %66 = vector.broadcast %cst_32 : f32 to vector<1x8x8xf32>
    %67 = arith.mulf %65, %66 : vector<1x8x8xf32>
    %cst_33 = arith.constant dense<0xFF800000> : vector<1x8xf32>
    %68 = vector.multi_reduction <maximumf>, %67, %cst_33 [2] : vector<1x8x8xf32> to vector<1x8xf32>
    %69 = vector.shape_cast %68 : vector<1x8xf32> to vector<1x8x1xf32>
    %70 = vector.broadcast %69 : vector<1x8x1xf32> to vector<1x8x8xf32>
    %71 = arith.subf %67, %70 : vector<1x8x8xf32>
    %72 = math.exp %71 : vector<1x8x8xf32>
    %cst_34 = arith.constant dense<0.000000e+00> : vector<1x8xf32>
    %73 = vector.multi_reduction <add>, %72, %cst_34 [2] : vector<1x8x8xf32> to vector<1x8xf32>
    %74 = vector.shape_cast %73 : vector<1x8xf32> to vector<1x8x1xf32>
    %75 = tpu.reciprocal %74 {approx = true} : vector<1x8x1xf32> -> vector<1x8x1xf32>
    %76 = vector.broadcast %75 : vector<1x8x1xf32> to vector<1x8x8xf32>
    %77 = arith.mulf %72, %76 : vector<1x8x8xf32>
    %78 = arith.truncf %77 : vector<1x8x8xf32> to vector<1x8x8xbf16>
    "tpu.trace_start"() <{level = 10 : i32, message = "bqk,bkd->bqd"}> : () -> ()
    %cst_35 = arith.constant dense<0.000000e+00> : vector<1x8x8xf32>
    %79 = tpu.matmul %78, %64, %cst_35 {dimension_numbers = #tpu.dot_dimension_numbers<[2], [1], [1], [2], [0, 0, 0, 1, 1, 2], [0], [0]>} : vector<1x8x8xbf16>, vector<1x8x8xbf16>, vector<1x8x8xf32> -> vector<1x8x8xf32>
    "tpu.trace_stop"() : () -> ()
    %c0_36 = arith.constant 0 : index
    %c0_37 = arith.constant 0 : index
    %c16 = arith.constant 16 : index
    %80 = vector.load %arg27[%c0_36, %c0_37, %c16] : memref<1x8x32xf32, #tpu.memory_space<vmem>>, vector<1x8x8xf32>
    tpu.vector_store %arg27[%c0_36, %c0_37, %c16], %79 {strides = array<i32>} : memref<1x8x32xf32, #tpu.memory_space<vmem>>, vector<1x8x8xf32>,
    %81 = vector.extract_strided_slice %19 {offsets = [0, 0, 24], sizes = [1, 8, 8], strides = [1, 1, 1]} : vector<1x8x32xbf16> to vector<1x8x8xbf16>
    %82 = vector.extract_strided_slice %21 {offsets = [0, 0, 24], sizes = [1, 8, 8], strides = [1, 1, 1]} : vector<1x8x32xbf16> to vector<1x8x8xbf16>
    %83 = vector.extract_strided_slice %23 {offsets = [0, 0, 24], sizes = [1, 8, 8], strides = [1, 1, 1]} : vector<1x8x32xbf16> to vector<1x8x8xbf16>
    "tpu.trace_start"() <{level = 10 : i32, message = "bqd,bkd->bqk"}> : () -> ()
    %cst_38 = arith.constant dense<0.000000e+00> : vector<1x8x8xf32>
    %84 = tpu.matmul %81, %82, %cst_38 {dimension_numbers = #tpu.dot_dimension_numbers<[2], [2], [1], [1], [0, 0, 0, 1, 1, 1], [0], [0]>} : vector<1x8x8xbf16>, vector<1x8x8xbf16>, vector<1x8x8xf32> -> vector<1x8x8xf32>
    "tpu.trace_stop"() : () -> ()
    %cst_39 = arith.constant 0.353553385 : f32
    %85 = vector.broadcast %cst_39 : f32 to vector<1x8x8xf32>
    %86 = arith.mulf %84, %85 : vector<1x8x8xf32>
    %cst_40 = arith.constant dense<0xFF800000> : vector<1x8xf32>
    %87 = vector.multi_reduction <maximumf>, %86, %cst_40 [2] : vector<1x8x8xf32> to vector<1x8xf32>
    %88 = vector.shape_cast %87 : vector<1x8xf32> to vector<1x8x1xf32>
    %89 = vector.broadcast %88 : vector<1x8x1xf32> to vector<1x8x8xf32>
    %90 = arith.subf %86, %89 : vector<1x8x8xf32>
    %91 = math.exp %90 : vector<1x8x8xf32>
    %cst_41 = arith.constant dense<0.000000e+00> : vector<1x8xf32>
    %92 = vector.multi_reduction <add>, %91, %cst_41 [2] : vector<1x8x8xf32> to vector<1x8xf32>
    %93 = vector.shape_cast %92 : vector<1x8xf32> to vector<1x8x1xf32>
    %94 = tpu.reciprocal %93 {approx = true} : vector<1x8x1xf32> -> vector<1x8x1xf32>
    %95 = vector.broadcast %94 : vector<1x8x1xf32> to vector<1x8x8xf32>
    %96 = arith.mulf %91, %95 : vector<1x8x8xf32>
    %97 = arith.truncf %96 : vector<1x8x8xf32> to vector<1x8x8xbf16>
    "tpu.trace_start"() <{level = 10 : i32, message = "bqk,bkd->bqd"}> : () -> ()
    %cst_42 = arith.constant dense<0.000000e+00> : vector<1x8x8xf32>
    %98 = tpu.matmul %97, %83, %cst_42 {dimension_numbers = #tpu.dot_dimension_numbers<[2], [1], [1], [2], [0, 0, 0, 1, 1, 2], [0], [0]>} : vector<1x8x8xbf16>, vector<1x8x8xbf16>, vector<1x8x8xf32> -> vector<1x8x8xf32>
    "tpu.trace_stop"() : () -> ()
    %c0_43 = arith.constant 0 : index
    %c0_44 = arith.constant 0 : index
    %c24 = arith.constant 24 : index
    %99 = vector.load %arg27[%c0_43, %c0_44, %c24] : memref<1x8x32xf32, #tpu.memory_space<vmem>>, vector<1x8x8xf32>
    tpu.vector_store %arg27[%c0_43, %c0_44, %c24], %98 {strides = array<i32>} : memref<1x8x32xf32, #tpu.memory_space<vmem>>, vector<1x8x8xf32>,
    %c0_45 = arith.constant 0 : index
    %c0_46 = arith.constant 0 : index
    %c0_47 = arith.constant 0 : index
    %100 = vector.load %arg27[%c0_45, %c0_46, %c0_47] : memref<1x8x32xf32, #tpu.memory_space<vmem>>, vector<1x8x32xf32>
    %101 = vector.shape_cast %100 : vector<1x8x32xf32> to vector<8x32xf32>
    %102 = arith.truncf %101 : vector<8x32xf32> to vector<8x32xbf16>
    %c0_48 = arith.constant 0 : index
    %c0_49 = arith.constant 0 : index
    %103 = vector.load %arg8[%c0_48, %c0_49] : memref<32x32xbf16, #tpu.memory_space<vmem>>, vector<32x32xbf16>
    %cst_50 = arith.constant dense<0.000000e+00> : vector<8x32xf32>
    %104 = tpu.matmul %102, %103, %cst_50 {dimension_numbers = #tpu.dot_dimension_numbers<[1], [0], [0], [1], [0, 0, 1, 1], [], []>} : vector<8x32xbf16>, vector<32x32xbf16>, vector<8x32xf32> -> vector<8x32xf32>
    %c0_51 = arith.constant 0 : index
    %c0_52 = arith.constant 0 : index
    %105 = vector.load %arg9[%c0_51, %c0_52] : memref<1x32xf32, #tpu.memory_space<vmem>>, vector<1x32xf32>
    %106 = vector.broadcast %105 : vector<1x32xf32> to vector<8x32xf32>
    %107 = arith.addf %104, %106 : vector<8x32xf32>
    %108 = arith.addf %107, %1 : vector<8x32xf32>
    %c0_53 = arith.constant 0 : index
    %c0_54 = arith.constant 0 : index
    %109 = vector.load %arg10[%c0_53, %c0_54] : memref<1x32xf32, #tpu.memory_space<vmem>>, vector<1x32xf32>
    %c0_55 = arith.constant 0 : index
    %c0_56 = arith.constant 0 : index
    %110 = vector.load %arg11[%c0_55, %c0_56] : memref<1x32xf32, #tpu.memory_space<vmem>>, vector<1x32xf32>
    %cst_57 = arith.constant dense<0.000000e+00> : vector<8xf32>
    %111 = vector.multi_reduction <add>, %108, %cst_57 [1] : vector<8x32xf32> to vector<8xf32>
    %112 = vector.shape_cast %111 : vector<8xf32> to vector<8x1xf32>
    %cst_58 = arith.constant 3.200000e+01 : f32
    %113 = vector.broadcast %cst_58 : f32 to vector<8x1xf32>
    %114 = arith.divf %112, %113 : vector<8x1xf32>
    %115 = vector.broadcast %114 : vector<8x1xf32> to vector<8x32xf32>
    %116 = arith.subf %108, %115 : vector<8x32xf32>
    %117 = arith.mulf %116, %116 : vector<8x32xf32>
    %cst_59 = arith.constant dense<0.000000e+00> : vector<8xf32>
    %118 = vector.multi_reduction <add>, %117, %cst_59 [1] : vector<8x32xf32> to vector<8xf32>
    %119 = vector.shape_cast %118 : vector<8xf32> to vector<8x1xf32>
    %cst_60 = arith.constant 3.200000e+01 : f32
    %120 = vector.broadcast %cst_60 : f32 to vector<8x1xf32>
    %121 = arith.divf %119, %120 : vector<8x1xf32>
    %cst_61 = arith.constant 9.99999996E-13 : f32
    %122 = vector.broadcast %cst_61 : f32 to vector<8x1xf32>
    %123 = arith.addf %121, %122 : vector<8x1xf32>
    %124 = math.rsqrt %123 : vector<8x1xf32>
    %125 = vector.broadcast %124 : vector<8x1xf32> to vector<8x32xf32>
    %126 = arith.mulf %116, %125 : vector<8x32xf32>
    %127 = vector.broadcast %109 : vector<1x32xf32> to vector<8x32xf32>
    %128 = arith.mulf %126, %127 : vector<8x32xf32>
    %129 = vector.broadcast %110 : vector<1x32xf32> to vector<8x32xf32>
    %130 = arith.addf %128, %129 : vector<8x32xf32>
    %131 = arith.truncf %130 : vector<8x32xf32> to vector<8x32xbf16>
    %c0_62 = arith.constant 0 : index
    %c0_63 = arith.constant 0 : index
    %132 = vector.load %arg12[%c0_62, %c0_63] : memref<32x64xbf16, #tpu.memory_space<vmem>>, vector<32x64xbf16>
    %cst_64 = arith.constant dense<0.000000e+00> : vector<8x64xf32>
    %133 = tpu.matmul %131, %132, %cst_64 {dimension_numbers = #tpu.dot_dimension_numbers<[1], [0], [0], [1], [0, 0, 1, 1], [], []>} : vector<8x32xbf16>, vector<32x64xbf16>, vector<8x64xf32> -> vector<8x64xf32>
    %c0_65 = arith.constant 0 : index
    %c0_66 = arith.constant 0 : index
    %134 = vector.load %arg13[%c0_65, %c0_66] : memref<1x64xf32, #tpu.memory_space<vmem>>, vector<1x64xf32>
    %135 = vector.broadcast %134 : vector<1x64xf32> to vector<8x64xf32>
    %136 = arith.addf %133, %135 : vector<8x64xf32>
    %cst_67 = arith.constant 5.000000e-01 : f32
    %137 = vector.broadcast %cst_67 : f32 to vector<8x64xf32>
    %138 = arith.mulf %137, %136 : vector<8x64xf32>
    %cst_68 = arith.constant 4.471500e-02 : f32
    %139 = vector.broadcast %cst_68 : f32 to vector<8x64xf32>
    %140 = arith.mulf %139, %136 : vector<8x64xf32>
    %141 = arith.mulf %140, %136 : vector<8x64xf32>
    %142 = arith.mulf %141, %136 : vector<8x64xf32>
    %143 = arith.addf %136, %142 : vector<8x64xf32>
    %cst_69 = arith.constant 0.797884583 : f32
    %144 = vector.broadcast %cst_69 : f32 to vector<8x64xf32>
    %145 = arith.mulf %144, %143 : vector<8x64xf32>
    %146 = math.tanh %145 : vector<8x64xf32>
    %cst_70 = arith.constant 1.000000e+00 : f32
    %147 = vector.broadcast %cst_70 : f32 to vector<8x64xf32>
    %148 = arith.addf %147, %146 : vector<8x64xf32>
    %149 = arith.mulf %138, %148 : vector<8x64xf32>
    %150 = arith.truncf %149 : vector<8x64xf32> to vector<8x64xbf16>
    %c0_71 = arith.constant 0 : index
    %c0_72 = arith.constant 0 : index
    %151 = vector.load %arg14[%c0_71, %c0_72] : memref<64x32xbf16, #tpu.memory_space<vmem>>, vector<64x32xbf16>
    %cst_73 = arith.constant dense<0.000000e+00> : vector<8x32xf32>
    %152 = tpu.matmul %150, %151, %cst_73 {dimension_numbers = #tpu.dot_dimension_numbers<[1], [0], [0], [1], [0, 0, 1, 1], [], []>} : vector<8x64xbf16>, vector<64x32xbf16>, vector<8x32xf32> -> vector<8x32xf32>
    %c0_74 = arith.constant 0 : index
    %c0_75 = arith.constant 0 : index
    %153 = vector.load %arg15[%c0_74, %c0_75] : memref<1x32xf32, #tpu.memory_space<vmem>>, vector<1x32xf32>
    %154 = vector.broadcast %153 : vector<1x32xf32> to vector<8x32xf32>
    %155 = arith.addf %152, %154 : vector<8x32xf32>
    %156 = arith.addf %155, %130 : vector<8x32xf32>
    %c0_76 = arith.constant 0 : index
    %c0_77 = arith.constant 0 : index
    %157 = vector.load %arg16[%c0_76, %c0_77] : memref<1x32xf32, #tpu.memory_space<vmem>>, vector<1x32xf32>
    %c0_78 = arith.constant 0 : index
    %c0_79 = arith.constant 0 : index
    %158 = vector.load %arg17[%c0_78, %c0_79] : memref<1x32xf32, #tpu.memory_space<vmem>>, vector<1x32xf32>
    %cst_80 = arith.constant dense<0.000000e+00> : vector<8xf32>
    %159 = vector.multi_reduction <add>, %156, %cst_80 [1] : vector<8x32xf32> to vector<8xf32>
    %160 = vector.shape_cast %159 : vector<8xf32> to vector<8x1xf32>
    %cst_81 = arith.constant 3.200000e+01 : f32
    %161 = vector.broadcast %cst_81 : f32 to vector<8x1xf32>
    %162 = arith.divf %160, %161 : vector<8x1xf32>
    %163 = vector.broadcast %162 : vector<8x1xf32> to vector<8x32xf32>
    %164 = arith.subf %156, %163 : vector<8x32xf32>
    %165 = arith.mulf %164, %164 : vector<8x32xf32>
    %cst_82 = arith.constant dense<0.000000e+00> : vector<8xf32>
    %166 = vector.multi_reduction <add>, %165, %cst_82 [1] : vector<8x32xf32> to vector<8xf32>
    %167 = vector.shape_cast %166 : vector<8xf32> to vector<8x1xf32>
    %cst_83 = arith.constant 3.200000e+01 : f32
    %168 = vector.broadcast %cst_83 : f32 to vector<8x1xf32>
    %169 = arith.divf %167, %168 : vector<8x1xf32>
    %cst_84 = arith.constant 9.99999996E-13 : f32
    %170 = vector.broadcast %cst_84 : f32 to vector<8x1xf32>
    %171 = arith.addf %169, %170 : vector<8x1xf32>
    %172 = math.rsqrt %171 : vector<8x1xf32>
    %173 = vector.broadcast %172 : vector<8x1xf32> to vector<8x32xf32>
    %174 = arith.mulf %164, %173 : vector<8x32xf32>
    %175 = vector.broadcast %157 : vector<1x32xf32> to vector<8x32xf32>
    %176 = arith.mulf %174, %175 : vector<8x32xf32>
    %177 = vector.broadcast %158 : vector<1x32xf32> to vector<8x32xf32>
    %178 = arith.addf %176, %177 : vector<8x32xf32>
    %179 = arith.truncf %178 : vector<8x32xf32> to vector<8x32xbf16>
    %c0_85 = arith.constant 0 : index
    %c0_86 = arith.constant 0 : index
    %180 = vector.load %arg18[%c0_85, %c0_86] : memref<32x16xbf16, #tpu.memory_space<vmem>>, vector<32x16xbf16>
    %cst_87 = arith.constant dense<0.000000e+00> : vector<8x16xf32>
    %181 = tpu.matmul %179, %180, %cst_87 {dimension_numbers = #tpu.dot_dimension_numbers<[1], [0], [0], [1], [0, 0, 1, 1], [], []>} : vector<8x32xbf16>, vector<32x16xbf16>, vector<8x16xf32> -> vector<8x16xf32>
    %c0_88 = arith.constant 0 : index
    %c0_89 = arith.constant 0 : index
    %182 = vector.load %arg19[%c0_88, %c0_89] : memref<1x16xf32, #tpu.memory_space<vmem>>, vector<1x16xf32>
    %183 = vector.broadcast %182 : vector<1x16xf32> to vector<8x16xf32>
    %184 = arith.addf %181, %183 : vector<8x16xf32>
    %cst_90 = arith.constant 0.000000e+00 : f32
    %185 = vector.broadcast %cst_90 : f32 to vector<8x16xf32>
    %186 = arith.maximumf %184, %185 : vector<8x16xf32>
    %187 = arith.truncf %186 : vector<8x16xf32> to vector<8x16xbf16>
    %c0_91 = arith.constant 0 : index
    %c0_92 = arith.constant 0 : index
    %188 = vector.load %arg20[%c0_91, %c0_92] : memref<16x32xbf16, #tpu.memory_space<vmem>>, vector<16x32xbf16>
    %cst_93 = arith.constant dense<0.000000e+00> : vector<8x32xf32>
    %189 = tpu.matmul %187, %188, %cst_93 {dimension_numbers = #tpu.dot_dimension_numbers<[1], [0], [0], [1], [0, 0, 1, 1], [], []>} : vector<8x16xbf16>, vector<16x32xbf16>, vector<8x32xf32> -> vector<8x32xf32>
    %c0_94 = arith.constant 0 : index
    %c0_95 = arith.constant 0 : index
    %190 = vector.load %arg21[%c0_94, %c0_95] : memref<1x32xf32, #tpu.memory_space<vmem>>, vector<1x32xf32>
    %191 = vector.broadcast %190 : vector<1x32xf32> to vector<8x32xf32>
    %192 = arith.addf %189, %191 : vector<8x32xf32>
    %c0_96 = arith.constant 0 : index
    %c0_97 = arith.constant 0 : index
    %193 = vector.load %arg22[%c0_96, %c0_97] : memref<16x32xbf16, #tpu.memory_space<vmem>>, vector<16x32xbf16>
    %cst_98 = arith.constant dense<0.000000e+00> : vector<8x32xf32>
    %194 = tpu.matmul %187, %193, %cst_98 {dimension_numbers = #tpu.dot_dimension_numbers<[1], [0], [0], [1], [0, 0, 1, 1], [], []>} : vector<8x16xbf16>, vector<16x32xbf16>, vector<8x32xf32> -> vector<8x32xf32>
    %c0_99 = arith.constant 0 : index
    %c0_100 = arith.constant 0 : index
    %195 = vector.load %arg23[%c0_99, %c0_100] : memref<1x32xf32, #tpu.memory_space<vmem>>, vector<1x32xf32>
    %196 = vector.broadcast %195 : vector<1x32xf32> to vector<8x32xf32>
    %197 = arith.addf %194, %196 : vector<8x32xf32>
    %cst_101 = arith.constant -3.300000e+00 : f32
    %198 = vector.broadcast %cst_101 : f32 to vector<8x32xf32>
    %199 = arith.addf %197, %198 : vector<8x32xf32>
    %200 = arith.negf %199 : vector<8x32xf32>
    %201 = math.exp %200 : vector<8x32xf32>
    %cst_102 = arith.constant 1.000000e+00 : f32
    %202 = vector.broadcast %cst_102 : f32 to vector<8x32xf32>
    %203 = arith.addf %202, %201 : vector<8x32xf32>
    %204 = arith.divf %202, %203 : vector<8x32xf32>
    %205 = arith.mulf %192, %204 : vector<8x32xf32>
    %cst_103 = arith.constant 1.000000e+00 : f32
    %206 = vector.broadcast %cst_103 : f32 to vector<8x32xf32>
    %207 = arith.subf %206, %204 : vector<8x32xf32>
    %208 = arith.mulf %178, %207 : vector<8x32xf32>
    %209 = arith.addf %205, %208 : vector<8x32xf32>
    %c0_104 = arith.constant 0 : index
    %c0_105 = arith.constant 0 : index
    %210 = vector.load %arg24[%c0_104, %c0_105] : memref<1x32xf32, #tpu.memory_space<vmem>>, vector<1x32xf32>
    %c0_106 = arith.constant 0 : index
    %c0_107 = arith.constant 0 : index
    %211 = vector.load %arg25[%c0_106, %c0_107] : memref<1x32xf32, #tpu.memory_space<vmem>>, vector<1x32xf32>
    %cst_108 = arith.constant dense<0.000000e+00> : vector<8xf32>
    %212 = vector.multi_reduction <add>, %209, %cst_108 [1] : vector<8x32xf32> to vector<8xf32>
    %213 = vector.shape_cast %212 : vector<8xf32> to vector<8x1xf32>
    %cst_109 = arith.constant 3.200000e+01 : f32
    %214 = vector.broadcast %cst_109 : f32 to vector<8x1xf32>
    %215 = arith.divf %213, %214 : vector<8x1xf32>
    %216 = vector.broadcast %215 : vector<8x1xf32> to vector<8x32xf32>
    %217 = arith.subf %209, %216 : vector<8x32xf32>
    %218 = arith.mulf %217, %217 : vector<8x32xf32>
    %cst_110 = arith.constant dense<0.000000e+00> : vector<8xf32>
    %219 = vector.multi_reduction <add>, %218, %cst_110 [1] : vector<8x32xf32> to vector<8xf32>
    %220 = vector.shape_cast %219 : vector<8xf32> to vector<8x1xf32>
    %cst_111 = arith.constant 3.200000e+01 : f32
    %221 = vector.broadcast %cst_111 : f32 to vector<8x1xf32>
    %222 = arith.divf %220, %221 : vector<8x1xf32>
    %cst_112 = arith.constant 9.99999974E-6 : f32
    %223 = vector.broadcast %cst_112 : f32 to vector<8x1xf32>
    %224 = arith.addf %222, %223 : vector<8x1xf32>
    %225 = math.rsqrt %224 : vector<8x1xf32>
    %226 = vector.broadcast %225 : vector<8x1xf32> to vector<8x32xf32>
    %227 = arith.mulf %217, %226 : vector<8x32xf32>
    %228 = vector.broadcast %210 : vector<1x32xf32> to vector<8x32xf32>
    %229 = arith.mulf %227, %228 : vector<8x32xf32>
    %230 = vector.broadcast %211 : vector<1x32xf32> to vector<8x32xf32>
    %231 = arith.addf %229, %230 : vector<8x32xf32>
    %232 = vector.shape_cast %231 : vector<8x32xf32> to vector<1x8x32xf32>
    %c0_113 = arith.constant 0 : index
    %c0_114 = arith.constant 0 : index
    %c0_115 = arith.constant 0 : index
    %233 = vector.load %arg26[%c0_113, %c0_114, %c0_115] : memref<1x8x32xf32, #tpu.memory_space<vmem>>, vector<1x8x32xf32>
    tpu.vector_store %arg26[%c0_113, %c0_114, %c0_115], %232 {strides = array<i32>} : memref<1x8x32xf32, #tpu.memory_space<vmem>>, vector<1x8x32xf32>,
    return
  }
  func.func @transform_0(%arg0: i32) -> (i32, i32, i32) {
    %c0_i32 = arith.constant 0 : i32
    %c0_i32_0 = arith.constant 0 : i32
    %c0_i32_1 = arith.constant 0 : i32
    return %arg0, %c0_i32, %c0_i32_0 : i32, i32, i32
  }
  func.func @transform_1(%arg0: i32) -> (i32, i32) {
    %c0_i32 = arith.constant 0 : i32
    %c0_i32_0 = arith.constant 0 : i32
    %c0_i32_1 = arith.constant 0 : i32
    return %c0_i32, %c0_i32_0 : i32, i32
  }
  func.func @transform_2(%arg0: i32) -> (i32, i32) {
    %c0_i32 = arith.constant 0 : i32
    %c0_i32_0 = arith.constant 0 : i32
    %c0_i32_1 = arith.constant 0 : i32
    return %c0_i32, %c0_i32_0 : i32, i32
  }
  func.func @transform_3(%arg0: i32) -> (i32, i32) {
    %c0_i32 = arith.constant 0 : i32
    %c0_i32_0 = arith.constant 0 : i32
    %c0_i32_1 = arith.constant 0 : i32
    return %c0_i32, %c0_i32_0 : i32, i32
  }
  func.func @transform_4(%arg0: i32) -> (i32, i32) {
    %c0_i32 = arith.constant 0 : i32
    %c0_i32_0 = arith.constant 0 : i32
    %c0_i32_1 = arith.constant 0 : i32
    return %c0_i32, %c0_i32_0 : i32, i32
  }
  func.func @transform_5(%arg0: i32) -> (i32, i32) {
    %c0_i32 = arith.constant 0 : i32
    %c0_i32_0 = arith.constant 0 : i32
    %c0_i32_1 = arith.constant 0 : i32
    return %c0_i32, %c0_i32_0 : i32, i32
  }
  func.func @transform_6(%arg0: i32) -> (i32, i32) {
    %c0_i32 = arith.constant 0 : i32
    %c0_i32_0 = arith.constant 0 : i32
    %c0_i32_1 = arith.constant 0 : i32
    return %c0_i32, %c0_i32_0 : i32, i32
  }
  func.func @transform_7(%arg0: i32) -> (i32, i32) {
    %c0_i32 = arith.constant 0 : i32
    %c0_i32_0 = arith.constant 0 : i32
    %c0_i32_1 = arith.constant 0 : i32
    return %c0_i32, %c0_i32_0 : i32, i32
  }
  func.func @transform_8(%arg0: i32) -> (i32, i32) {
    %c0_i32 = arith.constant 0 : i32
    %c0_i32_0 = arith.constant 0 : i32
    %c0_i32_1 = arith.constant 0 : i32
    return %c0_i32, %c0_i32_0 : i32, i32
  }
  func.func @transform_9(%arg0: i32) -> (i32, i32) {
    %c0_i32 = arith.constant 0 : i32
    %c0_i32_0 = arith.constant 0 : i32
    %c0_i32_1 = arith.constant 0 : i32
    return %c0_i32, %c0_i32_0 : i32, i32
  }
  func.func @transform_10(%arg0: i32) -> (i32, i32) {
    %c0_i32 = arith.constant 0 : i32
    %c0_i32_0 = arith.constant 0 : i32
    %c0_i32_1 = arith.constant 0 : i32
    return %c0_i32, %c0_i32_0 : i32, i32
  }
  func.func @transform_11(%arg0: i32) -> (i32, i32) {
    %c0_i32 = arith.constant 0 : i32
    %c0_i32_0 = arith.constant 0 : i32
    %c0_i32_1 = arith.constant 0 : i32
    return %c0_i32, %c0_i32_0 : i32, i32
  }
  func.func @transform_12(%arg0: i32) -> (i32, i32) {
    %c0_i32 = arith.constant 0 : i32
    %c0_i32_0 = arith.constant 0 : i32
    %c0_i32_1 = arith.constant 0 : i32
    return %c0_i32, %c0_i32_0 : i32, i32
  }
  func.func @transform_13(%arg0: i32) -> (i32, i32) {
    %c0_i32 = arith.constant 0 : i32
    %c0_i32_0 = arith.constant 0 : i32
    %c0_i32_1 = arith.constant 0 : i32
    return %c0_i32, %c0_i32_0 : i32, i32
  }
  func.func @transform_14(%arg0: i32) -> (i32, i32) {
    %c0_i32 = arith.constant 0 : i32
    %c0_i32_0 = arith.constant 0 : i32
    %c0_i32_1 = arith.constant 0 : i32
    return %c0_i32, %c0_i32_0 : i32, i32
  }
  func.func @transform_15(%arg0: i32) -> (i32, i32) {
    %c0_i32 = arith.constant 0 : i32
    %c0_i32_0 = arith.constant 0 : i32
    %c0_i32_1 = arith.constant 0 : i32
    return %c0_i32, %c0_i32_0 : i32, i32
  }
  func.func @transform_16(%arg0: i32) -> (i32, i32) {
    %c0_i32 = arith.constant 0 : i32
    %c0_i32_0 = arith.constant 0 : i32
    %c0_i32_1 = arith.constant 0 : i32
    return %c0_i32, %c0_i32_0 : i32, i32
  }
  func.func @transform_17(%arg0: i32) -> (i32, i32) {
    %c0_i32 = arith.constant 0 : i32
    %c0_i32_0 = arith.constant 0 : i32
    %c0_i32_1 = arith.constant 0 : i32
    return %c0_i32, %c0_i32_0 : i32, i32
  }
  func.func @transform_18(%arg0: i32) -> (i32, i32) {
    %c0_i32 = arith.constant 0 : i32
    %c0_i32_0 = arith.constant 0 : i32
    %c0_i32_1 = arith.constant 0 : i32
    return %c0_i32, %c0_i32_0 : i32, i32
  }
  func.func @transform_19(%arg0: i32) -> (i32, i32) {
    %c0_i32 = arith.constant 0 : i32
    %c0_i32_0 = arith.constant 0 : i32
    %c0_i32_1 = arith.constant 0 : i32
    return %c0_i32, %c0_i32_0 : i32, i32
  }
  func.func @transform_20(%arg0: i32) -> (i32, i32) {
    %c0_i32 = arith.constant 0 : i32
    %c0_i32_0 = arith.constant 0 : i32
    %c0_i32_1 = arith.constant 0 : i32
    return %c0_i32, %c0_i32_0 : i32, i32
  }
  func.func @transform_21(%arg0: i32) -> (i32, i32) {
    %c0_i32 = arith.constant 0 : i32
    %c0_i32_0 = arith.constant 0 : i32
    %c0_i32_1 = arith.constant 0 : i32
    return %c0_i32, %c0_i32_0 : i32, i32
  }
  func.func @transform_22(%arg0: i32) -> (i32, i32) {
    %c0_i32 = arith.constant 0 : i32
    %c0_i32_0 = arith.constant 0 : i32
    %c0_i32_1 = arith.constant 0 : i32
    return %c0_i32, %c0_i32_0 : i32, i32
  }
  func.func @transform_23(%arg0: i32) -> (i32, i32) {
    %c0_i32 = arith.constant 0 : i32
    %c0_i32_0 = arith.constant 0 : i32
    %c0_i32_1 = arith.constant 0 : i32
    return %c0_i32, %c0_i32_0 : i32, i32
  }
  func.func @transform_24(%arg0: i32) -> (i32, i32) {
    %c0_i32 = arith.constant 0 : i32
    %c0_i32_0 = arith.constant 0 : i32
    %c0_i32_1 = arith.constant 0 : i32
    return %c0_i32, %c0_i32_0 : i32, i32
  }
  func.func @transform_25(%arg0: i32) -> (i32, i32, i32) {
    %c0_i32 = arith.constant 0 : i32
    %c0_i32_0 = arith.constant 0 : i32
    %c0_i32_1 = arith.constant 0 : i32
    return %arg0, %c0_i32, %c0_i32_0 : i32, i32, i32
  }
}

module attributes {stable_mosaic.version = 11 : i64} {
  func.func @adapted_bert_layer_kernel(%arg0: i32, %arg1: memref<1x8x32xf32, #tpu.memory_space<vmem>>, %arg2: memref<32x32xbf16, #tpu.memory_space<vmem>>, %arg3: memref<1x32xf32, #tpu.memory_space<vmem>>, %arg4: memref<32x32xbf16, #tpu.memory_space<vmem>>, %arg5: memref<1x32xf32, #tpu.memory_space<vmem>>, %arg6: memref<32x32xbf16, #tpu.memory_space<vmem>>, %arg7: memref<1x32xf32, #tpu.memory_space<vmem>>, %arg8: memref<32x32xbf16, #tpu.memory_space<vmem>>, %arg9: memref<1x32xf32, #tpu.memory_space<vmem>>, %arg10: memref<1x32xf32, #tpu.memory_space<vmem>>, %arg11: memref<1x32xf32, #tpu.memory_space<vmem>>, %arg12: memref<32x64xbf16, #tpu.memory_space<vmem>>, %arg13: memref<1x64xf32, #tpu.memory_space<vmem>>, %arg14: memref<64x32xbf16, #tpu.memory_space<vmem>>, %arg15: memref<1x32xf32, #tpu.memory_space<vmem>>, %arg16: memref<1x32xf32, #tpu.memory_space<vmem>>, %arg17: memref<1x32xf32, #tpu.memory_space<vmem>>, %arg18: memref<32x16xbf16, #tpu.memory_space<vmem>>, %arg19: memref<1x16xf32, #tpu.memory_space<vmem>>, %arg20: memref<16x32xbf16, #tpu.memory_space<vmem>>, %arg21: memref<1x32xf32, #tpu.memory_space<vmem>>, %arg22: memref<16x32xbf16, #tpu.memory_space<vmem>>, %arg23: memref<1x32xf32, #tpu.memory_space<vmem>>, %arg24: memref<1x32xf32, #tpu.memory_space<vmem>>, %arg25: memref<1x32xf32, #tpu.memory_space<vmem>>, %arg26: memref<1x8x32xf32, #tpu.memory_space<vmem>>, %arg27: memref<1x8x32xf32, #tpu.memory_space<vmem>>) attributes {dimension_semantics = [#tpu.dimension_semantics<parallel>], iteration_bounds = array<i64: 2>, scalar_prefetch = 0 : i64, scratch_operands = 1 : i64, tpu.core_type = #tpu.core_type<tc>, window_params = [{transform_indices = @transform_0, window_bounds = array<i64: 1, 8, 32>}, {pipeline_mode = #tpu.pipeline_mode<synchronous>, transform_indices = @transform_1, window_bounds = array<i64: 32, 32>}, {pipeline_mode = #tpu.pipeline_mode<synchronous>, transform_indices = @transform_2, window_bounds = array<i64: 1, 32>}, {pipeline_mode = #tpu.pipeline_mode<synchronous>, transform_indices = @transform_3, window_bounds = array<i64: 32, 32>}, {pipeline_mode = #tpu.pipeline_mode<synchronous>, transform_indices = @transform_4, window_bounds = array<i64: 1, 32>}, {pipeline_mode = #tpu.pipeline_mode<synchronous>, transform_indices = @transform_5, window_bounds = array<i64: 32, 32>}, {pipeline_mode = #tpu.pipeline_mode<synchronous>, transform_indices = @transform_6, window_bounds = array<i64: 1, 32>}, {pipeline_mode = #tpu.pipeline_mode<synchronous>, transform_indices = @transform_7, window_bounds = array<i64: 32, 32>}, {pipeline_mode = #tpu.pipeline_mode<synchronous>, transform_indices = @transform_8, window_bounds = array<i64: 1, 32>}, {pipeline_mode = #tpu.pipeline_mode<synchronous>, transform_indices = @transform_9, window_bounds = array<i64: 1, 32>}, {pipeline_mode = #tpu.pipeline_mode<synchronous>, transform_indices = @transform_10, window_bounds = array<i64: 1, 32>}, {pipeline_mode = #tpu.pipeline_mode<synchronous>, transform_indices = @transform_11, window_bounds = array<i64: 32, 64>}, {pipeline_mode = #tpu.pipeline_mode<synchronous>, transform_indices = @transform_12, window_bounds = array<i64: 1, 64>}, {pipeline_mode = #tpu.pipeline_mode<synchronous>, transform_indices = @transform_13, window_bounds = array<i64: 64, 32>}, {pipeline_mode = #tpu.pipeline_mode<synchronous>, transform_indices = @transform_14, window_bounds = array<i64: 1, 32>}, {pipeline_mode = #tpu.pipeline_mode<synchronous>, transform_indices = @transform_15, window_bounds = array<i64: 1, 32>}, {pipeline_mode = #tpu.pipeline_mode<synchronous>, transform_indices = @transform_16, window_bounds = array<i64: 1, 32>}, {pipeline_mode = #tpu.pipeline_mode<synchronous>, transform_indices = @transform_17, window_bounds = array<i64: 32, 16>}, {pipeline_mode = #tpu.pipeline_mode<synchronous>, transform_indices = @transform_18, window_bounds = array<i64: 1, 16>}, {pipeline_mode = #tpu.pipeline_mode<synchronous>, transform_indices = @transform_19, window_bounds = array<i64: 16, 32>}, {pipeline_mode = #tpu.pipeline_mode<synchronous>, transform_indices = @transform_20, window_bounds = array<i64: 1, 32>}, {pipeline_mode = #tpu.pipeline_mode<synchronous>, transform_indices = @transform_21, window_bounds = array<i64: 16, 32>}, {pipeline_mode = #tpu.pipeline_mode<synchronous>, transform_indices = @transform_22, window_bounds = array<i64: 1, 32>}, {pipeline_mode = #tpu.pipeline_mode<synchronous>, transform_indices = @transform_23, window_bounds = array<i64: 1, 32>}, {pipeline_mode = #tpu.pipeline_mode<synchronous>, transform_indices = @transform_24, window_bounds = array<i64: 1, 32>}, {transform_indices = @transform_25, window_bounds = array<i64: 1, 8, 32>}]} {
    %c0 = arith.constant 0 : index
    %c0_0 = arith.constant 0 : index
    %c0_1 = arith.constant 0 : index
    %0 = vector.load %arg1[%c0, %c0_0, %c0_1] : memref<1x8x32xf32, #tpu.memory_space<vmem>>, vector<1x8x32xf32>
    %1 = vector.shape_cast %0 : vector<1x8x32xf32> to vector<8x32xf32>
    %2 = arith.truncf %1 : vector<8x32xf32> to vector<8x32xbf16>
    %c0_2 = arith.constant 0 : index
    %c0_3 = arith.constant 0 : index
    %3 = vector.load %arg2[%c0_2, %c0_3] : memref<32x32xbf16, #tpu.memory_space<vmem>>, vector<32x32xbf16>
    %cst = arith.constant dense<0.000000e+00> : vector<8x32xf32>
    %4 = tpu.matmul %2, %3, %cst {dimension_numbers = #tpu.dot_dimension_numbers<[1], [0], [0], [1], [0, 0, 1, 1], [], []>} : vector<8x32xbf16>, vector<32x32xbf16>, vector<8x32xf32> -> vector<8x32xf32>
    %c0_4 = arith.constant 0 : index
    %c0_5 = arith.constant 0 : index
    %5 = vector.load %arg3[%c0_4, %c0_5] : memref<1x32xf32, #tpu.memory_space<vmem>>, vector<1x32xf32>
    %6 = vector.broadcast %5 : vector<1x32xf32> to vector<8x32xf32>
    %7 = arith.addf %4, %6 : vector<8x32xf32>
    %c0_6 = arith.constant 0 : index
    %c0_7 = arith.constant 0 : index
    %8 = vector.load %arg4[%c0_6, %c0_7] : memref<32x32xbf16, #tpu.memory_space<vmem>>, vector<32x32xbf16>
    %cst_8 = arith.constant dense<0.000000e+00> : vector<8x32xf32>
    %9 = tpu.matmul %2, %8, %cst_8 {dimension_numbers = #tpu.dot_dimension_numbers<[1], [0], [0], [1], [0, 0, 1, 1], [], []>} : vector<8x32xbf16>, vector<32x32xbf16>, vector<8x32xf32> -> vector<8x32xf32>
    %c0_9 = arith.constant 0 : index
    %c0_10 = arith.constant 0 : index
    %10 = vector.load %arg5[%c0_9, %c0_10] : memref<1x32xf32, #tpu.memory_space<vmem>>, vector<1x32xf32>
    %11 = vector.broadcast %10 : vector<1x32xf32> to vector<8x32xf32>
    %12 = arith.addf %9, %11 : vector<8x32xf32>
    %c0_11 = arith.constant 0 : index
    %c0_12 = arith.constant 0 : index
    %13 = vector.load %arg6[%c0_11, %c0_12] : memref<32x32xbf16, #tpu.memory_space<vmem>>, vector<32x32xbf16>
    %cst_13 = arith.constant dense<0.000000e+00> : vector<8x32xf32>
    %14 = tpu.matmul %2, %13, %cst_13 {dimension_numbers = #tpu.dot_dimension_numbers<[1], [0], [0], [1], [0, 0, 1, 1], [], []>} : vector<8x32xbf16>, vector<32x32xbf16>, vector<8x32xf32> -> vector<8x32xf32>
    %c0_14 = arith.constant 0 : index
    %c0_15 = arith.constant 0 : index
    %15 = vector.load %arg7[%c0_14, %c0_15] : memref<1x32xf32, #tpu.memory_space<vmem>>, vector<1x32xf32>
    %16 = vector.broadcast %15 : vector<1x32xf32> to vector<8x32xf32>
    %17 = arith.addf %14, %16 : vector<8x32xf32>
    %18 = vector.shape_cast %7 : vector<8x32xf32> to vector<1x8x32xf32>
    %19 = arith.truncf %18 : vector<1x8x32xf32> to vector<1x8x32xbf16>
    %20 = vector.shape_cast %12 : vector<8x32xf32> to vector<1x8x32xf32>
    %21 = arith.truncf %20 : vector<1x8x32xf32> to vector<1x8x32xbf16>
    %22 = vector.shape_cast %17 : vector<8x32xf32> to vector<1x8x32xf32>
    %23 = arith.truncf %22 : vector<1x8x32xf32> to vector<1x8x32xbf16>
    %24 = vector.extract_strided_slice %19 {offsets = [0, 0, 0], sizes = [1, 8, 8], strides = [1, 1, 1]} : vector<1x8x32xbf16> to vector<1x8x8xbf16>
    %25 = vector.extract_strided_slice %21 {offsets = [0, 0, 0], sizes = [1, 8, 8], strides = [1, 1, 1]} : vector<1x8x32xbf16> to vector<1x8x8xbf16>
    %26 = vector.extract_strided_slice %23 {offsets = [0, 0, 0], sizes = [1, 8, 8], strides = [1, 1, 1]} : vector<1x8x32xbf16> to vector<1x8x8xbf16>
    "tpu.trace_start"() <{level = 10 : i32, message = "bqd,bkd->bqk"}> : () -> ()
    %cst_16 = arith.constant dense<0.000000e+00> : vector<1x8x8xf32>
    %27 = tpu.matmul %24, %25, %cst_16 {dimension_numbers = #tpu.dot_dimension_numbers<[2], [2], [1], [1], [0, 0, 0, 1, 1, 1], [0], [0]>} : vector<1x8x8xbf16>, vector<1x8x8xbf16>, vector<1x8x8xf32> -> vector<1x8x8xf32>
    "tpu.trace_stop"() : () -> ()
    %cst_17 = arith.constant 0.353553385 : f32
    %28 = vector.broadcast %cst_17 : f32 to vector<1x8x8xf32>
    %29 = arith.mulf %27, %28 : vector<1x8x8xf32>
    %cst_18 = arith.constant dense<0xFF800000> : vector<1x8xf32>
    %30 = vector.multi_reduction <maximumf>, %29, %cst_18 [2] : vector<1x8x8xf32> to vector<1x8xf32>
    %31 = vector.shape_cast %30 : vector<1x8xf32> to vector<1x8x1xf32>
    %32 = vector.broadcast %31 : vector<1x8x1xf32> to vector<1x8x8xf32>
    %33 = arith.subf %29, %32 : vector<1x8x8xf32>
    %34 = math.exp %33 : vector<1x8x8xf32>
    %cst_19 = arith.constant dense<0.000000e+00> : vector<1x8xf32>
    %35 = vector.multi_reduction <add>, %34, %cst_19 [2] : vector<1x8x8xf32> to vector<1x8xf32>
    %36 = vector.shape_cast %35 : vector<1x8xf32> to vector<1x8x1xf32>
    %37 = tpu.reciprocal %36 {approx = true} : vector<1x8x1xf32> -> vector<1x8x1xf32>
    %38 = vector.broadcast %37 : vector<1x8x1xf32> to vector<1x8x8xf32>
    %39 = arith.mulf %34, %38 : vector<1x8x8xf32>
    %40 = arith.truncf %39 : vector<1x8x8xf32> to vector<1x8x8xbf16>
    "tpu.trace_start"() <{level = 10 : i32, message = "bqk,bkd->bqd"}> : () -> ()
    %cst_20 = arith.constant dense<0.000000e+00> : vector<1x8x8xf32>
    %41 = tpu.matmul %40, %26, %cst_20 {dimension_numbers = #tpu.dot_dimension_numbers<[2], [1], [1], [2], [0, 0, 0, 1, 1, 2], [0], [0]>} : vector<1x8x8xbf16>, vector<1x8x8xbf16>, vector<1x8x8xf32> -> vector<1x8x8xf32>
    "tpu.trace_stop"() : () -> ()
    %c0_21 = arith.constant 0 : index
    %c0_22 = arith.constant 0 : index
    %c0_23 = arith.constant 0 : index
    %42 = vector.load %arg27[%c0_21, %c0_22, %c0_23] : memref<1x8x32xf32, #tpu.memory_space<vmem>>, vector<1x8x8xf32>
    tpu.vector_store %arg27[%c0_21, %c0_22, %c0_23], %41 {strides = array<i32>} : memref<1x8x32xf32, #tpu.memory_space<vmem>>, vector<1x8x8xf32>,
    %43 = vector.extract_strided_slice %19 {offsets = [0, 0, 8], sizes = [1, 8, 8], strides = [1, 1, 1]} : vector<1x8x32xbf16> to vector<1x8x8xbf16>
    %44 = vector.extract_strided_slice %21 {offsets = [0, 0, 8], sizes = [1, 8, 8], strides = [1, 1, 1]} : vector<1x8x32xbf16> to vector<1x8x8xbf16>
    %45 = vector.extract_strided_slice %23 {offsets = [0, 0, 8], sizes = [1, 8, 8], strides = [1, 1, 1]} : vector<1x8x32xbf16> to vector<1x8x8xbf16>
    "tpu.trace_start"() <{level = 10 : i32, message = "bqd,bkd->bqk"}> : () -> ()
    %cst_24 = arith.constant dense<0.000000e+00> : vector<1x8x8xf32>
    %46 = tpu.matmul %43, %44, %cst_24 {dimension_numbers = #tpu.dot_dimension_numbers<[2], [2], [1], [1], [0, 0, 0, 1, 1, 1], [0], [0]>} : vector<1x8x8xbf16>, vector<1x8x8xbf16>, vector<1x8x8xf32> -> vector<1x8x8xf32>
    "tpu.trace_stop"() : () -> ()
    %cst_25 = arith.constant 0.353553385 : f32
    %47 = vector.broadcast %cst_25 : f32 to vector<1x8x8xf32>
    %48 = arith.mulf %46, %47 : vector<1x8x8xf32>
    %cst_26 = arith.constant dense<0xFF800000> : vector<1x8xf32>
    %49 = vector.multi_reduction <maximumf>, %48, %cst_26 [2] : vector<1x8x8xf32> to vector<1x8xf32>
    %50 = vector.shape_cast %49 : vector<1x8xf32> to vector<1x8x1xf32>
    %51 = vector.broadcast %50 : vector<1x8x1xf32> to vector<1x8x8xf32>
    %52 = arith.subf %48, %51 : vector<1x8x8xf32>
    %53 = math.exp %52 : vector<1x8x8xf32>
    %cst_27 = arith.constant dense<0.000000e+00> : vector<1x8xf32>
    %54 = vector.multi_reduction <add>, %53, %cst_27 [2] : vector<1x8x8xf32> to vector<1x8xf32>
    %55 = vector.shape_cast %54 : vector<1x8xf32> to vector<1x8x1xf32>
    %56 = tpu.reciprocal %55 {approx = true} : vector<1x8x1xf32> -> vector<1x8x1xf32>
    %57 = vector.broadcast %56 : vector<1x8x1xf32> to vector<1x8x8xf32>
    %58 = arith.mulf %53, %57 : vector<1x8x8xf32>
    %59 = arith.truncf %58 : vector<1x8x8xf32> to vector<1x8x8xbf16>
    "tpu.trace_start"() <{level = 10 : i32, message = "bqk,bkd->bqd"}> : () -> ()
    %cst_28 = arith.constant dense<0.000000e+00> : vector<1x8x8xf32>
    %60 = tpu.matmul %59, %45, %cst_28 {dimension_numbers = #tpu.dot_dimension_numbers<[2], [1], [1], [2], [0, 0, 0, 1, 1, 2], [0], [0]>} : vector<1x8x8xbf16>, vector<1x8x8xbf16>, vector<1x8x8xf32> -> vector<1x8x8xf32>
    "tpu.trace_stop"() : () -> ()
    %c0_29 = arith.constant 0 : index
    %c0_30 = arith.constant 0 : index
    %c8 = arith.constant 8 : index
    %61 = vector.load %arg27[%c0_29, %c0_30, %c8] : memref<1x8x32xf32, #tpu.memory_space<vmem>>, vector<1x8x8xf32>
    tpu.vector_store %arg27[%c0_29, %c0_30, %c8], %60 {strides = array<i32>} : memref<1x8x32xf32, #tpu.memory_space<vmem>>, vector<1x8x8xf32>,
    %62 = vector.extract_strided_slice %19 {offsets = [0, 0, 16], sizes = [1, 8, 8], strides = [1, 1, 1]} : vector<1x8x32xbf16> to vector<1x8x8xbf16>
    %63 = vector.extract_strided_slice %21 {offsets = [0, 0, 16], sizes = [1, 8, 8], strides = [1, 1, 1]} : vector<1x8x32xbf16> to vector<1x8x8xbf16>
    %64 = vector.extract_strided_slice %23 {offsets = [0, 0, 16], sizes = [1, 8, 8], strides = [1, 1, 1]} : vector<1x8x32xbf16> to vector<1x8x8xbf16>
    "tpu.trace_start"() <{level = 10 : i32, message = "bqd,bkd->bqk"}> : () -> ()
    %cst_31 = arith.constant dense<0.000000e+00> : vector<1x8x8xf32>
    %65 = tpu.matmul %62, %63, %cst_31 {dimension_numbers = #tpu.dot_dimension_numbers<[2], [2], [1], [1], [0, 0, 0, 1, 1, 1], [0], [0]>} : vector<1x8x8xbf16>, vector<1x8x8xbf16>, vector<1x8x8xf32> -> vector<1x8x8xf32>
    "tpu.trace_stop"() : () -> ()
    %cst_32 = arith.constant 0.353553385 : f32
    %66 = vector.broadcast %cst_32 : f32 to vector<1x8x8xf32>
    %67 = arith.mulf %65, %66 : vector<1x8x8xf32>
    %cst_33 = arith.constant dense<0xFF800000> : vector<1x8xf32>
    %68 = vector.multi_reduction <maximumf>, %67, %cst_33 [2] : vector<1x8x8xf32> to vector<1x8xf32>
    %69 = vector.shape_cast %68 : vector<1x8xf32> to vector<1x8x1xf32>
    %70 = vector.broadcast %69 : vector<1x8x1xf32> to vector<1x8x8xf32>
    %71 = arith.subf %67, %70 : vector<1x8x8xf32>
    %72 = math.exp %71 : vector<1x8x8xf32>
    %cst_34 = arith.constant dense<0.000000e+00> : vector<1x8xf32>
    %73 = vector.multi_reduction <add>, %72, %cst_34 [2] : vector<1x8x8xf32> to vector<1x8xf32>
    %74 = vector.shape_cast %73 : vector<1x8xf32> to vector<1x8x1xf32>
    %75 = tpu.reciprocal %74 {approx = true} : vector<1x8x1xf32> -> vector<1x8x1xf32>
    %76 = vector.broadcast %75 : vector<1x8x1xf32> to vector<1x8x8xf32>
    %77 = arith.mulf %72, %76 : vector<1x8x8xf32>
    %78 = arith.truncf %77 : vector<1x8x8xf32> to vector<1x8x8xbf16>
    "tpu.trace_start"() <{level = 10 : i32, message = "bqk,bkd->bqd"}> : () -> ()
    %cst_35 = arith.constant dense<0.000000e+00> : vector<1x8x8xf32>
    %79 = tpu.matmul %78, %64, %cst_35 {dimension_numbers = #tpu.dot_dimension_numbers<[2], [1], [1], [2], [0, 0, 0, 1, 1, 2], [0], [0]>} : vector<1x8x8xbf16>, vector<1x8x8xbf16>, vector<1x8x8xf32> -> vector<1x8x8xf32>
    "tpu.trace_stop"() : () -> ()
    %c0_36 = arith.constant 0 : index
    %c0_37 = arith.constant 0 : index
    %c16 = arith.constant 16 : index
    %80 = vector.load %arg27[%c0_36, %c0_37, %c16] : memref<1x8x32xf32, #tpu.memory_space<vmem>>, vector<1x8x8xf32>
    tpu.vector_store %arg27[%c0_36, %c0_37, %c16], %79 {strides = array<i32>} : memref<1x8x32xf32, #tpu.memory_space<vmem>>, vector<1x8x8xf32>,
    %81 = vector.extract_strided_slice %19 {offsets = [0, 0, 24], sizes = [1, 8, 8], strides = [1, 1, 1]} : vector<1x8x32xbf16> to vector<1x8x8xbf16>
    %82 = vector.extract_strided_slice %21 {offsets = [0, 0, 24], sizes = [1, 8, 8], strides = [1, 1, 1]} : vector<1x8x32xbf16> to vector<1x8x8xbf16>
    %83 = vector.extract_strided_slice %23 {offsets = [0, 0, 24], sizes = [1, 8, 8], strides = [1, 1, 1]} : vector<1x8x32xbf16> to vector<1x8x8xbf16>
    "tpu.trace_start"() <{level = 10 : i32, message = "bqd,bkd->bqk"}> : () -> ()
    %cst_38 = arith.constant dense<0.000000e+00> : vector<1x8x8xf32>
    %84 = tpu.matmul %81, %82, %cst_38 {dimension_numbers = #tpu.dot_dimension_numbers<[2], [2], [1], [1], [0, 0, 0, 1, 1, 1], [0], [0]>} : vector<1x8x8xbf16>, vector<1x8x8xbf16>, vector<1x8x8xf32> -> vector<1x8x8xf32>
    "tpu.trace_stop"() : () -> ()
    %cst_39 = arith.constant 0.353553385 : f32
    %85 = vector.broadcast %cst_39 : f32 to vector<1x8x8xf32>
    %86 = arith.mulf %84, %85 : vector<1x8x8xf32>
    %cst_40 = arith.constant dense<0xFF800000> : vector<1x8xf32>
    %87 = vector.multi_reduction <maximumf>, %86, %cst_40 [2] : vector<1x8x8xf32> to vector<1x8xf32>
    %88 = vector.shape_cast %87 : vector<1x8xf32> to vector<1x8x1xf32>
    %89 = vector.broadcast %88 : vector<1x8x1xf32> to vector<1x8x8xf32>
    %90 = arith.subf %86, %89 : vector<1x8x8xf32>
    %91 = math.exp %90 : vector<1x8x8xf32>
    %cst_41 = arith.constant dense<0.000000e+00> : vector<1x8xf32>
    %92 = vector.multi_reduction <add>, %91, %cst_41 [2] : vector<1x8x8xf32> to vector<1x8xf32>
    %93 = vector.shape_cast %92 : vector<1x8xf32> to vector<1x8x1xf32>
    %94 = tpu.reciprocal %93 {approx = true} : vector<1x8x1xf32> -> vector<1x8x1xf32>
    %95 = vector.broadcast %94 : vector<1x8x1xf32> to vector<1x8x8xf32>
    %96 = arith.mulf %91, %95 : vector<1x8x8xf32>
    %97 = arith.truncf %96 : vector<1x8x8xf32> to vector<1x8x8xbf16>
    "tpu.trace_start"() <{level = 10 : i32, message = "bqk,bkd->bqd"}> : () -> ()
    %cst_42 = arith.constant dense<0.000000e+00> : vector<1x8x8xf32>
    %98 = tpu.matmul %97, %83, %cst_42 {dimension_numbers = #tpu.dot_dimension_numbers<[2], [1], [1], [2], [0, 0, 0, 1, 1, 2], [0], [0]>} : vector<1x8x8xbf16>, vector<1x8x8xbf16>, vector<1x8x8xf32> -> vector<1x8x8xf32>
    "tpu.trace_stop"() : () -> ()
    %c0_43 = arith.constant 0 : index
    %c0_44 = arith.constant 0 : index
    %c24 = arith.constant 24 : index
    %99 = vector.load %arg27[%c0_43, %c0_44, %c24] : memref<1x8x32xf32, #tpu.memory_space<vmem>>, vector<1x8x8xf32>
    tpu.vector_store %arg27[%c0_43, %c0_44, %c24], %98 {strides = array<i32>} : memref<1x8x32xf32, #tpu.memory_space<vmem>>, vector<1x8x8xf32>,
    %c0_45 = arith.constant 0 : index
    %c0_46 = arith.constant 0 : index
    %c0_47 = arith.constant 0 : index
    %100 = vector.load %arg27[%c0_45, %c0_46, %c0_47] : memref<1x8x32xf32, #tpu.memory_space<vmem>>, vector<1x8x32xf32>
    %101 = vector.shape_cast %100 : vector<1x8x32xf32> to vector<8x32xf32>
    %102 = arith.truncf %101 : vector<8x32xf32> to vector<8x32xbf16>
    %c0_48 = arith.constant 0 : index
    %c0_49 = arith.constant 0 : index
    %103 = vector.load %arg8[%c0_48, %c0_49] : memref<32x32xbf16, #tpu.memory_space<vmem>>, vector<32x32xbf16>
    %cst_50 = arith.constant dense<0.000000e+00> : vector<8x32xf32>
    %104 = tpu.matmul %102, %103, %cst_50 {dimension_numbers = #tpu.dot_dimension_numbers<[1], [0], [0], [1], [0, 0, 1, 1], [], []>} : vector<8x32xbf16>, vector<32x32xbf16>, vector<8x32xf32> -> vector<8x32xf32>
    %c0_51 = arith.constant 0 : index
    %c0_52 = arith.constant 0 : index
    %105 = vector.load %arg9[%c0_51, %c0_52] : memref<1x32xf32, #tpu.memory_space<vmem>>, vector<1x32xf32>
    %106 = vector.broadcast %105 : vector<1x32xf32> to vector<8x32xf32>
    %107 = arith.addf %104, %106 : vector<8x32xf32>
    %108 = arith.addf %107, %1 : vector<8x32xf32>
    %c0_53 = arith.constant 0 : index
    %c0_54 = arith.constant 0 : index
    %109 = vector.load %arg10[%c0_53, %c0_54] : memref<1x32xf32, #tpu.memory_space<vmem>>, vector<1x32xf32>
    %c0_55 = arith.constant 0 : index
    %c0_56 = arith.constant 0 : index
    %110 = vector.load %arg11[%c0_55, %c0_56] : memref<1x32xf32, #tpu.memory_space<vmem>>, vector<1x32xf32>
    %cst_57 = arith.constant dense<0.000000e+00> : vector<8xf32>
    %111 = vector.multi_reduction <add>, %108, %cst_57 [1] : vector<8x32xf32> to vector<8xf32>
    %112 = vector.shape_cast %111 : vector<8xf32> to vector<8x1xf32>
    %cst_58 = arith.constant 3.200000e+01 : f32
    %113 = vector.broadcast %cst_58 : f32 to vector<8x1xf32>
    %114 = arith.divf %112, %113 : vector<8x1xf32>
    %115 = vector.broadcast %114 : vector<8x1xf32> to vector<8x32xf32>
    %116 = arith.subf %108, %115 : vector<8x32xf32>
    %117 = arith.mulf %116, %116 : vector<8x32xf32>
    %cst_59 = arith.constant dense<0.000000e+00> : vector<8xf32>
    %118 = vector.multi_reduction <add>, %117, %cst_59 [1] : vector<8x32xf32> to vector<8xf32>
    %119 = vector.shape_cast %118 : vector<8xf32> to vector<8x1xf32>
    %cst_60 = arith.constant 3.200000e+01 : f32
    %120 = vector.broadcast %cst_60 : f32 to vector<8x1xf32>
    %121 = arith.divf %119, %120 : vector<8x1xf32>
    %cst_61 = arith.constant 9.99999996E-13 : f32
    %122 = vector.broadcast %cst_61 : f32 to vector<8x1xf32>
    %123 = arith.addf %121, %122 : vector<8x1xf32>
    %124 = math.rsqrt %123 : vector<8x1xf32>
    %125 = vector.broadcast %124 : vector<8x1xf32> to vector<8x32xf32>
    %126 = arith.mulf %116, %125 : vector<8x32xf32>
    %127 = vector.broadcast %109 : vector<1x32xf32> to vector<8x32xf32>
    %128 = arith.mulf %126, %127 : vector<8x32xf32>
    %129 = vector.broadcast %110 : vector<1x32xf32> to vector<8x32xf32>
    %130 = arith.addf %128, %129 : vector<8x32xf32>
    %131 = arith.truncf %130 : vector<8x32xf32> to vector<8x32xbf16>
    %c0_62 = arith.constant 0 : index
    %c0_63 = arith.constant 0 : index
    %132 = vector.load %arg12[%c0_62, %c0_63] : memref<32x64xbf16, #tpu.memory_space<vmem>>, vector<32x64xbf16>
    %cst_64 = arith.constant dense<0.000000e+00> : vector<8x64xf32>
    %133 = tpu.matmul %131, %132, %cst_64 {dimension_numbers = #tpu.dot_dimension_numbers<[1], [0], [0], [1], [0, 0, 1, 1], [], []>} : vector<8x32xbf16>, vector<32x64xbf16>, vector<8x64xf32> -> vector<8x64xf32>
    %c0_65 = arith.constant 0 : index
    %c0_66 = arith.constant 0 : index
    %134 = vector.load %arg13[%c0_65, %c0_66] : memref<1x64xf32, #tpu.memory_space<vmem>>, vector<1x64xf32>
    %135 = vector.broadcast %134 : vector<1x64xf32> to vector<8x64xf32>
    %136 = arith.addf %133, %135 : vector<8x64xf32>
    %cst_67 = arith.constant 5.000000e-01 : f32
    %137 = vector.broadcast %cst_67 : f32 to vector<8x64xf32>
    %138 = arith.mulf %137, %136 : vector<8x64xf32>
    %cst_68 = arith.constant 4.471500e-02 : f32
    %139 = vector.broadcast %cst_68 : f32 to vector<8x64xf32>
    %140 = arith.mulf %139, %136 : vector<8x64xf32>
    %141 = arith.mulf %140, %136 : vector<8x64xf32>
    %142 = arith.mulf %141, %136 : vector<8x64xf32>
    %143 = arith.addf %136, %142 : vector<8x64xf32>
    %cst_69 = arith.constant 0.797884583 : f32
    %144 = vector.broadcast %cst_69 : f32 to vector<8x64xf32>
    %145 = arith.mulf %144, %143 : vector<8x64xf32>
    %146 = math.tanh %145 : vector<8x64xf32>
    %cst_70 = arith.constant 1.000000e+00 : f32
    %147 = vector.broadcast %cst_70 : f32 to vector<8x64xf32>
    %148 = arith.addf %147, %146 : vector<8x64xf32>
    %149 = arith.mulf %138, %148 : vector<8x64xf32>
    %150 = arith.truncf %149 : vector<8x64xf32> to vector<8x64xbf16>
    %c0_71 = arith.constant 0 : index
    %c0_72 = arith.constant 0 : index
    %151 = vector.load %arg14[%c0_71, %c0_72] : memref<64x32xbf16, #tpu.memory_space<vmem>>, vector<64x32xbf16>
    %cst_73 = arith.constant dense<0.000000e+00> : vector<8x32xf32>
    %152 = tpu.matmul %150, %151, %cst_73 {dimension_numbers = #tpu.dot_dimension_numbers<[1], [0], [0], [1], [0, 0, 1, 1], [], []>} : vector<8x64xbf16>, vector<64x32xbf16>, vector<8x32xf32> -> vector<8x32xf32>
    %c0_74 = arith.constant 0 : index
    %c0_75 = arith.constant 0 : index
    %153 = vector.load %arg15[%c0_74, %c0_75] : memref<1x32xf32, #tpu.memory_space<vmem>>, vector<1x32xf32>
    %154 = vector.broadcast %153 : vector<1x32xf32> to vector<8x32xf32>
    %155 = arith.addf %152, %154 : vector<8x32xf32>
    %156 = arith.addf %155, %130 : vector<8x32xf32>
    %c0_76 = arith.constant 0 : index
    %c0_77 = arith.constant 0 : index
    %157 = vector.load %arg16[%c0_76, %c0_77] : memref<1x32xf32, #tpu.memory_space<vmem>>, vector<1x32xf32>
    %c0_78 = arith.constant 0 : index
    %c0_79 = arith.constant 0 : index
    %158 = vector.load %arg17[%c0_78, %c0_79] : memref<1x32xf32, #tpu.memory_space<vmem>>, vector<1x32xf32>
    %cst_80 = arith.constant dense<0.000000e+00> : vector<8xf32>
    %159 = vector.multi_reduction <add>, %156, %cst_80 [1] : vector<8x32xf32> to vector<8xf32>
    %160 = vector.shape_cast %159 : vector<8xf32> to vector<8x1xf32>
    %cst_81 = arith.constant 3.200000e+01 : f32
    %161 = vector.broadcast %cst_81 : f32 to vector<8x1xf32>
    %162 = arith.divf %160, %161 : vector<8x1xf32>
    %163 = vector.broadcast %162 : vector<8x1xf32> to vector<8x32xf32>
    %164 = arith.subf %156, %163 : vector<8x32xf32>
    %165 = arith.mulf %164, %164 : vector<8x32xf32>
    %cst_82 = arith.constant dense<0.000000e+00> : vector<8xf32>
    %166 = vector.multi_reduction <add>, %165, %cst_82 [1] : vector<8x32xf32> to vector<8xf32>
    %167 = vector.shape_cast %166 : vector<8xf32> to vector<8x1xf32>
    %cst_83 = arith.constant 3.200000e+01 : f32
    %168 = vector.broadcast %cst_83 : f32 to vector<8x1xf32>
    %169 = arith.divf %167, %168 : vector<8x1xf32>
    %cst_84 = arith.constant 9.99999996E-13 : f32
    %170 = vector.broadcast %cst_84 : f32 to vector<8x1xf32>
    %171 = arith.addf %169, %170 : vector<8x1xf32>
    %172 = math.rsqrt %171 : vector<8x1xf32>
    %173 = vector.broadcast %172 : vector<8x1xf32> to vector<8x32xf32>
    %174 = arith.mulf %164, %173 : vector<8x32xf32>
    %175 = vector.broadcast %157 : vector<1x32xf32> to vector<8x32xf32>
    %176 = arith.mulf %174, %175 : vector<8x32xf32>
    %177 = vector.broadcast %158 : vector<1x32xf32> to vector<8x32xf32>
    %178 = arith.addf %176, %177 : vector<8x32xf32>
    %179 = arith.truncf %178 : vector<8x32xf32> to vector<8x32xbf16>
    %c0_85 = arith.constant 0 : index
    %c0_86 = arith.constant 0 : index
    %180 = vector.load %arg18[%c0_85, %c0_86] : memref<32x16xbf16, #tpu.memory_space<vmem>>, vector<32x16xbf16>
    %cst_87 = arith.constant dense<0.000000e+00> : vector<8x16xf32>
    %181 = tpu.matmul %179, %180, %cst_87 {dimension_numbers = #tpu.dot_dimension_numbers<[1], [0], [0], [1], [0, 0, 1, 1], [], []>} : vector<8x32xbf16>, vector<32x16xbf16>, vector<8x16xf32> -> vector<8x16xf32>
    %c0_88 = arith.constant 0 : index
    %c0_89 = arith.constant 0 : index
    %182 = vector.load %arg19[%c0_88, %c0_89] : memref<1x16xf32, #tpu.memory_space<vmem>>, vector<1x16xf32>
    %183 = vector.broadcast %182 : vector<1x16xf32> to vector<8x16xf32>
    %184 = arith.addf %181, %183 : vector<8x16xf32>
    %cst_90 = arith.constant 0.000000e+00 : f32
    %185 = vector.broadcast %cst_90 : f32 to vector<8x16xf32>
    %186 = arith.maximumf %184, %185 : vector<8x16xf32>
    %187 = arith.truncf %186 : vector<8x16xf32> to vector<8x16xbf16>
    %c0_91 = arith.constant 0 : index
    %c0_92 = arith.constant 0 : index
    %188 = vector.load %arg20[%c0_91, %c0_92] : memref<16x32xbf16, #tpu.memory_space<vmem>>, vector<16x32xbf16>
    %cst_93 = arith.constant dense<0.000000e+00> : vector<8x32xf32>
    %189 = tpu.matmul %187, %188, %cst_93 {dimension_numbers = #tpu.dot_dimension_numbers<[1], [0], [0], [1], [0, 0, 1, 1], [], []>} : vector<8x16xbf16>, vector<16x32xbf16>, vector<8x32xf32> -> vector<8x32xf32>
    %c0_94 = arith.constant 0 : index
    %c0_95 = arith.constant 0 : index
    %190 = vector.load %arg21[%c0_94, %c0_95] : memref<1x32xf32, #tpu.memory_space<vmem>>, vector<1x32xf32>
    %191 = vector.broadcast %190 : vector<1x32xf32> to vector<8x32xf32>
    %192 = arith.addf %189, %191 : vector<8x32xf32>
    %c0_96 = arith.constant 0 : index
    %c0_97 = arith.constant 0 : index
    %193 = vector.load %arg22[%c0_96, %c0_97] : memref<16x32xbf16, #tpu.memory_space<vmem>>, vector<16x32xbf16>
    %cst_98 = arith.constant dense<0.000000e+00> : vector<8x32xf32>
    %194 = tpu.matmul %187, %193, %cst_98 {dimension_numbers = #tpu.dot_dimension_numbers<[1], [0], [0], [1], [0, 0, 1, 1], [], []>} : vector<8x16xbf16>, vector<16x32xbf16>, vector<8x32xf32> -> vector<8x32xf32>
    %c0_99 = arith.constant 0 : index
    %c0_100 = arith.constant 0 : index
    %195 = vector.load %arg23[%c0_99, %c0_100] : memref<1x32xf32, #tpu.memory_space<vmem>>, vector<1x32xf32>
    %196 = vector.broadcast %195 : vector<1x32xf32> to vector<8x32xf32>
    %197 = arith.addf %194, %196 : vector<8x32xf32>
    %cst_101 = arith.constant -3.300000e+00 : f32
    %198 = vector.broadcast %cst_101 : f32 to vector<8x32xf32>
    %199 = arith.addf %197, %198 : vector<8x32xf32>
    %200 = arith.negf %199 : vector<8x32xf32>
    %201 = math.exp %200 : vector<8x32xf32>
    %cst_102 = arith.constant 1.000000e+00 : f32
    %202 = vector.broadcast %cst_102 : f32 to vector<8x32xf32>
    %203 = arith.addf %202, %201 : vector<8x32xf32>
    %204 = arith.divf %202, %203 : vector<8x32xf32>
    %205 = arith.mulf %192, %204 : vector<8x32xf32>
    %cst_103 = arith.constant 1.000000e+00 : f32
    %206 = vector.broadcast %cst_103 : f32 to vector<8x32xf32>
    %207 = arith.subf %206, %204 : vector<8x32xf32>
    %208 = arith.mulf %178, %207 : vector<8x32xf32>
    %209 = arith.addf %205, %208 : vector<8x32xf32>
    %c0_104 = arith.constant 0 : index
    %c0_105 = arith.constant 0 : index
    %210 = vector.load %arg24[%c0_104, %c0_105] : memref<1x32xf32, #tpu.memory_space<vmem>>, vector<1x32xf32>
    %c0_106 = arith.constant 0 : index
    %c0_107 = arith.constant 0 : index
    %211 = vector.load %arg25[%c0_106, %c0_107] : memref<1x32xf32, #tpu.memory_space<vmem>>, vector<1x32xf32>
    %cst_108 = arith.constant dense<0.000000e+00> : vector<8xf32>
    %212 = vector.multi_reduction <add>, %209, %cst_108 [1] : vector<8x32xf32> to vector<8xf32>
    %213 = vector.shape_cast %212 : vector<8xf32> to vector<8x1xf32>
    %cst_109 = arith.constant 3.200000e+01 : f32
    %214 = vector.broadcast %cst_109 : f32 to vector<8x1xf32>
    %215 = arith.divf %213, %214 : vector<8x1xf32>
    %216 = vector.broadcast %215 : vector<8x1xf32> to vector<8x32xf32>
    %217 = arith.subf %209, %216 : vector<8x32xf32>
    %218 = arith.mulf %217, %217 : vector<8x32xf32>
    %cst_110 = arith.constant dense<0.000000e+00> : vector<8xf32>
    %219 = vector.multi_reduction <add>, %218, %cst_110 [1] : vector<8x32xf32> to vector<8xf32>
    %220 = vector.shape_cast %219 : vector<8xf32> to vector<8x1xf32>
    %cst_111 = arith.constant 3.200000e+01 : f32
    %221 = vector.broadcast %cst_111 : f32 to vector<8x1xf32>
    %222 = arith.divf %220, %221 : vector<8x1xf32>
    %cst_112 = arith.constant 9.99999974E-6 : f32
    %223 = vector.broadcast %cst_112 : f32 to vector<8x1xf32>
    %224 = arith.addf %222, %223 : vector<8x1xf32>
    %225 = math.rsqrt %224 : vector<8x1xf32>
    %226 = vector.broadcast %225 : vector<8x1xf32> to vector<8x32xf32>
    %227 = arith.mulf %217, %226 : vector<8x32xf32>
    %228 = vector.broadcast %210 : vector<1x32xf32> to vector<8x32xf32>
    %229 = arith.mulf %227, %228 : vector<8x32xf32>
    %230 = vector.broadcast %211 : vector<1x32xf32> to vector<8x32xf32>
    %231 = arith.addf %229, %230 : vector<8x32xf32>
    %232 = vector.shape_cast %231 : vector<8x32xf32> to vector<1x8x32xf32>
    %c0_113 = arith.constant 0 : index
    %c0_114 = arith.constant 0 : index
    %c0_115 = arith.constant 0 : index
    %233 = vector.load %arg26[%c0_113, %c0_114, %c0_115] : memref<1x8x32xf32, #tpu.memory_space<vmem>>, vector<1x8x32xf32>
    tpu.vector_store %arg26[%c0_113, %c0_114, %c0_115], %232 {strides = array<i32>} : memref<1x8x32xf32, #tpu.memory_space<vmem>>, vector<1x8x32xf32>,
    return
  }
  func.func @transform_0(%arg0: i32) -> (i32, i32, i32) {
    %c0_i32 = arith.constant 0 : i32
    %c0_i32_0 = arith.constant 0 : i32
    %c0_i32_1 = arith.constant 0 : i32
    return %arg0, %c0_i32, %c0_i32_0 : i32, i32, i32
  }
  func.func @transform_1(%arg0: i32) -> (i32, i32) {
    %c0_i32 = arith.constant 0 : i32
    %c0_i32_0 = arith.constant 0 : i32
    %c0_i32_1 = arith.constant 0 : i32
    return %c0_i32, %c0_i32_0 : i32, i32
  }
  func.func @transform_2(%arg0: i32) -> (i32, i32) {
    %c0_i32 = arith.constant 0 : i32
    %c0_i32_0 = arith.constant 0 : i32
    %c0_i32_1 = arith.constant 0 : i32
    return %c0_i32, %c0_i32_0 : i32, i32
  }
  func.func @transform_3(%arg0: i32) -> (i32, i32) {
    %c0_i32 = arith.constant 0 : i32
    %c0_i32_0 = arith.constant 0 : i32
    %c0_i32_1 = arith.constant 0 : i32
    return %c0_i32, %c0_i32_0 : i32, i32
  }
  func.func @transform_4(%arg0: i32) -> (i32, i32) {
    %c0_i32 = arith.constant 0 : i32
    %c0_i32_0 = arith.constant 0 : i32
    %c0_i32_1 = arith.constant 0 : i32
    return %c0_i32, %c0_i32_0 : i32, i32
  }
  func.func @transform_5(%arg0: i32) -> (i32, i32) {
    %c0_i32 = arith.constant 0 : i32
    %c0_i32_0 = arith.constant 0 : i32
    %c0_i32_1 = arith.constant 0 : i32
    return %c0_i32, %c0_i32_0 : i32, i32
  }
  func.func @transform_6(%arg0: i32) -> (i32, i32) {
    %c0_i32 = arith.constant 0 : i32
    %c0_i32_0 = arith.constant 0 : i32
    %c0_i32_1 = arith.constant 0 : i32
    return %c0_i32, %c0_i32_0 : i32, i32
  }
  func.func @transform_7(%arg0: i32) -> (i32, i32) {
    %c0_i32 = arith.constant 0 : i32
    %c0_i32_0 = arith.constant 0 : i32
    %c0_i32_1 = arith.constant 0 : i32
    return %c0_i32, %c0_i32_0 : i32, i32
  }
  func.func @transform_8(%arg0: i32) -> (i32, i32) {
    %c0_i32 = arith.constant 0 : i32
    %c0_i32_0 = arith.constant 0 : i32
    %c0_i32_1 = arith.constant 0 : i32
    return %c0_i32, %c0_i32_0 : i32, i32
  }
  func.func @transform_9(%arg0: i32) -> (i32, i32) {
    %c0_i32 = arith.constant 0 : i32
    %c0_i32_0 = arith.constant 0 : i32
    %c0_i32_1 = arith.constant 0 : i32
    return %c0_i32, %c0_i32_0 : i32, i32
  }
  func.func @transform_10(%arg0: i32) -> (i32, i32) {
    %c0_i32 = arith.constant 0 : i32
    %c0_i32_0 = arith.constant 0 : i32
    %c0_i32_1 = arith.constant 0 : i32
    return %c0_i32, %c0_i32_0 : i32, i32
  }
  func.func @transform_11(%arg0: i32) -> (i32, i32) {
    %c0_i32 = arith.constant 0 : i32
    %c0_i32_0 = arith.constant 0 : i32
    %c0_i32_1 = arith.constant 0 : i32
    return %c0_i32, %c0_i32_0 : i32, i32
  }
  func.func @transform_12(%arg0: i32) -> (i32, i32) {
    %c0_i32 = arith.constant 0 : i32
    %c0_i32_0 = arith.constant 0 : i32
    %c0_i32_1 = arith.constant 0 : i32
    return %c0_i32, %c0_i32_0 : i32, i32
  }
  func.func @transform_13(%arg0: i32) -> (i32, i32) {
    %c0_i32 = arith.constant 0 : i32
    %c0_i32_0 = arith.constant 0 : i32
    %c0_i32_1 = arith.constant 0 : i32
    return %c0_i32, %c0_i32_0 : i32, i32
  }
  func.func @transform_14(%arg0: i32) -> (i32, i32) {
    %c0_i32 = arith.constant 0 : i32
    %c0_i32_0 = arith.constant 0 : i32
    %c0_i32_1 = arith.constant 0 : i32
    return %c0_i32, %c0_i32_0 : i32, i32
  }
  func.func @transform_15(%arg0: i32) -> (i32, i32) {
    %c0_i32 = arith.constant 0 : i32
    %c0_i32_0 = arith.constant 0 : i32
    %c0_i32_1 = arith.constant 0 : i32
    return %c0_i32, %c0_i32_0 : i32, i32
  }
  func.func @transform_16(%arg0: i32) -> (i32, i32) {
    %c0_i32 = arith.constant 0 : i32
    %c0_i32_0 = arith.constant 0 : i32
    %c0_i32_1 = arith.constant 0 : i32
    return %c0_i32, %c0_i32_0 : i32, i32
  }
  func.func @transform_17(%arg0: i32) -> (i32, i32) {
    %c0_i32 = arith.constant 0 : i32
    %c0_i32_0 = arith.constant 0 : i32
    %c0_i32_1 = arith.constant 0 : i32
    return %c0_i32, %c0_i32_0 : i32, i32
  }
  func.func @transform_18(%arg0: i32) -> (i32, i32) {
    %c0_i32 = arith.constant 0 : i32
    %c0_i32_0 = arith.constant 0 : i32
    %c0_i32_1 = arith.constant 0 : i32
    return %c0_i32, %c0_i32_0 : i32, i32
  }
  func.func @transform_19(%arg0: i32) -> (i32, i32) {
    %c0_i32 = arith.constant 0 : i32
    %c0_i32_0 = arith.constant 0 : i32
    %c0_i32_1 = arith.constant 0 : i32
    return %c0_i32, %c0_i32_0 : i32, i32
  }
  func.func @transform_20(%arg0: i32) -> (i32, i32) {
    %c0_i32 = arith.constant 0 : i32
    %c0_i32_0 = arith.constant 0 : i32
    %c0_i32_1 = arith.constant 0 : i32
    return %c0_i32, %c0_i32_0 : i32, i32
  }
  func.func @transform_21(%arg0: i32) -> (i32, i32) {
    %c0_i32 = arith.constant 0 : i32
    %c0_i32_0 = arith.constant 0 : i32
    %c0_i32_1 = arith.constant 0 : i32
    return %c0_i32, %c0_i32_0 : i32, i32
  }
  func.func @transform_22(%arg0: i32) -> (i32, i32) {
    %c0_i32 = arith.constant 0 : i32
    %c0_i32_0 = arith.constant 0 : i32
    %c0_i32_1 = arith.constant 0 : i32
    return %c0_i32, %c0_i32_0 : i32, i32
  }
  func.func @transform_23(%arg0: i32) -> (i32, i32) {
    %c0_i32 = arith.constant 0 : i32
    %c0_i32_0 = arith.constant 0 : i32
    %c0_i32_1 = arith.constant 0 : i32
    return %c0_i32, %c0_i32_0 : i32, i32
  }
  func.func @transform_24(%arg0: i32) -> (i32, i32) {
    %c0_i32 = arith.constant 0 : i32
    %c0_i32_0 = arith.constant 0 : i32
    %c0_i32_1 = arith.constant 0 : i32
    return %c0_i32, %c0_i32_0 : i32, i32
  }
  func.func @transform_25(%arg0: i32) -> (i32, i32, i32) {
    %c0_i32 = arith.constant 0 : i32
    %c0_i32_0 = arith.constant 0 : i32
    %c0_i32_1 = arith.constant 0 : i32
    return %arg0, %c0_i32, %c0_i32_0 : i32, i32, i32
  }
}

</mosaic_0001>

<llo_original>
// kernel: tpu_custom_call.1
$region0: #{tpu_custom_call.1}
  #allocation0 [shape = 'u32[]', space=smem, size = 0x4, offset = 0x4, fixed_abs, tag = 'smem constant byte address 0x4 - core index']
  #allocation1 [shape = 'u32[72,128]{1,0:T(1,128)}', space=vmem, size = 0x9000, scoped, tag = 'internal scratch']
  #allocation2 [shape = 'f32[1,8,32]{2,1,0:T(8,128)}', space=vmem, size = 0x1000, scoped, tag = 'scratch operand']
  %s0 = inlined_call_operand.vmem [shape: f32[2,8,32], index: 0, kind: input, shape index: {}]
  %s1 = inlined_call_operand.vmem [shape: bf16[32,32], index: 1, kind: input, shape index: {}]
  %s2 = inlined_call_operand.hbm [shape: f32[1,32], index: 2, kind: input, shape index: {}]
  %s3 = inlined_call_operand.vmem [shape: bf16[32,32], index: 3, kind: input, shape index: {}]
  %s4 = inlined_call_operand.hbm [shape: f32[1,32], index: 4, kind: input, shape index: {}]
  %s5 = inlined_call_operand.vmem [shape: bf16[32,32], index: 5, kind: input, shape index: {}]
  %s6 = inlined_call_operand.hbm [shape: f32[1,32], index: 6, kind: input, shape index: {}]
  %s7 = inlined_call_operand.hbm [shape: bf16[32,32], index: 7, kind: input, shape index: {}]
  %s8 = inlined_call_operand.hbm [shape: f32[1,32], index: 8, kind: input, shape index: {}]
  %s9 = inlined_call_operand.hbm [shape: f32[1,32], index: 9, kind: input, shape index: {}]
  %s10 = inlined_call_operand.hbm [shape: f32[1,32], index: 10, kind: input, shape index: {}]
  %s11 = inlined_call_operand.vmem [shape: bf16[32,64], index: 11, kind: input, shape index: {}]
  %s12 = inlined_call_operand.hbm [shape: f32[1,64], index: 12, kind: input, shape index: {}]
  %s13 = inlined_call_operand.vmem [shape: bf16[64,32], index: 13, kind: input, shape index: {}]
  %s14 = inlined_call_operand.hbm [shape: f32[1,32], index: 14, kind: input, shape index: {}]
  %s15 = inlined_call_operand.hbm [shape: f32[1,32], index: 15, kind: input, shape index: {}]
  %s16 = inlined_call_operand.hbm [shape: f32[1,32], index: 16, kind: input, shape index: {}]
  %s17 = inlined_call_operand.vmem [shape: bf16[32,16], index: 17, kind: input, shape index: {}]
  %s18 = inlined_call_operand.vmem [shape: f32[1,16], index: 18, kind: input, shape index: {}]
  %s19 = inlined_call_operand.vmem [shape: bf16[16,32], index: 19, kind: input, shape index: {}]
  %s20 = inlined_call_operand.vmem [shape: f32[1,32], index: 20, kind: input, shape index: {}]
  %s21 = inlined_call_operand.hbm [shape: bf16[16,32], index: 21, kind: input, shape index: {}]
  %s22 = inlined_call_operand.vmem [shape: f32[1,32], index: 22, kind: input, shape index: {}]
  %s23 = inlined_call_operand.vmem [shape: f32[1,32], index: 23, kind: input, shape index: {}]
  %s24 = inlined_call_operand.vmem [shape: f32[1,32], index: 24, kind: input, shape index: {}]
  %s25 = inlined_call_operand.hbm [shape: f32[2,8,32], index: 25, kind: output, shape index: {}]
  %s26 = sld [smem:[#allocation0]]
  $region181: #{tpu_custom_call.1} parent=0
    _
  %s28 = ssub.s32 1, %s26
  %s29 = scalar_select 0, %s28, %s26
  $region1: #{tpu_custom_call.1} parent=0
    #allocation3 [shape = 'u8[512]{0}', space=vmem, size = 0x400, scoped, tag = 'input window, operand 2, single buffered']
    #allocation4 [shape = 's32[2]{0}', space=sflag, size = 0x8, scoped, tag = 'scoped memory for tpu_custom_call.1']
    #allocation5 [shape = 's32[2]{0}', space=sflag, size = 0x8, scoped, tag = 'scoped memory for tpu_custom_call.1']
    #allocation6 [shape = 'u8[512]{0}', space=vmem, size = 0x400, scoped, tag = 'input window, operand 4, single buffered']
    #allocation7 [shape = 's32[1]{0}', space=sflag, size = 0x4, scoped, tag = 'scoped memory for tpu_custom_call.1']
    #allocation8 [shape = 'u8[512]{0}', space=vmem, size = 0x400, scoped, tag = 'input window, operand 6, single buffered']
    #allocation9 [shape = 'u8[8192]{0}', space=vmem, size = 0x2000, scoped, tag = 'input window, operand 7, single buffered']
    #allocation10 [shape = 's32[1]{0}', space=sflag, size = 0x4, scoped, tag = 'scoped memory for tpu_custom_call.1']
    #allocation11 [shape = 'u8[512]{0}', space=vmem, size = 0x400, scoped, tag = 'input window, operand 8, single buffered']
    #allocation12 [shape = 'u8[512]{0}', space=vmem, size = 0x400, scoped, tag = 'input window, operand 9, single buffered']
    #allocation13 [shape = 's32[1]{0}', space=sflag, size = 0x4, scoped, tag = 'scoped memory for tpu_custom_call.1']
    #allocation14 [shape = 'u8[512]{0}', space=vmem, size = 0x400, scoped, tag = 'input window, operand 10, single buffered']
    #allocation15 [shape = 'u8[512]{0}', space=vmem, size = 0x400, scoped, tag = 'input window, operand 12, single buffered']
    #allocation16 [shape = 's32[1]{0}', space=sflag, size = 0x4, scoped, tag = 'scoped memory for tpu_custom_call.1']
    #allocation17 [shape = 'u8[512]{0}', space=vmem, size = 0x400, scoped, tag = 'input window, operand 14, single buffered']
    #allocation18 [shape = 'u8[512]{0}', space=vmem, size = 0x400, scoped, tag = 'input window, operand 15, single buffered']
    #allocation19 [shape = 's32[1]{0}', space=sflag, size = 0x4, scoped, tag = 'scoped memory for tpu_custom_call.1']
    #allocation20 [shape = 'u8[512]{0}', space=vmem, size = 0x400, scoped, tag = 'input window, operand 16, single buffered']
    #allocation21 [shape = 'u8[4096]{0}', space=vmem, size = 0x1000, scoped, tag = 'input window, operand 21, single buffered']
    #allocation22 [shape = 's32[1]{0}', space=sflag, size = 0x4, scoped, tag = 'scoped memory for tpu_custom_call.1']
    #allocation23 [shape = 'u8[8192]{0}', space=vmem, size = 0x2000, scoped, tag = 'output window, operand 0']
    %30 = vsyncpa [#allocation4], 0
    %31 = vsyncpa [#allocation7], 0
    %32 = vsyncpa [#allocation10], 0
    %33 = vsyncpa [#allocation13], 0
    %34 = vsyncpa [#allocation16], 0
    %35 = vsyncpa [#allocation19], 0
    %36 = vsyncpa [#allocation22], 0
    %37 = vsyncpa [#allocation5], 0
    %s38 = scalar_lea.sflag [#allocation5], 1
    %39 = vsyncpa %s38, 0
    loop: start=0, step=1, limit=4
    $region2: #{tpu_custom_call.1} parent=1 // loop_pre_header
      _
    $region3: #{tpu_custom_call.1} parent=1 // loop_header
      %s41 = sphi 0, %s45
      %p42 = scmp.ge.s32.totalorder %s41, 4
      %s51 = sphi 0, %s53
      %s54 = sphi 0, %s51
      %s55 = sphi 0, %s54
      %s71 = sphi 0, %s55
      %s75 = sphi 0, %s75
      %s77 = sphi 0, %s75
      %s78 = sphi 0, %s77
      %s92 = sphi 0, %s78
      %s96 = sphi 0, %s96
      %s98 = sphi 0, %s96
      %s99 = sphi 0, %s98
      %s113 = sphi 0, %s99
      %s117 = sphi 0, %s117
      %s119 = sphi 0, %s117
      %s120 = sphi 0, %s119
      %s134 = sphi 0, %s120
      %s138 = sphi 0, %s138
      %s140 = sphi 0, %s138
      %s141 = sphi 0, %s140
      %s155 = sphi 0, %s141
      %s159 = sphi 0, %s159
      %s161 = sphi 0, %s159
      %s162 = sphi 0, %s161
      %s176 = sphi 0, %s162
      %s180 = sphi 0, %s180
      %s182 = sphi 0, %s180
      %s183 = sphi 0, %s182
      %s197 = sphi 0, %s183
      %s201 = sphi 0, %s201
      %s203 = sphi 0, %s201
      %s204 = sphi 0, %s203
      %s218 = sphi 0, %s204
      %s222 = sphi 0, %s222
      %s224 = sphi 0, %s222
      %s225 = sphi 0, %s224
      %s239 = sphi 0, %s225
      %s243 = sphi 0, %s243
      %s245 = sphi 0, %s243
      %s246 = sphi 0, %s245
      %s260 = sphi 0, %s246
      %s264 = sphi 0, %s264
      %s266 = sphi 0, %s264
      %s267 = sphi 0, %s266
      %s281 = sphi 0, %s267
      %s285 = sphi 0, %s285
      %s287 = sphi 0, %s285
      %s288 = sphi 0, %s287
      %s302 = sphi 0, %s288
      %s306 = sphi 0, %s306
      %s308 = sphi 0, %s306
      %s309 = sphi 0, %s308
      %s323 = sphi 0, %s309
      %s327 = sphi 0, %s327
      %s329 = sphi 0, %s327
      %s330 = sphi 0, %s329
      %s344 = sphi 0, %s330
      %s348 = sphi 0, %s348
      %s350 = sphi 0, %s348
      %s351 = sphi 0, %s350
      %s365 = sphi 0, %s351
      %s369 = sphi 0, %s369
      %s371 = sphi 0, %s369
      %s372 = sphi 0, %s371
      %s386 = sphi 0, %s372
      %s390 = sphi 0, %s390
      %s392 = sphi 0, %s390
      %s393 = sphi 0, %s392
      %s407 = sphi 0, %s393
      %s411 = sphi 0, %s411
      %s413 = sphi 0, %s411
      %s414 = sphi 0, %s413
      %s428 = sphi 0, %s414
      %s432 = sphi 0, %s432
      %s434 = sphi 0, %s432
      %s435 = sphi 0, %s434
      %s449 = sphi 0, %s435
      %s453 = sphi 0, %s453
      %s455 = sphi 0, %s453
      %s456 = sphi 0, %s455
      %s470 = sphi 0, %s456
      %s474 = sphi 0, %s474
      %s476 = sphi 0, %s474
      %s477 = sphi 0, %s476
      %s491 = sphi 0, %s477
      %s495 = sphi 0, %s495
      %s497 = sphi 0, %s495
      %s498 = sphi 0, %s497
      %s512 = sphi 0, %s498
      %s516 = sphi 0, %s516
      %s518 = sphi 0, %s516
      %s519 = sphi 0, %s518
      %s533 = sphi 0, %s519
      %s537 = sphi 0, %s537
      %s539 = sphi 0, %s537
      %s540 = sphi 0, %s539
      %s554 = sphi 0, %s540
      %s558 = sphi 0, %s558
      %s560 = sphi 0, %s558
      %s561 = sphi 0, %s560
      %s575 = sphi 0, %s561
      %s581 = sphi 0, %s583
      %s584 = sphi 0, %s581
      %s585 = sphi 0, %s584
      %s601 = sphi 0, %s585
    $region4: #{tpu_custom_call.1} parent=1 // loop_header_branch
      %44 = sbr.rel (%p42) target = $region8
    $region5: #{tpu_custom_call.1} parent=1 // loop_body
      %s46 = ssub.s32 %s41, 1
      %s47 = ssub.s32 %s41, 2
      %s48 = sadd.s32 %s41, 1
      %s49 = ssub.s32 %s41, %s48
      %p50 = scmp.eq.s32.totalorder %s49, 0
      %s52 = sadd.s32 %s51, 1
      %s53 = scalar_select %p50, %s51, %s52
      %p56 = pneg %p50
      %p57 = scmp.eq.s32.totalorder %s41, 1
      %p58 = por %p56, %p57
      %p59 = scmp.ne.s32.totalorder %s51, %s54
      %p60 = scmp.eq.s32.totalorder %s41, 0
      %p61 = por %p59, %p60
      %p62 = scmp.ne.s32.totalorder %s51, %s54
      %p63 = scmp.eq.s32.totalorder %s46, 1
      %p64 = por %p62, %p63
      %p65 = scmp.ne.s32.totalorder %s54, %s55
      %p66 = scmp.eq.s32.totalorder %s46, 0
      %p67 = por %p65, %p66
      %p68 = scmp.ne.s32.totalorder %s54, %s55
      %p69 = scmp.eq.s32.totalorder %s47, 1
      %p70 = por %p68, %p69
      %p72 = scmp.ne.s32.totalorder %s55, %s71
      %p73 = scmp.eq.s32.totalorder %s47, 0
      %p74 = por %p72, %p73
      %s76 = sadd.s32 %s75, 1
      %p79 = scmp.eq.s32.totalorder %s41, 1
      %p80 = scmp.ne.s32.totalorder %s75, %s77
      %p81 = scmp.eq.s32.totalorder %s41, 0
      %p82 = por %p80, %p81
      %p83 = scmp.ne.s32.totalorder %s75, %s77
      %p84 = scmp.eq.s32.totalorder %s46, 1
      %p85 = por %p83, %p84
      %p86 = scmp.ne.s32.totalorder %s77, %s78
      %p87 = scmp.eq.s32.totalorder %s46, 0
      %p88 = por %p86, %p87
      %p89 = scmp.ne.s32.totalorder %s77, %s78
      %p90 = scmp.eq.s32.totalorder %s47, 1
      %p91 = por %p89, %p90
      %p93 = scmp.ne.s32.totalorder %s78, %s92
      %p94 = scmp.eq.s32.totalorder %s47, 0
      %p95 = por %p93, %p94
      %s97 = sadd.s32 %s96, 1
      %p100 = scmp.eq.s32.totalorder %s41, 1
      %p101 = scmp.ne.s32.totalorder %s96, %s98
      %p102 = scmp.eq.s32.totalorder %s41, 0
      %p103 = por %p101, %p102
      %p104 = scmp.ne.s32.totalorder %s96, %s98
      %p105 = scmp.eq.s32.totalorder %s46, 1
      %p106 = por %p104, %p105
      %p107 = scmp.ne.s32.totalorder %s98, %s99
      %p108 = scmp.eq.s32.totalorder %s46, 0
      %p109 = por %p107, %p108
      %p110 = scmp.ne.s32.totalorder %s98, %s99
      %p111 = scmp.eq.s32.totalorder %s47, 1
      %p112 = por %p110, %p111
      %p114 = scmp.ne.s32.totalorder %s99, %s113
      %p115 = scmp.eq.s32.totalorder %s47, 0
      %p116 = por %p114, %p115
      %s118 = sadd.s32 %s117, 1
      %p121 = scmp.eq.s32.totalorder %s41, 1
      %p122 = scmp.ne.s32.totalorder %s117, %s119
      %p123 = scmp.eq.s32.totalorder %s41, 0
      %p124 = por %p122, %p123
      %p125 = scmp.ne.s32.totalorder %s117, %s119
      %p126 = scmp.eq.s32.totalorder %s46, 1
      %p127 = por %p125, %p126
      %p128 = scmp.ne.s32.totalorder %s119, %s120
      %p129 = scmp.eq.s32.totalorder %s46, 0
      %p130 = por %p128, %p129
      %p131 = scmp.ne.s32.totalorder %s119, %s120
      %p132 = scmp.eq.s32.totalorder %s47, 1
      %p133 = por %p131, %p132
      %p135 = scmp.ne.s32.totalorder %s120, %s134
      %p136 = scmp.eq.s32.totalorder %s47, 0
      %p137 = por %p135, %p136
      %s139 = sadd.s32 %s138, 1
      %p142 = scmp.eq.s32.totalorder %s41, 1
      %p143 = scmp.ne.s32.totalorder %s138, %s140
      %p144 = scmp.eq.s32.totalorder %s41, 0
      %p145 = por %p143, %p144
      %p146 = scmp.ne.s32.totalorder %s138, %s140
      %p147 = scmp.eq.s32.totalorder %s46, 1
      %p148 = por %p146, %p147
      %p149 = scmp.ne.s32.totalorder %s140, %s141
      %p150 = scmp.eq.s32.totalorder %s46, 0
      %p151 = por %p149, %p150
      %p152 = scmp.ne.s32.totalorder %s140, %s141
      %p153 = scmp.eq.s32.totalorder %s47, 1
      %p154 = por %p152, %p153
      %p156 = scmp.ne.s32.totalorder %s141, %s155
      %p157 = scmp.eq.s32.totalorder %s47, 0
      %p158 = por %p156, %p157
      %s160 = sadd.s32 %s159, 1
      %p163 = scmp.eq.s32.totalorder %s41, 1
      %p164 = scmp.ne.s32.totalorder %s159, %s161
      %p165 = scmp.eq.s32.totalorder %s41, 0
      %p166 = por %p164, %p165
      %p167 = scmp.ne.s32.totalorder %s159, %s161
      %p168 = scmp.eq.s32.totalorder %s46, 1
      %p169 = por %p167, %p168
      %p170 = scmp.ne.s32.totalorder %s161, %s162
      %p171 = scmp.eq.s32.totalorder %s46, 0
      %p172 = por %p170, %p171
      %p173 = scmp.ne.s32.totalorder %s161, %s162
      %p174 = scmp.eq.s32.totalorder %s47, 1
      %p175 = por %p173, %p174
      %p177 = scmp.ne.s32.totalorder %s162, %s176
      %p178 = scmp.eq.s32.totalorder %s47, 0
      %p179 = por %p177, %p178
      %s181 = sadd.s32 %s180, 1
      %p184 = scmp.eq.s32.totalorder %s41, 1
      %p185 = scmp.ne.s32.totalorder %s180, %s182
      %p186 = scmp.eq.s32.totalorder %s41, 0
      %p187 = por %p185, %p186
      %p188 = scmp.ne.s32.totalorder %s180, %s182
      %p189 = scmp.eq.s32.totalorder %s46, 1
      %p190 = por %p188, %p189
      %p191 = scmp.ne.s32.totalorder %s182, %s183
      %p192 = scmp.eq.s32.totalorder %s46, 0
      %p193 = por %p191, %p192
      %p194 = scmp.ne.s32.totalorder %s182, %s183
      %p195 = scmp.eq.s32.totalorder %s47, 1
      %p196 = por %p194, %p195
      %p198 = scmp.ne.s32.totalorder %s183, %s197
      %p199 = scmp.eq.s32.totalorder %s47, 0
      %p200 = por %p198, %p199
      %s202 = sadd.s32 %s201, 1
      %p205 = scmp.eq.s32.totalorder %s41, 1
      %p206 = scmp.ne.s32.totalorder %s201, %s203
      %p207 = scmp.eq.s32.totalorder %s41, 0
      %p208 = por %p206, %p207
      %p209 = scmp.ne.s32.totalorder %s201, %s203
      %p210 = scmp.eq.s32.totalorder %s46, 1
      %p211 = por %p209, %p210
      %p212 = scmp.ne.s32.totalorder %s203, %s204
      %p213 = scmp.eq.s32.totalorder %s46, 0
      %p214 = por %p212, %p213
      %p215 = scmp.ne.s32.totalorder %s203, %s204
      %p216 = scmp.eq.s32.totalorder %s47, 1
      %p217 = por %p215, %p216
      %p219 = scmp.ne.s32.totalorder %s204, %s218
      %p220 = scmp.eq.s32.totalorder %s47, 0
      %p221 = por %p219, %p220
      %s223 = sadd.s32 %s222, 1
      %p226 = scmp.eq.s32.totalorder %s41, 1
      %p227 = scmp.ne.s32.totalorder %s222, %s224
      %p228 = scmp.eq.s32.totalorder %s41, 0
      %p229 = por %p227, %p228
      %p230 = scmp.ne.s32.totalorder %s222, %s224
      %p231 = scmp.eq.s32.totalorder %s46, 1
      %p232 = por %p230, %p231
      %p233 = scmp.ne.s32.totalorder %s224, %s225
      %p234 = scmp.eq.s32.totalorder %s46, 0
      %p235 = por %p233, %p234
      %p236 = scmp.ne.s32.totalorder %s224, %s225
      %p237 = scmp.eq.s32.totalorder %s47, 1
      %p238 = por %p236, %p237
      %p240 = scmp.ne.s32.totalorder %s225, %s239
      %p241 = scmp.eq.s32.totalorder %s47, 0
      %p242 = por %p240, %p241
      %s244 = sadd.s32 %s243, 1
      %p247 = scmp.eq.s32.totalorder %s41, 1
      %p248 = scmp.ne.s32.totalorder %s243, %s245
      %p249 = scmp.eq.s32.totalorder %s41, 0
      %p250 = por %p248, %p249
      %p251 = scmp.ne.s32.totalorder %s243, %s245
      %p252 = scmp.eq.s32.totalorder %s46, 1
      %p253 = por %p251, %p252
      %p254 = scmp.ne.s32.totalorder %s245, %s246
      %p255 = scmp.eq.s32.totalorder %s46, 0
      %p256 = por %p254, %p255
      %p257 = scmp.ne.s32.totalorder %s245, %s246
      %p258 = scmp.eq.s32.totalorder %s47, 1
      %p259 = por %p257, %p258
      %p261 = scmp.ne.s32.totalorder %s246, %s260
      %p262 = scmp.eq.s32.totalorder %s47, 0
      %p263 = por %p261, %p262
      %s265 = sadd.s32 %s264, 1
      %p268 = scmp.eq.s32.totalorder %s41, 1
      %p269 = scmp.ne.s32.totalorder %s264, %s266
      %p270 = scmp.eq.s32.totalorder %s41, 0
      %p271 = por %p269, %p270
      %p272 = scmp.ne.s32.totalorder %s264, %s266
      %p273 = scmp.eq.s32.totalorder %s46, 1
      %p274 = por %p272, %p273
      %p275 = scmp.ne.s32.totalorder %s266, %s267
      %p276 = scmp.eq.s32.totalorder %s46, 0
      %p277 = por %p275, %p276
      %p278 = scmp.ne.s32.totalorder %s266, %s267
      %p279 = scmp.eq.s32.totalorder %s47, 1
      %p280 = por %p278, %p279
      %p282 = scmp.ne.s32.totalorder %s267, %s281
      %p283 = scmp.eq.s32.totalorder %s47, 0
      %p284 = por %p282, %p283
      %s286 = sadd.s32 %s285, 1
      %p289 = scmp.eq.s32.totalorder %s41, 1
      %p290 = scmp.ne.s32.totalorder %s285, %s287
      %p291 = scmp.eq.s32.totalorder %s41, 0
      %p292 = por %p290, %p291
      %p293 = scmp.ne.s32.totalorder %s285, %s287
      %p294 = scmp.eq.s32.totalorder %s46, 1
      %p295 = por %p293, %p294
      %p296 = scmp.ne.s32.totalorder %s287, %s288
      %p297 = scmp.eq.s32.totalorder %s46, 0
      %p298 = por %p296, %p297
      %p299 = scmp.ne.s32.totalorder %s287, %s288
      %p300 = scmp.eq.s32.totalorder %s47, 1
      %p301 = por %p299, %p300
      %p303 = scmp.ne.s32.totalorder %s288, %s302
      %p304 = scmp.eq.s32.totalorder %s47, 0
      %p305 = por %p303, %p304
      %s307 = sadd.s32 %s306, 1
      %p310 = scmp.eq.s32.totalorder %s41, 1
      %p311 = scmp.ne.s32.totalorder %s306, %s308
      %p312 = scmp.eq.s32.totalorder %s41, 0
      %p313 = por %p311, %p312
      %p314 = scmp.ne.s32.totalorder %s306, %s308
      %p315 = scmp.eq.s32.totalorder %s46, 1
      %p316 = por %p314, %p315
      %p317 = scmp.ne.s32.totalorder %s308, %s309
      %p318 = scmp.eq.s32.totalorder %s46, 0
      %p319 = por %p317, %p318
      %p320 = scmp.ne.s32.totalorder %s308, %s309
      %p321 = scmp.eq.s32.totalorder %s47, 1
      %p322 = por %p320, %p321
      %p324 = scmp.ne.s32.totalorder %s309, %s323
      %p325 = scmp.eq.s32.totalorder %s47, 0
      %p326 = por %p324, %p325
      %s328 = sadd.s32 %s327, 1
      %p331 = scmp.eq.s32.totalorder %s41, 1
      %p332 = scmp.ne.s32.totalorder %s327, %s329
      %p333 = scmp.eq.s32.totalorder %s41, 0
      %p334 = por %p332, %p333
      %p335 = scmp.ne.s32.totalorder %s327, %s329
      %p336 = scmp.eq.s32.totalorder %s46, 1
      %p337 = por %p335, %p336
      %p338 = scmp.ne.s32.totalorder %s329, %s330
      %p339 = scmp.eq.s32.totalorder %s46, 0
      %p340 = por %p338, %p339
      %p341 = scmp.ne.s32.totalorder %s329, %s330
      %p342 = scmp.eq.s32.totalorder %s47, 1
      %p343 = por %p341, %p342
      %p345 = scmp.ne.s32.totalorder %s330, %s344
      %p346 = scmp.eq.s32.totalorder %s47, 0
      %p347 = por %p345, %p346
      %s349 = sadd.s32 %s348, 1
      %p352 = scmp.eq.s32.totalorder %s41, 1
      %p353 = scmp.ne.s32.totalorder %s348, %s350
      %p354 = scmp.eq.s32.totalorder %s41, 0
      %p355 = por %p353, %p354
      %p356 = scmp.ne.s32.totalorder %s348, %s350
      %p357 = scmp.eq.s32.totalorder %s46, 1
      %p358 = por %p356, %p357
      %p359 = scmp.ne.s32.totalorder %s350, %s351
      %p360 = scmp.eq.s32.totalorder %s46, 0
      %p361 = por %p359, %p360
      %p362 = scmp.ne.s32.totalorder %s350, %s351
      %p363 = scmp.eq.s32.totalorder %s47, 1
      %p364 = por %p362, %p363
      %p366 = scmp.ne.s32.totalorder %s351, %s365
      %p367 = scmp.eq.s32.totalorder %s47, 0
      %p368 = por %p366, %p367
      %s370 = sadd.s32 %s369, 1
      %p373 = scmp.eq.s32.totalorder %s41, 1
      %p374 = scmp.ne.s32.totalorder %s369, %s371
      %p375 = scmp.eq.s32.totalorder %s41, 0
      %p376 = por %p374, %p375
      %p377 = scmp.ne.s32.totalorder %s369, %s371
      %p378 = scmp.eq.s32.totalorder %s46, 1
      %p379 = por %p377, %p378
      %p380 = scmp.ne.s32.totalorder %s371, %s372
      %p381 = scmp.eq.s32.totalorder %s46, 0
      %p382 = por %p380, %p381
      %p383 = scmp.ne.s32.totalorder %s371, %s372
      %p384 = scmp.eq.s32.totalorder %s47, 1
      %p385 = por %p383, %p384
      %p387 = scmp.ne.s32.totalorder %s372, %s386
      %p388 = scmp.eq.s32.totalorder %s47, 0
      %p389 = por %p387, %p388
      %s391 = sadd.s32 %s390, 1
      %p394 = scmp.eq.s32.totalorder %s41, 1
      %p395 = scmp.ne.s32.totalorder %s390, %s392
      %p396 = scmp.eq.s32.totalorder %s41, 0
      %p397 = por %p395, %p396
      %p398 = scmp.ne.s32.totalorder %s390, %s392
      %p399 = scmp.eq.s32.totalorder %s46, 1
      %p400 = por %p398, %p399
      %p401 = scmp.ne.s32.totalorder %s392, %s393
      %p402 = scmp.eq.s32.totalorder %s46, 0
      %p403 = por %p401, %p402
      %p404 = scmp.ne.s32.totalorder %s392, %s393
      %p405 = scmp.eq.s32.totalorder %s47, 1
      %p406 = por %p404, %p405
      %p408 = scmp.ne.s32.totalorder %s393, %s407
      %p409 = scmp.eq.s32.totalorder %s47, 0
      %p410 = por %p408, %p409
      %s412 = sadd.s32 %s411, 1
      %p415 = scmp.eq.s32.totalorder %s41, 1
      %p416 = scmp.ne.s32.totalorder %s411, %s413
      %p417 = scmp.eq.s32.totalorder %s41, 0
      %p418 = por %p416, %p417
      %p419 = scmp.ne.s32.totalorder %s411, %s413
      %p420 = scmp.eq.s32.totalorder %s46, 1
      %p421 = por %p419, %p420
      %p422 = scmp.ne.s32.totalorder %s413, %s414
      %p423 = scmp.eq.s32.totalorder %s46, 0
      %p424 = por %p422, %p423
      %p425 = scmp.ne.s32.totalorder %s413, %s414
      %p426 = scmp.eq.s32.totalorder %s47, 1
      %p427 = por %p425, %p426
      %p429 = scmp.ne.s32.totalorder %s414, %s428
      %p430 = scmp.eq.s32.totalorder %s47, 0
      %p431 = por %p429, %p430
      %s433 = sadd.s32 %s432, 1
      %p436 = scmp.eq.s32.totalorder %s41, 1
      %p437 = scmp.ne.s32.totalorder %s432, %s434
      %p438 = scmp.eq.s32.totalorder %s41, 0
      %p439 = por %p437, %p438
      %p440 = scmp.ne.s32.totalorder %s432, %s434
      %p441 = scmp.eq.s32.totalorder %s46, 1
      %p442 = por %p440, %p441
      %p443 = scmp.ne.s32.totalorder %s434, %s435
      %p444 = scmp.eq.s32.totalorder %s46, 0
      %p445 = por %p443, %p444
      %p446 = scmp.ne.s32.totalorder %s434, %s435
      %p447 = scmp.eq.s32.totalorder %s47, 1
      %p448 = por %p446, %p447
      %p450 = scmp.ne.s32.totalorder %s435, %s449
      %p451 = scmp.eq.s32.totalorder %s47, 0
      %p452 = por %p450, %p451
      %s454 = sadd.s32 %s453, 1
      %p457 = scmp.eq.s32.totalorder %s41, 1
      %p458 = scmp.ne.s32.totalorder %s453, %s455
      %p459 = scmp.eq.s32.totalorder %s41, 0
      %p460 = por %p458, %p459
      %p461 = scmp.ne.s32.totalorder %s453, %s455
      %p462 = scmp.eq.s32.totalorder %s46, 1
      %p463 = por %p461, %p462
      %p464 = scmp.ne.s32.totalorder %s455, %s456
      %p465 = scmp.eq.s32.totalorder %s46, 0
      %p466 = por %p464, %p465
      %p467 = scmp.ne.s32.totalorder %s455, %s456
      %p468 = scmp.eq.s32.totalorder %s47, 1
      %p469 = por %p467, %p468
      %p471 = scmp.ne.s32.totalorder %s456, %s470
      %p472 = scmp.eq.s32.totalorder %s47, 0
      %p473 = por %p471, %p472
      %s475 = sadd.s32 %s474, 1
      %p478 = scmp.eq.s32.totalorder %s41, 1
      %p479 = scmp.ne.s32.totalorder %s474, %s476
      %p480 = scmp.eq.s32.totalorder %s41, 0
      %p481 = por %p479, %p480
      %p482 = scmp.ne.s32.totalorder %s474, %s476
      %p483 = scmp.eq.s32.totalorder %s46, 1
      %p484 = por %p482, %p483
      %p485 = scmp.ne.s32.totalorder %s476, %s477
      %p486 = scmp.eq.s32.totalorder %s46, 0
      %p487 = por %p485, %p486
      %p488 = scmp.ne.s32.totalorder %s476, %s477
      %p489 = scmp.eq.s32.totalorder %s47, 1
      %p490 = por %p488, %p489
      %p492 = scmp.ne.s32.totalorder %s477, %s491
      %p493 = scmp.eq.s32.totalorder %s47, 0
      %p494 = por %p492, %p493
      %s496 = sadd.s32 %s495, 1
      %p499 = scmp.eq.s32.totalorder %s41, 1
      %p500 = scmp.ne.s32.totalorder %s495, %s497
      %p501 = scmp.eq.s32.totalorder %s41, 0
      %p502 = por %p500, %p501
      %p503 = scmp.ne.s32.totalorder %s495, %s497
      %p504 = scmp.eq.s32.totalorder %s46, 1
      %p505 = por %p503, %p504
      %p506 = scmp.ne.s32.totalorder %s497, %s498
      %p507 = scmp.eq.s32.totalorder %s46, 0
      %p508 = por %p506, %p507
      %p509 = scmp.ne.s32.totalorder %s497, %s498
      %p510 = scmp.eq.s32.totalorder %s47, 1
      %p511 = por %p509, %p510
      %p513 = scmp.ne.s32.totalorder %s498, %s512
      %p514 = scmp.eq.s32.totalorder %s47, 0
      %p515 = por %p513, %p514
      %s517 = sadd.s32 %s516, 1
      %p520 = scmp.eq.s32.totalorder %s41, 1
      %p521 = scmp.ne.s32.totalorder %s516, %s518
      %p522 = scmp.eq.s32.totalorder %s41, 0
      %p523 = por %p521, %p522
      %p524 = scmp.ne.s32.totalorder %s516, %s518
      %p525 = scmp.eq.s32.totalorder %s46, 1
      %p526 = por %p524, %p525
      %p527 = scmp.ne.s32.totalorder %s518, %s519
      %p528 = scmp.eq.s32.totalorder %s46, 0
      %p529 = por %p527, %p528
      %p530 = scmp.ne.s32.totalorder %s518, %s519
      %p531 = scmp.eq.s32.totalorder %s47, 1
      %p532 = por %p530, %p531
      %p534 = scmp.ne.s32.totalorder %s519, %s533
      %p535 = scmp.eq.s32.totalorder %s47, 0
      %p536 = por %p534, %p535
      %s538 = sadd.s32 %s537, 1
      %p541 = scmp.eq.s32.totalorder %s41, 1
      %p542 = scmp.ne.s32.totalorder %s537, %s539
      %p543 = scmp.eq.s32.totalorder %s41, 0
      %p544 = por %p542, %p543
      %p545 = scmp.ne.s32.totalorder %s537, %s539
      %p546 = scmp.eq.s32.totalorder %s46, 1
      %p547 = por %p545, %p546
      %p548 = scmp.ne.s32.totalorder %s539, %s540
      %p549 = scmp.eq.s32.totalorder %s46, 0
      %p550 = por %p548, %p549
      %p551 = scmp.ne.s32.totalorder %s539, %s540
      %p552 = scmp.eq.s32.totalorder %s47, 1
      %p553 = por %p551, %p552
      %p555 = scmp.ne.s32.totalorder %s540, %s554
      %p556 = scmp.eq.s32.totalorder %s47, 0
      %p557 = por %p555, %p556
      %s559 = sadd.s32 %s558, 1
      %p562 = scmp.eq.s32.totalorder %s41, 1
      %p563 = scmp.ne.s32.totalorder %s558, %s560
      %p564 = scmp.eq.s32.totalorder %s41, 0
      %p565 = por %p563, %p564
      %p566 = scmp.ne.s32.totalorder %s558, %s560
      %p567 = scmp.eq.s32.totalorder %s46, 1
      %p568 = por %p566, %p567
      %p569 = scmp.ne.s32.totalorder %s560, %s561
      %p570 = scmp.eq.s32.totalorder %s46, 0
      %p571 = por %p569, %p570
      %p572 = scmp.ne.s32.totalorder %s560, %s561
      %p573 = scmp.eq.s32.totalorder %s47, 1
      %p574 = por %p572, %p573
      %p576 = scmp.ne.s32.totalorder %s561, %s575
      %p577 = scmp.eq.s32.totalorder %s47, 0
      %p578 = por %p576, %p577
      %s579 = ssub.s32 %s41, %s48
      %p580 = scmp.eq.s32.totalorder %s579, 0
      %s582 = sadd.s32 %s581, 1
      %s583 = scalar_select %p580, %s581, %s582
      %p586 = pneg %p580
      %p587 = scmp.eq.s32.totalorder %s41, 1
      %p588 = por %p586, %p587
      %p589 = scmp.ne.s32.totalorder %s581, %s584
      %p590 = scmp.eq.s32.totalorder %s41, 0
      %p591 = por %p589, %p590
      %p592 = scmp.ne.s32.totalorder %s581, %s584
      %p593 = scmp.eq.s32.totalorder %s46, 1
      %p594 = por %p592, %p593
      %p595 = scmp.ne.s32.totalorder %s584, %s585
      %p596 = scmp.eq.s32.totalorder %s46, 0
      %p597 = por %p595, %p596
      %p598 = scmp.ne.s32.totalorder %s584, %s585
      %p599 = scmp.eq.s32.totalorder %s47, 1
      %p600 = por %p598, %p599
      %p602 = scmp.ne.s32.totalorder %s585, %s601
      %p603 = scmp.eq.s32.totalorder %s47, 0
      %p604 = por %p602, %p603
      %p605 = scmp.le.s32.totalorder 1, %s41
      %p606 = scmp.lt.s32.totalorder %s41, 3
      %p607 = pnand %p605, %p606
      %p608 = pneg %p607
      // Predicated region
      $region9: #{tpu_custom_call.1} parent=5 // pred_check
        _
      $region10: #{tpu_custom_call.1} parent=5 // pred_check_branch
        %610 = sbr.rel (%p607) target = $region12
      $region11: #{tpu_custom_call.1} parent=5 // pred_region
        %s611 = ssub.s32 %s41, 1
        // Predicated region
        $region13: #{tpu_custom_call.1} parent=11 // pred_check
          %p612 = pneg %p88
        $region14: #{tpu_custom_call.1} parent=11 // pred_check_branch
          %614 = sbr.rel (%p612) target = $region16
        $region15: #{tpu_custom_call.1} parent=11 // pred_region
          _
        $region16: #{tpu_custom_call.1} parent=11 // pred_fallthru
          _
        // Predicated region
        $region17: #{tpu_custom_call.1} parent=11 // pred_check
          %p615 = pneg %p109
        $region18: #{tpu_custom_call.1} parent=11 // pred_check_branch
          %617 = sbr.rel (%p615) target = $region20
        $region19: #{tpu_custom_call.1} parent=11 // pred_region
          %619 = vsyncadd [#allocation4], 0
          %s621 = sshll.u32 %s2, 4
          %s622 = int_to_ptr.hbm [resolvable:$true] %s621
          %s623 = sshll.u32 [#allocation3], 4
          %s624 = int_to_ptr.vmem [resolvable:$true] %s623
          %626 = dma.hbm_to_vmem [thread:$0]  %s622, 16, %s624, [#allocation4]
        $region20: #{tpu_custom_call.1} parent=11 // pred_fallthru
          _
        // Predicated region
        $region21: #{tpu_custom_call.1} parent=11 // pred_check
          %p627 = pneg %p130
        $region22: #{tpu_custom_call.1} parent=11 // pred_check_branch
          %629 = sbr.rel (%p627) target = $region24
        $region23: #{tpu_custom_call.1} parent=11 // pred_region
          _
        $region24: #{tpu_custom_call.1} parent=11 // pred_fallthru
          _
        // Predicated region
        $region25: #{tpu_custom_call.1} parent=11 // pred_check
          %p630 = pneg %p151
        $region26: #{tpu_custom_call.1} parent=11 // pred_check_branch
          %632 = sbr.rel (%p630) target = $region28
        $region27: #{tpu_custom_call.1} parent=11 // pred_region
          %634 = vsyncadd [#allocation7], 0
          %s636 = sshll.u32 %s4, 4
          %s637 = int_to_ptr.hbm [resolvable:$true] %s636
          %s638 = sshll.u32 [#allocation6], 4
          %s639 = int_to_ptr.vmem [resolvable:$true] %s638
          %641 = dma.hbm_to_vmem [thread:$0]  %s637, 16, %s639, [#allocation7]
        $region28: #{tpu_custom_call.1} parent=11 // pred_fallthru
          _
        // Predicated region
        $region29: #{tpu_custom_call.1} parent=11 // pred_check
          %p642 = pneg %p172
        $region30: #{tpu_custom_call.1} parent=11 // pred_check_branch
          %644 = sbr.rel (%p642) target = $region32
        $region31: #{tpu_custom_call.1} parent=11 // pred_region
          _
        $region32: #{tpu_custom_call.1} parent=11 // pred_fallthru
          _
        // Predicated region
        $region33: #{tpu_custom_call.1} parent=11 // pred_check
          %p645 = pneg %p193
        $region34: #{tpu_custom_call.1} parent=11 // pred_check_branch
          %647 = sbr.rel (%p645) target = $region36
        $region35: #{tpu_custom_call.1} parent=11 // pred_region
          %649 = vsyncadd [#allocation7], 0
          %s651 = sshll.u32 %s6, 4
          %s652 = int_to_ptr.hbm [resolvable:$true] %s651
          %s653 = sshll.u32 [#allocation8], 4
          %s654 = int_to_ptr.vmem [resolvable:$true] %s653
          %656 = dma.hbm_to_vmem [thread:$0]  %s652, 16, %s654, [#allocation7]
        $region36: #{tpu_custom_call.1} parent=11 // pred_fallthru
          _
        // Predicated region
        $region37: #{tpu_custom_call.1} parent=11 // pred_check
          %p657 = pneg %p214
        $region38: #{tpu_custom_call.1} parent=11 // pred_check_branch
          %659 = sbr.rel (%p657) target = $region40
        $region39: #{tpu_custom_call.1} parent=11 // pred_region
          %661 = vsyncadd [#allocation10], 0
          %s662 = sshll.u32 %s7, 4
          %s663 = int_to_ptr.hbm [resolvable:$true] %s662
          %s664 = sshll.u32 [#allocation9], 4
          %s665 = int_to_ptr.vmem [resolvable:$true] %s664
          %670 = dma.hbm_to_vmem [thread:$0]  %s663, 256, %s665, [#allocation10], 64, 64, 4
        $region40: #{tpu_custom_call.1} parent=11 // pred_fallthru
          _
        // Predicated region
        $region41: #{tpu_custom_call.1} parent=11 // pred_check
          %p671 = pneg %p235
        $region42: #{tpu_custom_call.1} parent=11 // pred_check_branch
          %673 = sbr.rel (%p671) target = $region44
        $region43: #{tpu_custom_call.1} parent=11 // pred_region
          %675 = vsyncadd [#allocation10], 0
          %s677 = sshll.u32 %s8, 4
          %s678 = int_to_ptr.hbm [resolvable:$true] %s677
          %s679 = sshll.u32 [#allocation11], 4
          %s680 = int_to_ptr.vmem [resolvable:$true] %s679
          %682 = dma.hbm_to_vmem [thread:$0]  %s678, 16, %s680, [#allocation10]
        $region44: #{tpu_custom_call.1} parent=11 // pred_fallthru
          _
        // Predicated region
        $region45: #{tpu_custom_call.1} parent=11 // pred_check
          %p683 = pneg %p256
        $region46: #{tpu_custom_call.1} parent=11 // pred_check_branch
          %685 = sbr.rel (%p683) target = $region48
        $region47: #{tpu_custom_call.1} parent=11 // pred_region
          %687 = vsyncadd [#allocation13], 0
          %s689 = sshll.u32 %s9, 4
          %s690 = int_to_ptr.hbm [resolvable:$true] %s689
          %s691 = sshll.u32 [#allocation12], 4
          %s692 = int_to_ptr.vmem [resolvable:$true] %s691
          %694 = dma.hbm_to_vmem [thread:$0]  %s690, 16, %s692, [#allocation13]
        $region48: #{tpu_custom_call.1} parent=11 // pred_fallthru
          _
        // Predicated region
        $region49: #{tpu_custom_call.1} parent=11 // pred_check
          %p695 = pneg %p277
        $region50: #{tpu_custom_call.1} parent=11 // pred_check_branch
          %697 = sbr.rel (%p695) target = $region52
        $region51: #{tpu_custom_call.1} parent=11 // pred_region
          %699 = vsyncadd [#allocation13], 0
          %s701 = sshll.u32 %s10, 4
          %s702 = int_to_ptr.hbm [resolvable:$true] %s701
          %s703 = sshll.u32 [#allocation14], 4
          %s704 = int_to_ptr.vmem [resolvable:$true] %s703
          %706 = dma.hbm_to_vmem [thread:$0]  %s702, 16, %s704, [#allocation13]
        $region52: #{tpu_custom_call.1} parent=11 // pred_fallthru
          _
        // Predicated region
        $region53: #{tpu_custom_call.1} parent=11 // pred_check
          %p707 = pneg %p298
        $region54: #{tpu_custom_call.1} parent=11 // pred_check_branch
          %709 = sbr.rel (%p707) target = $region56
        $region55: #{tpu_custom_call.1} parent=11 // pred_region
          _
        $region56: #{tpu_custom_call.1} parent=11 // pred_fallthru
          _
        // Predicated region
        $region57: #{tpu_custom_call.1} parent=11 // pred_check
          %p710 = pneg %p319
        $region58: #{tpu_custom_call.1} parent=11 // pred_check_branch
          %712 = sbr.rel (%p710) target = $region60
        $region59: #{tpu_custom_call.1} parent=11 // pred_region
          %714 = vsyncadd [#allocation16], 0
          %s716 = sshll.u32 %s12, 4
          %s717 = int_to_ptr.hbm [resolvable:$true] %s716
          %s718 = sshll.u32 [#allocation15], 4
          %s719 = int_to_ptr.vmem [resolvable:$true] %s718
          %721 = dma.hbm_to_vmem [thread:$0]  %s717, 16, %s719, [#allocation16]
        $region60: #{tpu_custom_call.1} parent=11 // pred_fallthru
          _
        // Predicated region
        $region61: #{tpu_custom_call.1} parent=11 // pred_check
          %p722 = pneg %p340
        $region62: #{tpu_custom_call.1} parent=11 // pred_check_branch
          %724 = sbr.rel (%p722) target = $region64
        $region63: #{tpu_custom_call.1} parent=11 // pred_region
          _
        $region64: #{tpu_custom_call.1} parent=11 // pred_fallthru
          _
        // Predicated region
        $region65: #{tpu_custom_call.1} parent=11 // pred_check
          %p725 = pneg %p361
        $region66: #{tpu_custom_call.1} parent=11 // pred_check_branch
          %727 = sbr.rel (%p725) target = $region68
        $region67: #{tpu_custom_call.1} parent=11 // pred_region
          %729 = vsyncadd [#allocation16], 0
          %s731 = sshll.u32 %s14, 4
          %s732 = int_to_ptr.hbm [resolvable:$true] %s731
          %s733 = sshll.u32 [#allocation17], 4
          %s734 = int_to_ptr.vmem [resolvable:$true] %s733
          %736 = dma.hbm_to_vmem [thread:$0]  %s732, 16, %s734, [#allocation16]
        $region68: #{tpu_custom_call.1} parent=11 // pred_fallthru
          _
        // Predicated region
        $region69: #{tpu_custom_call.1} parent=11 // pred_check
          %p737 = pneg %p382
        $region70: #{tpu_custom_call.1} parent=11 // pred_check_branch
          %739 = sbr.rel (%p737) target = $region72
        $region71: #{tpu_custom_call.1} parent=11 // pred_region
          %741 = vsyncadd [#allocation19], 0
          %s743 = sshll.u32 %s15, 4
          %s744 = int_to_ptr.hbm [resolvable:$true] %s743
          %s745 = sshll.u32 [#allocation18], 4
          %s746 = int_to_ptr.vmem [resolvable:$true] %s745
          %748 = dma.hbm_to_vmem [thread:$0]  %s744, 16, %s746, [#allocation19]
        $region72: #{tpu_custom_call.1} parent=11 // pred_fallthru
          _
        // Predicated region
        $region73: #{tpu_custom_call.1} parent=11 // pred_check
          %p749 = pneg %p403
        $region74: #{tpu_custom_call.1} parent=11 // pred_check_branch
          %751 = sbr.rel (%p749) target = $region76
        $region75: #{tpu_custom_call.1} parent=11 // pred_region
          %753 = vsyncadd [#allocation19], 0
          %s755 = sshll.u32 %s16, 4
          %s756 = int_to_ptr.hbm [resolvable:$true] %s755
          %s757 = sshll.u32 [#allocation20], 4
          %s758 = int_to_ptr.vmem [resolvable:$true] %s757
          %760 = dma.hbm_to_vmem [thread:$0]  %s756, 16, %s758, [#allocation19]
        $region76: #{tpu_custom_call.1} parent=11 // pred_fallthru
          _
        // Predicated region
        $region77: #{tpu_custom_call.1} parent=11 // pred_check
          %p761 = pneg %p424
        $region78: #{tpu_custom_call.1} parent=11 // pred_check_branch
          %763 = sbr.rel (%p761) target = $region80
        $region79: #{tpu_custom_call.1} parent=11 // pred_region
          _
        $region80: #{tpu_custom_call.1} parent=11 // pred_fallthru
          _
        // Predicated region
        $region81: #{tpu_custom_call.1} parent=11 // pred_check
          %p764 = pneg %p445
        $region82: #{tpu_custom_call.1} parent=11 // pred_check_branch
          %766 = sbr.rel (%p764) target = $region84
        $region83: #{tpu_custom_call.1} parent=11 // pred_region
          _
        $region84: #{tpu_custom_call.1} parent=11 // pred_fallthru
          _
        // Predicated region
        $region85: #{tpu_custom_call.1} parent=11 // pred_check
          %p767 = pneg %p466
        $region86: #{tpu_custom_call.1} parent=11 // pred_check_branch
          %769 = sbr.rel (%p767) target = $region88
        $region87: #{tpu_custom_call.1} parent=11 // pred_region
          _
        $region88: #{tpu_custom_call.1} parent=11 // pred_fallthru
          _
        // Predicated region
        $region89: #{tpu_custom_call.1} parent=11 // pred_check
          %p770 = pneg %p487
        $region90: #{tpu_custom_call.1} parent=11 // pred_check_branch
          %772 = sbr.rel (%p770) target = $region92
        $region91: #{tpu_custom_call.1} parent=11 // pred_region
          _
        $region92: #{tpu_custom_call.1} parent=11 // pred_fallthru
          _
        // Predicated region
        $region93: #{tpu_custom_call.1} parent=11 // pred_check
          %p773 = pneg %p508
        $region94: #{tpu_custom_call.1} parent=11 // pred_check_branch
          %775 = sbr.rel (%p773) target = $region96
        $region95: #{tpu_custom_call.1} parent=11 // pred_region
          %777 = vsyncadd [#allocation22], 0
          %s778 = sshll.u32 %s21, 4
          %s779 = int_to_ptr.hbm [resolvable:$true] %s778
          %s780 = sshll.u32 [#allocation21], 4
          %s781 = int_to_ptr.vmem [resolvable:$true] %s780
          %786 = dma.hbm_to_vmem [thread:$0]  %s779, 128, %s781, [#allocation22], 64, 64, 4
        $region96: #{tpu_custom_call.1} parent=11 // pred_fallthru
          _
        // Predicated region
        $region97: #{tpu_custom_call.1} parent=11 // pred_check
          %p787 = pneg %p529
        $region98: #{tpu_custom_call.1} parent=11 // pred_check_branch
          %789 = sbr.rel (%p787) target = $region100
        $region99: #{tpu_custom_call.1} parent=11 // pred_region
          _
        $region100: #{tpu_custom_call.1} parent=11 // pred_fallthru
          _
        // Predicated region
        $region101: #{tpu_custom_call.1} parent=11 // pred_check
          %p790 = pneg %p550
        $region102: #{tpu_custom_call.1} parent=11 // pred_check_branch
          %792 = sbr.rel (%p790) target = $region104
        $region103: #{tpu_custom_call.1} parent=11 // pred_region
          _
        $region104: #{tpu_custom_call.1} parent=11 // pred_fallthru
          _
        // Predicated region
        $region105: #{tpu_custom_call.1} parent=11 // pred_check
          %p793 = pneg %p571
        $region106: #{tpu_custom_call.1} parent=11 // pred_check_branch
          %795 = sbr.rel (%p793) target = $region108
        $region107: #{tpu_custom_call.1} parent=11 // pred_region
          _
        $region108: #{tpu_custom_call.1} parent=11 // pred_fallthru
          _
      $region12: #{tpu_custom_call.1} parent=5 // pred_fallthru
        _
      %p796 = scmp.lt.s32.totalorder %s41, 2
      // Predicated region
      $region109: #{tpu_custom_call.1} parent=5 // pred_check
        %p797 = pneg %p796
      $region110: #{tpu_custom_call.1} parent=5 // pred_check_branch
        %799 = sbr.rel (%p797) target = $region112
      $region111: #{tpu_custom_call.1} parent=5 // pred_region
        // Predicated region
        $region113: #{tpu_custom_call.1} parent=111 // pred_check
          %p800 = pneg %p61
        $region114: #{tpu_custom_call.1} parent=111 // pred_check_branch
          %802 = sbr.rel (%p800) target = $region116
        $region115: #{tpu_custom_call.1} parent=111 // pred_region
          %p803 = scmp.lt.s32.totalorder %s41, 1
          %s804 = scalar_select %p803, %s41, 1
          %s805 = smul.addr %s804, 8
          %s806 = scalar_lea.vmem %s0, %s805
        $region116: #{tpu_custom_call.1} parent=111 // pred_fallthru
          _
      $region112: #{tpu_custom_call.1} parent=5 // pred_fallthru
        _
      %p807 = scmp.le.s32.totalorder 1, %s41
      %p808 = scmp.lt.s32.totalorder %s41, 3
      %p809 = pnand %p807, %p808
      %p810 = pneg %p809
      // Predicated region
      $region117: #{tpu_custom_call.1} parent=5 // pred_check
        _
      $region118: #{tpu_custom_call.1} parent=5 // pred_check_branch
        %812 = sbr.rel (%p809) target = $region120
      $region119: #{tpu_custom_call.1} parent=5 // pred_region
        %s813 = ssub.s32 %s41, 1
        // Predicated region
        $region121: #{tpu_custom_call.1} parent=119 // pred_check
          %p814 = pneg %p109
        $region122: #{tpu_custom_call.1} parent=119 // pred_check_branch
          %816 = sbr.rel (%p814) target = $region124
        $region123: #{tpu_custom_call.1} parent=119 // pred_region
          %818 = dma.done [#allocation4], 16
        $region124: #{tpu_custom_call.1} parent=119 // pred_fallthru
          _
        // Predicated region
        $region125: #{tpu_custom_call.1} parent=119 // pred_check
          %p819 = pneg %p151
        $region126: #{tpu_custom_call.1} parent=119 // pred_check_branch
          %821 = sbr.rel (%p819) target = $region128
        $region127: #{tpu_custom_call.1} parent=119 // pred_region
          %823 = dma.done [#allocation7], 16
        $region128: #{tpu_custom_call.1} parent=119 // pred_fallthru
          _
        // Predicated region
        $region129: #{tpu_custom_call.1} parent=119 // pred_check
          %p824 = pneg %p193
        $region130: #{tpu_custom_call.1} parent=119 // pred_check_branch
          %826 = sbr.rel (%p824) target = $region132
        $region131: #{tpu_custom_call.1} parent=119 // pred_region
          %828 = dma.done [#allocation7], 16
        $region132: #{tpu_custom_call.1} parent=119 // pred_fallthru
          _
        // Predicated region
        $region133: #{tpu_custom_call.1} parent=119 // pred_check
          %p829 = pneg %p214
        $region134: #{tpu_custom_call.1} parent=119 // pred_check_branch
          %831 = sbr.rel (%p829) target = $region136
        $region135: #{tpu_custom_call.1} parent=119 // pred_region
          %833 = dma.done [#allocation10], 256
        $region136: #{tpu_custom_call.1} parent=119 // pred_fallthru
          _
        // Predicated region
        $region137: #{tpu_custom_call.1} parent=119 // pred_check
          %p834 = pneg %p235
        $region138: #{tpu_custom_call.1} parent=119 // pred_check_branch
          %836 = sbr.rel (%p834) target = $region140
        $region139: #{tpu_custom_call.1} parent=119 // pred_region
          %838 = dma.done [#allocation10], 16
        $region140: #{tpu_custom_call.1} parent=119 // pred_fallthru
          _
        // Predicated region
        $region141: #{tpu_custom_call.1} parent=119 // pred_check
          %p839 = pneg %p256
        $region142: #{tpu_custom_call.1} parent=119 // pred_check_branch
          %841 = sbr.rel (%p839) target = $region144
        $region143: #{tpu_custom_call.1} parent=119 // pred_region
          %843 = dma.done [#allocation13], 16
        $region144: #{tpu_custom_call.1} parent=119 // pred_fallthru
          _
        // Predicated region
        $region145: #{tpu_custom_call.1} parent=119 // pred_check
          %p844 = pneg %p277
        $region146: #{tpu_custom_call.1} parent=119 // pred_check_branch
          %846 = sbr.rel (%p844) target = $region148
        $region147: #{tpu_custom_call.1} parent=119 // pred_region
          %848 = dma.done [#allocation13], 16
        $region148: #{tpu_custom_call.1} parent=119 // pred_fallthru
          _
        // Predicated region
        $region149: #{tpu_custom_call.1} parent=119 // pred_check
          %p849 = pneg %p319
        $region150: #{tpu_custom_call.1} parent=119 // pred_check_branch
          %851 = sbr.rel (%p849) target = $region152
        $region151: #{tpu_custom_call.1} parent=119 // pred_region
          %853 = dma.done [#allocation16], 16
        $region152: #{tpu_custom_call.1} parent=119 // pred_fallthru
          _
        // Predicated region
        $region153: #{tpu_custom_call.1} parent=119 // pred_check
          %p854 = pneg %p361
        $region154: #{tpu_custom_call.1} parent=119 // pred_check_branch
          %856 = sbr.rel (%p854) target = $region156
        $region155: #{tpu_custom_call.1} parent=119 // pred_region
          %858 = dma.done [#allocation16], 16
        $region156: #{tpu_custom_call.1} parent=119 // pred_fallthru
          _
        // Predicated region
        $region157: #{tpu_custom_call.1} parent=119 // pred_check
          %p859 = pneg %p382
        $region158: #{tpu_custom_call.1} parent=119 // pred_check_branch
          %861 = sbr.rel (%p859) target = $region160
        $region159: #{tpu_custom_call.1} parent=119 // pred_region
          %863 = dma.done [#allocation19], 16
        $region160: #{tpu_custom_call.1} parent=119 // pred_fallthru
          _
        // Predicated region
        $region161: #{tpu_custom_call.1} parent=119 // pred_check
          %p864 = pneg %p403
        $region162: #{tpu_custom_call.1} parent=119 // pred_check_branch
          %866 = sbr.rel (%p864) target = $region164
        $region163: #{tpu_custom_call.1} parent=119 // pred_region
          %868 = dma.done [#allocation19], 16
        $region164: #{tpu_custom_call.1} parent=119 // pred_fallthru
          _
        // Predicated region
        $region165: #{tpu_custom_call.1} parent=119 // pred_check
          %p869 = pneg %p508
        $region166: #{tpu_custom_call.1} parent=119 // pred_check_branch
          %871 = sbr.rel (%p869) target = $region168
        $region167: #{tpu_custom_call.1} parent=119 // pred_region
          %873 = dma.done [#allocation22], 128
        $region168: #{tpu_custom_call.1} parent=119 // pred_fallthru
          _
        %p874 = scmp.lt.s32.totalorder %s46, 1
        %s875 = scalar_select %p874, %s46, 1
        %s876 = smul.addr %s875, 8
        %s877 = scalar_lea.vmem %s0, %s876
        %p878 = pneg %p67
        %p879 = pneg %p64
        %p880 = pneg %p88
        %p881 = pneg %p85
        %p882 = pneg %p109
        %p883 = pneg %p106
        %p884 = pneg %p130
        %p885 = pneg %p127
        %p886 = pneg %p151
        %p887 = pneg %p148
        %p888 = pneg %p172
        %p889 = pneg %p169
        %p890 = pneg %p193
        %p891 = pneg %p190
        %p892 = pneg %p214
        %p893 = pneg %p211
        %p894 = pneg %p235
        %p895 = pneg %p232
        %p896 = pneg %p256
        %p897 = pneg %p253
        %p898 = pneg %p277
        %p899 = pneg %p274
        %p900 = pneg %p298
        %p901 = pneg %p295
        %p902 = pneg %p319
        %p903 = pneg %p316
        %p904 = pneg %p340
        %p905 = pneg %p337
        %p906 = pneg %p361
        %p907 = pneg %p358
        %p908 = pneg %p382
        %p909 = pneg %p379
        %p910 = pneg %p403
        %p911 = pneg %p400
        %p912 = pneg %p424
        %p913 = pneg %p421
        %p914 = pneg %p445
        %p915 = pneg %p442
        %p916 = pneg %p466
        %p917 = pneg %p463
        %p918 = pneg %p487
        %p919 = pneg %p484
        %p920 = pneg %p508
        %p921 = pneg %p505
        %p922 = pneg %p529
        %p923 = pneg %p526
        %p924 = pneg %p550
        %p925 = pneg %p547
        %p926 = pneg %p571
        %p927 = pneg %p568
        %p928 = pneg %p597
        %p929 = pneg %p594
        %s930 = sand.u32 %s584, 1
        %s931 = scalar_lea.sflag [#allocation5], %s930
        %s932 = sand.u32 %s584, 1
        %s933 = smul.addr %s932, 8
        %s934 = scalar_lea.vmem [#allocation23], %s933
        %p935 = scmp.lt.s32.totalorder %s46, 1
        %s936 = scalar_select %p935, %s46, 1
        %s937 = smul.addr %s936, 8
        %s938 = scalar_lea.vmem %s0, %s937
        %v940 = vld [vmem:[%s938] sm:$0xff]
        %v941 = vpack.c.bf16 %v940, %v940
        %v942 = vld [vmem:[%s1] sm:$0xf]
        %v943 = vld [vmem:[%s1 + $0x4] sm:$0xf]
        %v944 = vld [vmem:[%s1 + $0x8] sm:$0xf]
        %v945 = vld [vmem:[%s1 + $0xc] sm:$0xf]
        %v946 = vld [vmem:[#allocation3] sm:$0x1]
        %v948 = vperm.slane %v946, 0
        %v954 = vunpack.c.l.b16 %v942
        %v955 = vunpack.c.l.b16 %v943
        %v956 = vunpack.c.l.b16 %v944
        %v957 = vunpack.c.l.b16 %v945
        %v958 = vpack.c.b16 %v955, %v954
        %v959 = vpack.c.b16 %v957, %v956
        %vm962 = vcmask 261120
        %v964 = vsel %vm962, %v941, 0
        %966 = vmatpush.bf16.msra.mxu0 0
        %967 = vmatpush.bf16.msra.mxu0 0
        %968 = vmatpush.bf16.msra.mxu0 0
        %969 = vmatpush.bf16.msra.mxu0 0
        %970 = vmatpush.bf16.msra.mxu0 0
        %971 = vmatpush.bf16.msra.mxu0 0
        %972 = vmatpush.bf16.msra.mxu0 %v959
        %973 = vmatpush.bf16.msra.mxu0 %v958
        %974 = vmatmul.bf16.gmra.mxu0 %v964
        %v975 = vpop.f32.mrf.mxu0
        %v976 = vadd.f32 %v948, %v975
        %v977 = vpop.f32.mrf.mxu0
        %978 = vdwg.mxu0
        %v979 = vld [vmem:[%s3] sm:$0xf]
        %v980 = vld [vmem:[%s3 + $0x4] sm:$0xf]
        %v981 = vld [vmem:[%s3 + $0x8] sm:$0xf]
        %v982 = vld [vmem:[%s3 + $0xc] sm:$0xf]
        %v983 = vld [vmem:[#allocation6] sm:$0x1]
        %v985 = vperm.slane %v983, 0
        %v991 = vunpack.c.l.b16 %v979
        %v992 = vunpack.c.l.b16 %v980
        %v993 = vunpack.c.l.b16 %v981
        %v994 = vunpack.c.l.b16 %v982
        %v995 = vpack.c.b16 %v992, %v991
        %v996 = vpack.c.b16 %v994, %v993
        %999 = vmatpush.bf16.msra.mxu0 0
        %1000 = vmatpush.bf16.msra.mxu0 0
        %1001 = vmatpush.bf16.msra.mxu0 0
        %1002 = vmatpush.bf16.msra.mxu0 0
        %1003 = vmatpush.bf16.msra.mxu0 0
        %1004 = vmatpush.bf16.msra.mxu0 0
        %1005 = vmatpush.bf16.msra.mxu0 %v996
        %1006 = vmatpush.bf16.msra.mxu0 %v995
        %1007 = vmatmul.bf16.gmra.mxu0 %v964
        %v1008 = vpop.f32.mrf.mxu0
        %v1009 = vadd.f32 %v985, %v1008
        %v1010 = vpop.f32.mrf.mxu0
        %1011 = vdwg.mxu0
        %v1012 = vld [vmem:[%s5] sm:$0xf]
        %v1013 = vld [vmem:[%s5 + $0x4] sm:$0xf]
        %v1014 = vld [vmem:[%s5 + $0x8] sm:$0xf]
        %v1015 = vld [vmem:[%s5 + $0xc] sm:$0xf]
        %v1016 = vld [vmem:[#allocation8] sm:$0x1]
        %v1018 = vperm.slane %v1016, 0
        %v1024 = vunpack.c.l.b16 %v1012
        %v1025 = vunpack.c.l.b16 %v1013
        %v1026 = vunpack.c.l.b16 %v1014
        %v1027 = vunpack.c.l.b16 %v1015
        %v1028 = vpack.c.b16 %v1025, %v1024
        %v1029 = vpack.c.b16 %v1027, %v1026
        %1032 = vmatpush.bf16.msra.mxu0 0
        %1033 = vmatpush.bf16.msra.mxu0 0
        %1034 = vmatpush.bf16.msra.mxu0 0
        %1035 = vmatpush.bf16.msra.mxu0 0
        %1036 = vmatpush.bf16.msra.mxu0 0
        %1037 = vmatpush.bf16.msra.mxu0 0
        %1038 = vmatpush.bf16.msra.mxu0 %v1029
        %1039 = vmatpush.bf16.msra.mxu0 %v1028
        %1040 = vmatmul.bf16.gmra.mxu0 %v964
        %v1041 = vpop.f32.mrf.mxu0
        %v1042 = vadd.f32 %v1018, %v1041
        %v1043 = vpop.f32.mrf.mxu0
        %1044 = vdwg.mxu0
        %v1045 = vpack.c.bf16 %v976, %v976
        %v1046 = vpack.c.bf16 %v1009, %v1009
        %v1047 = vpack.c.bf16 %v1042, %v1042
        %vm1048 = vcmask 64512
        %v1050 = vsel %vm1048, %v1045, 0
        %v1053 = vsel %vm1048, %v1046, 0
        %1055 = vmatpush.bf16.xpose.msra.mxu0 0
        %1056 = vmatpush.bf16.xpose.msra.mxu0 0
        %1057 = vmatpush.bf16.xpose.msra.mxu0 0
        %1058 = vmatpush.bf16.xpose.msra.mxu0 0
        %1059 = vmatpush.bf16.xpose.msra.mxu0 0
        %1060 = vmatpush.bf16.xpose.msra.mxu0 0
        %1061 = vmatpush.bf16.xpose.msra.mxu0 0
        %1062 = vmatpush.bf16.xpose.msra.mxu0 %v1053
        %1063 = vmatmul.bf16.gmra.mxu0 %v1050
        %v1064 = vpop.f32.mrf.mxu0
        %v1065 = vadd.f32 0.0, %v1064
        %v1066 = vpop.f32.mrf.mxu0
        %1067 = vdwg.mxu0
        %v1068 = vmul.f32 %v1065, 0.35355338
        %v1069 = vsel %vm1048, %v1068, -inf
        %1070 = vmax.xlane.f32.xlu0 %v1069
        %v1071 = vpop.xlane.xlu0 %1070
        %v1072 = vsub.f32 %v1068, %v1071
        %v1073 = vmul.f32 %v1072, 1.442695
        %v1074 = vpow.pop %v1073
        %v1075 = vsel %vm1048, %v1074, 0.0
        %1076 = vadd.xlane.f32.xlu0 %v1075
        %v1077 = vpop.xlane.xlu0 %1076
        %v1078 = vrcp.pop %v1077
        %v1079 = vmul.f32 %v1074, %v1078
        %v1080 = vpack.c.bf16 %v1079, %v1079
        %v1082 = vsel %vm1048, %v1080, 0
        %vm1084 = vcmask 1043456
        %v1086 = vsel %vm1084, %v1047, 0
        %1088 = vmatpush.bf16.msra.mxu0 0
        %1089 = vmatpush.bf16.msra.mxu0 0
        %1090 = vmatpush.bf16.msra.mxu0 0
        %1091 = vmatpush.bf16.msra.mxu0 0
        %1092 = vmatpush.bf16.msra.mxu0 0
        %1093 = vmatpush.bf16.msra.mxu0 0
        %1094 = vmatpush.bf16.msra.mxu0 0
        %1095 = vmatpush.bf16.msra.mxu0 %v1086
        %1096 = vmatmul.bf16.gmra.mxu0 %v1082
        %v1097 = vpop.f32.mrf.mxu0
        %v1098 = vadd.f32 0.0, %v1097
        %v1099 = vpop.f32.mrf.mxu0
        %1100 = vdwg.mxu0
        %1101 = vst.msk [vmem:[#allocation2] sm:$0xff] %vm1048, %v1098
        %v1103 = vunpack.c.l.b16 %v1045
        %v1104 = vpack.c.b16 %v1103, %v1103
        %1105 = vrot.lane.b32.xlu0 %v1104, 120
        %v1106 = vpop.permute.xlu0 %1105
        %v1108 = vunpack.c.l.b16 %v1046
        %v1109 = vpack.c.b16 %v1108, %v1108
        %1110 = vrot.lane.b32.xlu0 %v1109, 120
        %v1111 = vpop.permute.xlu0 %1110
        %v1113 = vsel %vm1048, %v1106, 0
        %v1116 = vsel %vm1048, %v1111, 0
        %1118 = vmatpush.bf16.xpose.msra.mxu0 0
        %1119 = vmatpush.bf16.xpose.msra.mxu0 0
        %1120 = vmatpush.bf16.xpose.msra.mxu0 0
        %1121 = vmatpush.bf16.xpose.msra.mxu0 0
        %1122 = vmatpush.bf16.xpose.msra.mxu0 0
        %1123 = vmatpush.bf16.xpose.msra.mxu0 0
        %1124 = vmatpush.bf16.xpose.msra.mxu0 0
        %1125 = vmatpush.bf16.xpose.msra.mxu0 %v1116
        %1126 = vmatmul.bf16.gmra.mxu0 %v1113
        %v1127 = vpop.f32.mrf.mxu0
        %v1128 = vadd.f32 0.0, %v1127
        %v1129 = vpop.f32.mrf.mxu0
        %1130 = vdwg.mxu0
        %v1131 = vmul.f32 %v1128, 0.35355338
        %v1132 = vsel %vm1048, %v1131, -inf
        %1133 = vmax.xlane.f32.xlu0 %v1132
        %v1134 = vpop.xlane.xlu0 %1133
        %v1135 = vsub.f32 %v1131, %v1134
        %v1136 = vmul.f32 %v1135, 1.442695
        %v1137 = vpow.pop %v1136
        %v1138 = vsel %vm1048, %v1137, 0.0
        %1139 = vadd.xlane.f32.xlu0 %v1138
        %v1140 = vpop.xlane.xlu0 %1139
        %v1141 = vrcp.pop %v1140
        %v1142 = vmul.f32 %v1137, %v1141
        %v1143 = vpack.c.bf16 %v1142, %v1142
        %v1145 = vunpack.c.l.b16 %v1047
        %v1146 = vpack.c.b16 %v1145, %v1145
        %1147 = vrot.lane.b32.xlu0 %v1146, 120
        %v1148 = vpop.permute.xlu0 %1147
        %v1150 = vsel %vm1048, %v1143, 0
        %v1153 = vsel %vm1084, %v1148, 0
        %1155 = vmatpush.bf16.msra.mxu0 0
        %1156 = vmatpush.bf16.msra.mxu0 0
        %1157 = vmatpush.bf16.msra.mxu0 0
        %1158 = vmatpush.bf16.msra.mxu0 0
        %1159 = vmatpush.bf16.msra.mxu0 0
        %1160 = vmatpush.bf16.msra.mxu0 0
        %1161 = vmatpush.bf16.msra.mxu0 0
        %1162 = vmatpush.bf16.msra.mxu0 %v1153
        %1163 = vmatmul.bf16.gmra.mxu0 %v1150
        %v1164 = vpop.f32.mrf.mxu0
        %v1165 = vadd.f32 0.0, %v1164
        %v1166 = vpop.f32.mrf.mxu0
        %1167 = vdwg.mxu0
        %1169 = vrot.lane.b32.xlu0 %v1165, 8
        %v1170 = vpop.permute.xlu0 %1169
        %vm1172 = vcmask 130112
        %1173 = vst.msk [vmem:[#allocation2] sm:$0xff] %vm1172, %v1170
        %1174 = vrot.lane.b32.xlu0 %v1104, 112
        %v1175 = vpop.permute.xlu0 %1174
        %1176 = vrot.lane.b32.xlu0 %v1109, 112
        %v1177 = vpop.permute.xlu0 %1176
        %v1179 = vsel %vm1048, %v1175, 0
        %v1182 = vsel %vm1048, %v1177, 0
        %1184 = vmatpush.bf16.xpose.msra.mxu0 0
        %1185 = vmatpush.bf16.xpose.msra.mxu0 0
        %1186 = vmatpush.bf16.xpose.msra.mxu0 0
        %1187 = vmatpush.bf16.xpose.msra.mxu0 0
        %1188 = vmatpush.bf16.xpose.msra.mxu0 0
        %1189 = vmatpush.bf16.xpose.msra.mxu0 0
        %1190 = vmatpush.bf16.xpose.msra.mxu0 0
        %1191 = vmatpush.bf16.xpose.msra.mxu0 %v1182
        %1192 = vmatmul.bf16.gmra.mxu0 %v1179
        %v1193 = vpop.f32.mrf.mxu0
        %v1194 = vadd.f32 0.0, %v1193
        %v1195 = vpop.f32.mrf.mxu0
        %1196 = vdwg.mxu0
        %v1197 = vmul.f32 %v1194, 0.35355338
        %v1198 = vsel %vm1048, %v1197, -inf
        %1199 = vmax.xlane.f32.xlu0 %v1198
        %v1200 = vpop.xlane.xlu0 %1199
        %v1201 = vsub.f32 %v1197, %v1200
        %v1202 = vmul.f32 %v1201, 1.442695
        %v1203 = vpow.pop %v1202
        %v1204 = vsel %vm1048, %v1203, 0.0
        %1205 = vadd.xlane.f32.xlu0 %v1204
        %v1206 = vpop.xlane.xlu0 %1205
        %v1207 = vrcp.pop %v1206
        %v1208 = vmul.f32 %v1203, %v1207
        %v1209 = vpack.c.bf16 %v1208, %v1208
        %1210 = vrot.lane.b32.xlu0 %v1146, 112
        %v1211 = vpop.permute.xlu0 %1210
        %v1213 = vsel %vm1048, %v1209, 0
        %v1216 = vsel %vm1084, %v1211, 0
        %1218 = vmatpush.bf16.msra.mxu0 0
        %1219 = vmatpush.bf16.msra.mxu0 0
        %1220 = vmatpush.bf16.msra.mxu0 0
        %1221 = vmatpush.bf16.msra.mxu0 0
        %1222 = vmatpush.bf16.msra.mxu0 0
        %1223 = vmatpush.bf16.msra.mxu0 0
        %1224 = vmatpush.bf16.msra.mxu0 0
        %1225 = vmatpush.bf16.msra.mxu0 %v1216
        %1226 = vmatmul.bf16.gmra.mxu0 %v1213
        %v1227 = vpop.f32.mrf.mxu0
        %v1228 = vadd.f32 0.0, %v1227
        %v1229 = vpop.f32.mrf.mxu0
        %1230 = vdwg.mxu0
        %1232 = vrot.lane.b32.xlu0 %v1228, 16
        %v1233 = vpop.permute.xlu0 %1232
        %vm1235 = vcmask 195712
        %1236 = vst.msk [vmem:[#allocation2] sm:$0xff] %vm1235, %v1233
        %1237 = vrot.lane.b32.xlu0 %v1104, 104
        %v1238 = vpop.permute.xlu0 %1237
        %1239 = vrot.lane.b32.xlu0 %v1109, 104
        %v1240 = vpop.permute.xlu0 %1239
        %v1242 = vsel %vm1048, %v1238, 0
        %v1245 = vsel %vm1048, %v1240, 0
        %1247 = vmatpush.bf16.xpose.msra.mxu0 0
        %1248 = vmatpush.bf16.xpose.msra.mxu0 0
        %1249 = vmatpush.bf16.xpose.msra.mxu0 0
        %1250 = vmatpush.bf16.xpose.msra.mxu0 0
        %1251 = vmatpush.bf16.xpose.msra.mxu0 0
        %1252 = vmatpush.bf16.xpose.msra.mxu0 0
        %1253 = vmatpush.bf16.xpose.msra.mxu0 0
        %1254 = vmatpush.bf16.xpose.msra.mxu0 %v1245
        %1255 = vmatmul.bf16.gmra.mxu0 %v1242
        %v1256 = vpop.f32.mrf.mxu0
        %v1257 = vadd.f32 0.0, %v1256
        %v1258 = vpop.f32.mrf.mxu0
        %1259 = vdwg.mxu0
        %v1260 = vmul.f32 %v1257, 0.35355338
        %v1261 = vsel %vm1048, %v1260, -inf
        %1262 = vmax.xlane.f32.xlu0 %v1261
        %v1263 = vpop.xlane.xlu0 %1262
        %v1264 = vsub.f32 %v1260, %v1263
        %v1265 = vmul.f32 %v1264, 1.442695
        %v1266 = vpow.pop %v1265
        %v1267 = vsel %vm1048, %v1266, 0.0
        %1268 = vadd.xlane.f32.xlu0 %v1267
        %v1269 = vpop.xlane.xlu0 %1268
        %v1270 = vrcp.pop %v1269
        %v1271 = vmul.f32 %v1266, %v1270
        %v1272 = vpack.c.bf16 %v1271, %v1271
        %1273 = vrot.lane.b32.xlu0 %v1146, 104
        %v1274 = vpop.permute.xlu0 %1273
        %v1276 = vsel %vm1048, %v1272, 0
        %v1279 = vsel %vm1084, %v1274, 0
        %1281 = vmatpush.bf16.msra.mxu0 0
        %1282 = vmatpush.bf16.msra.mxu0 0
        %1283 = vmatpush.bf16.msra.mxu0 0
        %1284 = vmatpush.bf16.msra.mxu0 0
        %1285 = vmatpush.bf16.msra.mxu0 0
        %1286 = vmatpush.bf16.msra.mxu0 0
        %1287 = vmatpush.bf16.msra.mxu0 0
        %1288 = vmatpush.bf16.msra.mxu0 %v1279
        %1289 = vmatmul.bf16.gmra.mxu0 %v1276
        %v1290 = vpop.f32.mrf.mxu0
        %v1291 = vadd.f32 0.0, %v1290
        %v1292 = vpop.f32.mrf.mxu0
        %1293 = vdwg.mxu0
        %1295 = vrot.lane.b32.xlu0 %v1291, 24
        %v1296 = vpop.permute.xlu0 %1295
        %vm1298 = vcmask 261312
        %1299 = vst.msk [vmem:[#allocation2] sm:$0xff] %vm1298, %v1296
        %v1300 = vld [vmem:[#allocation2] sm:$0xff]
        %v1301 = vpack.c.bf16 %v1300, %v1300
        %v1302 = vld [vmem:[#allocation9] sm:$0xf]
        %v1303 = vld [vmem:[#allocation9 + $0x4] sm:$0xf]
        %v1304 = vld [vmem:[#allocation9 + $0x8] sm:$0xf]
        %v1305 = vld [vmem:[#allocation9 + $0xc] sm:$0xf]
        %v1306 = vld [vmem:[#allocation11] sm:$0x1]
        %v1308 = vperm.slane %v1306, 0
        %v1314 = vunpack.c.l.b16 %v1302
        %v1315 = vunpack.c.l.b16 %v1303
        %v1316 = vunpack.c.l.b16 %v1304
        %v1317 = vunpack.c.l.b16 %v1305
        %v1318 = vpack.c.b16 %v1315, %v1314
        %v1319 = vpack.c.b16 %v1317, %v1316
        %v1323 = vsel %vm962, %v1301, 0
        %1325 = vmatpush.bf16.msra.mxu0 0
        %1326 = vmatpush.bf16.msra.mxu0 0
        %1327 = vmatpush.bf16.msra.mxu0 0
        %1328 = vmatpush.bf16.msra.mxu0 0
        %1329 = vmatpush.bf16.msra.mxu0 0
        %1330 = vmatpush.bf16.msra.mxu0 0
        %1331 = vmatpush.bf16.msra.mxu0 %v1319
        %1332 = vmatpush.bf16.msra.mxu0 %v1318
        %1333 = vmatmul.bf16.gmra.mxu0 %v1323
        %v1334 = vpop.f32.mrf.mxu0
        %v1335 = vadd.f32 %v1308, %v1334
        %v1336 = vpop.f32.mrf.mxu0
        %1337 = vdwg.mxu0
        %v1338 = vadd.f32 %v1335, %v940
        %v1339 = vld [vmem:[#allocation12] sm:$0x1]
        %v1340 = vld [vmem:[#allocation14] sm:$0x1]
        %v1341 = vsel %vm962, %v1338, 0.0
        %1342 = vadd.xlane.f32.xlu0 %v1341
        %v1343 = vpop.xlane.xlu0 %1342
        %v1344 = vrcp.pop 32.0
        %v1345 = vmul.f32 32.0, %v1344
        %v1346 = vsub.f32 1.0, %v1345
        %v1347 = vmul.f32 %v1344, %v1346
        %v1348 = vadd.f32 %v1344, %v1347
        %vm1349 = vweird.f32 %v1344
        %v1350 = vsel %vm1349, %v1344, %v1348
        %v1351 = vmul.f32 %v1343, %v1350
        %v1352 = vsub.f32 %v1338, %v1351
        %v1353 = vmul.f32 %v1352, %v1352
        %v1354 = vsel %vm962, %v1353, 0.0
        %1355 = vadd.xlane.f32.xlu0 %v1354
        %v1356 = vpop.xlane.xlu0 %1355
        %v1357 = vmul.f32 %v1356, %v1350
        %v1358 = vadd.f32 %v1357, 1e-12
        %v1359 = vrsqrt.pop %v1358
        %v1360 = vmul.f32 %v1359, %v1358
        %v1361 = vmul.f32 %v1360, %v1359
        %v1362 = vmul.f32 0.5, %v1361
        %v1363 = vsub.f32 1.5, %v1362
        %v1364 = vmul.f32 %v1359, %v1363
        %vm1365 = vweird.f32 %v1358
        %vm1366 = vweird.f32 %v1359
        %vm1367 = vmor %vm1365, %vm1366
        %v1368 = vsel %vm1367, %v1359, %v1364
        %v1369 = vmul.f32 %v1352, %v1368
        %v1371 = vperm.slane %v1339, 0
        %v1373 = vmul.f32 %v1369, %v1371
        %v1375 = vperm.slane %v1340, 0
        %v1377 = vadd.f32 %v1373, %v1375
        %v1378 = vpack.c.bf16 %v1377, %v1377
        %v1379 = vld [vmem:[%s11] sm:$0xf]
        %v1380 = vld [vmem:[%s11 + $0x4] sm:$0xf]
        %v1381 = vld [vmem:[%s11 + $0x8] sm:$0xf]
        %v1382 = vld [vmem:[%s11 + $0xc] sm:$0xf]
        %v1383 = vld [vmem:[#allocation15] sm:$0x1]
        %v1385 = vperm.slane %v1383, 0
        %v1391 = vunpack.c.l.b16 %v1379
        %v1392 = vunpack.c.l.b16 %v1380
        %v1393 = vunpack.c.l.b16 %v1381
        %v1394 = vunpack.c.l.b16 %v1382
        %v1395 = vpack.c.b16 %v1392, %v1391
        %v1396 = vpack.c.b16 %v1394, %v1393
        %v1400 = vsel %vm962, %v1378, 0
        %1402 = vmatpush.bf16.msra.mxu0 0
        %1403 = vmatpush.bf16.msra.mxu0 0
        %1404 = vmatpush.bf16.msra.mxu0 0
        %1405 = vmatpush.bf16.msra.mxu0 0
        %1406 = vmatpush.bf16.msra.mxu0 0
        %1407 = vmatpush.bf16.msra.mxu0 0
        %1408 = vmatpush.bf16.msra.mxu0 %v1396
        %1409 = vmatpush.bf16.msra.mxu0 %v1395
        %1410 = vmatmul.bf16.gmra.mxu0 %v1400
        %v1411 = vpop.f32.mrf.mxu0
        %v1412 = vadd.f32 %v1385, %v1411
        %v1413 = vpop.f32.mrf.mxu0
        %1414 = vdwg.mxu0
        %v1415 = vmul.f32 %v1412, 0.5
        %v1416 = vmul.f32 %v1412, 0.044715
        %v1417 = vmul.f32 %v1416, %v1412
        %v1418 = vmul.f32 %v1417, %v1412
        %v1419 = vadd.f32 %v1412, %v1418
        %v1420 = vmul.f32 %v1419, 0.7978846
        %v1421 = vtanh.pop %v1420
        %v1422 = vadd.f32 %v1421, 1.0
        %v1423 = vmul.f32 %v1415, %v1422
        %v1424 = vpack.c.bf16 %v1423, %v1423
        %v1425 = vld [vmem:[%s13] sm:$0xf]
        %v1426 = vld [vmem:[%s13 + $0x4] sm:$0xf]
        %v1427 = vld [vmem:[%s13 + $0x8] sm:$0xf]
        %v1428 = vld [vmem:[%s13 + $0xc] sm:$0xf]
        %v1429 = vld [vmem:[%s13 + $0x10] sm:$0xf]
        %v1430 = vld [vmem:[%s13 + $0x14] sm:$0xf]
        %v1431 = vld [vmem:[%s13 + $0x18] sm:$0xf]
        %v1432 = vld [vmem:[%s13 + $0x1c] sm:$0xf]
        %v1433 = vld [vmem:[#allocation17] sm:$0x1]
        %v1435 = vperm.slane %v1433, 0
        %v1445 = vunpack.c.l.b16 %v1425
        %v1446 = vunpack.c.l.b16 %v1426
        %v1447 = vunpack.c.l.b16 %v1427
        %v1448 = vunpack.c.l.b16 %v1428
        %v1449 = vunpack.c.l.b16 %v1429
        %v1450 = vunpack.c.l.b16 %v1430
        %v1451 = vunpack.c.l.b16 %v1431
        %v1452 = vunpack.c.l.b16 %v1432
        %v1453 = vpack.c.b16 %v1446, %v1445
        %v1454 = vpack.c.b16 %v1448, %v1447
        %v1455 = vpack.c.b16 %v1450, %v1449
        %v1456 = vpack.c.b16 %v1452, %v1451
        %vm1461 = vcmask 523264
        %v1463 = vsel %vm1461, %v1424, 0
        %1465 = vmatpush.bf16.msra.mxu0 0
        %1466 = vmatpush.bf16.msra.mxu0 0
        %1467 = vmatpush.bf16.msra.mxu0 0
        %1468 = vmatpush.bf16.msra.mxu0 0
        %1469 = vmatpush.bf16.msra.mxu0 %v1456
        %1470 = vmatpush.bf16.msra.mxu0 %v1455
        %1471 = vmatpush.bf16.msra.mxu0 %v1454
        %1472 = vmatpush.bf16.msra.mxu0 %v1453
        %1473 = vmatmul.bf16.gmra.mxu0 %v1463
        %v1474 = vpop.f32.mrf.mxu0
        %v1475 = vadd.f32 %v1435, %v1474
        %v1476 = vpop.f32.mrf.mxu0
        %1477 = vdwg.mxu0
        %v1478 = vadd.f32 %v1475, %v1377
        %v1479 = vld [vmem:[#allocation18] sm:$0x1]
        %v1480 = vld [vmem:[#allocation20] sm:$0x1]
        %v1481 = vsel %vm962, %v1478, 0.0
        %1482 = vadd.xlane.f32.xlu0 %v1481
        %v1483 = vpop.xlane.xlu0 %1482
        %v1484 = vmul.f32 %v1483, %v1350
        %v1485 = vsub.f32 %v1478, %v1484
        %v1486 = vmul.f32 %v1485, %v1485
        %v1487 = vsel %vm962, %v1486, 0.0
        %1488 = vadd.xlane.f32.xlu0 %v1487
        %v1489 = vpop.xlane.xlu0 %1488
        %v1490 = vmul.f32 %v1489, %v1350
        %v1491 = vadd.f32 %v1490, 1e-12
        %v1492 = vrsqrt.pop %v1491
        %v1493 = vmul.f32 %v1492, %v1491
        %v1494 = vmul.f32 %v1493, %v1492
        %v1495 = vmul.f32 0.5, %v1494
        %v1496 = vsub.f32 1.5, %v1495
        %v1497 = vmul.f32 %v1492, %v1496
        %vm1498 = vweird.f32 %v1491
        %vm1499 = vweird.f32 %v1492
        %vm1500 = vmor %vm1498, %vm1499
        %v1501 = vsel %vm1500, %v1492, %v1497
        %v1502 = vmul.f32 %v1485, %v1501
        %v1504 = vperm.slane %v1479, 0
        %v1506 = vmul.f32 %v1502, %v1504
        %v1508 = vperm.slane %v1480, 0
        %v1510 = vadd.f32 %v1506, %v1508
        %v1511 = vpack.c.bf16 %v1510, %v1510
        %v1512 = vld [vmem:[%s17] sm:$0xf]
        %v1513 = vld [vmem:[%s17 + $0x4] sm:$0xf]
        %v1514 = vld [vmem:[%s17 + $0x8] sm:$0xf]
        %v1515 = vld [vmem:[%s17 + $0xc] sm:$0xf]
        %v1516 = vld [vmem:[%s18] sm:$0x1]
        %v1518 = vperm.slane %v1516, 0
        %v1524 = vunpack.c.l.b16 %v1512
        %v1525 = vunpack.c.l.b16 %v1513
        %v1526 = vunpack.c.l.b16 %v1514
        %v1527 = vunpack.c.l.b16 %v1515
        %v1528 = vpack.c.b16 %v1525, %v1524
        %v1529 = vpack.c.b16 %v1527, %v1526
        %v1533 = vsel %vm962, %v1511, 0
        %1535 = vmatpush.bf16.msra.mxu0 0
        %1536 = vmatpush.bf16.msra.mxu0 0
        %1537 = vmatpush.bf16.msra.mxu0 0
        %1538 = vmatpush.bf16.msra.mxu0 0
        %1539 = vmatpush.bf16.msra.mxu0 0
        %1540 = vmatpush.bf16.msra.mxu0 0
        %1541 = vmatpush.bf16.msra.mxu0 %v1529
        %1542 = vmatpush.bf16.msra.mxu0 %v1528
        %1543 = vmatmul.bf16.gmra.mxu0 %v1533
        %v1544 = vpop.f32.mrf.mxu0
        %v1545 = vadd.f32 %v1518, %v1544
        %v1546 = vpop.f32.mrf.mxu0
        %1547 = vdwg.mxu0
        %v1548 = vmax.f32 %v1545, 0.0
        %v1549 = vpack.c.bf16 %v1548, %v1548
        %v1550 = vld [vmem:[%s19] sm:$0xf]
        %v1551 = vld [vmem:[%s19 + $0x4] sm:$0xf]
        %v1552 = vld [vmem:[%s20] sm:$0x1]
        %v1554 = vperm.slane %v1552, 0
        %v1558 = vunpack.c.l.b16 %v1550
        %v1559 = vunpack.c.l.b16 %v1551
        %v1560 = vpack.c.b16 %v1559, %v1558
        %vm1562 = vcmask 130048
        %v1564 = vsel %vm1562, %v1549, 0
        %1566 = vmatpush.bf16.msra.mxu0 0
        %1567 = vmatpush.bf16.msra.mxu0 0
        %1568 = vmatpush.bf16.msra.mxu0 0
        %1569 = vmatpush.bf16.msra.mxu0 0
        %1570 = vmatpush.bf16.msra.mxu0 0
        %1571 = vmatpush.bf16.msra.mxu0 0
        %1572 = vmatpush.bf16.msra.mxu0 0
        %1573 = vmatpush.bf16.msra.mxu0 %v1560
        %1574 = vmatmul.bf16.gmra.mxu0 %v1564
        %v1575 = vpop.f32.mrf.mxu0
        %v1576 = vadd.f32 %v1554, %v1575
        %v1577 = vpop.f32.mrf.mxu0
        %1578 = vdwg.mxu0
        %v1579 = vld [vmem:[#allocation21] sm:$0xf]
        %v1580 = vld [vmem:[#allocation21 + $0x4] sm:$0xf]
        %v1581 = vld [vmem:[%s22] sm:$0x1]
        %v1583 = vperm.slane %v1581, 0
        %v1587 = vunpack.c.l.b16 %v1579
        %v1588 = vunpack.c.l.b16 %v1580
        %v1589 = vpack.c.b16 %v1588, %v1587
        %1591 = vmatpush.bf16.msra.mxu0 0
        %1592 = vmatpush.bf16.msra.mxu0 0
        %1593 = vmatpush.bf16.msra.mxu0 0
        %1594 = vmatpush.bf16.msra.mxu0 0
        %1595 = vmatpush.bf16.msra.mxu0 0
        %1596 = vmatpush.bf16.msra.mxu0 0
        %1597 = vmatpush.bf16.msra.mxu0 0
        %1598 = vmatpush.bf16.msra.mxu0 %v1589
        %1599 = vmatmul.bf16.gmra.mxu0 %v1564
        %v1600 = vpop.f32.mrf.mxu0
        %v1601 = vadd.f32 %v1583, %v1600
        %v1602 = vpop.f32.mrf.mxu0
        %1603 = vdwg.mxu0
        %v1604 = vadd.f32 %v1601, -3.3
        %v1605 = vxor.u32 %v1604, 2147483648
        %v1606 = vmul.f32 %v1605, 1.442695
        %v1607 = vpow.pop %v1606
        %v1608 = vadd.f32 %v1607, 1.0
        %v1609 = vrcp.pop %v1608
        %v1610 = vmul.f32 %v1608, %v1609
        %v1611 = vsub.f32 1.0, %v1610
        %v1612 = vmul.f32 %v1609, %v1611
        %v1613 = vadd.f32 %v1609, %v1612
        %vm1614 = vweird.f32 %v1608
        %vm1615 = vweird.f32 %v1609
        %vm1616 = vmor %vm1614, %vm1615
        %v1617 = vsel %vm1616, %v1609, %v1613
        %v1618 = vand.u32 2147483647, %v1608
        %vm1619 = vcmp.eq.f32.partialorder %v1618, 8.507059e+37
        %v1620 = vand.u32 %v1608, 2147483648
        %v1621 = vor.u32 1.1754944e-38, %v1620
        %v1622 = vsel %vm1619, %v1621, %v1617
        %v1623 = vmul.f32 1.0, %v1622
        %v1624 = vmul.f32 %v1576, %v1623
        %v1625 = vsub.f32 1.0, %v1623
        %v1626 = vmul.f32 %v1510, %v1625
        %v1627 = vadd.f32 %v1624, %v1626
        %v1628 = vld [vmem:[%s23] sm:$0x1]
        %v1629 = vld [vmem:[%s24] sm:$0x1]
        %v1630 = vsel %vm962, %v1627, 0.0
        %1631 = vadd.xlane.f32.xlu0 %v1630
        %v1632 = vpop.xlane.xlu0 %1631
        %v1633 = vmul.f32 %v1632, %v1350
        %v1634 = vsub.f32 %v1627, %v1633
        %v1635 = vmul.f32 %v1634, %v1634
        %v1636 = vsel %vm962, %v1635, 0.0
        %1637 = vadd.xlane.f32.xlu0 %v1636
        %v1638 = vpop.xlane.xlu0 %1637
        %v1639 = vmul.f32 %v1638, %v1350
        %v1640 = vadd.f32 %v1639, 1e-05
        %v1641 = vrsqrt.pop %v1640
        %v1642 = vmul.f32 %v1641, %v1640
        %v1643 = vmul.f32 %v1642, %v1641
        %v1644 = vmul.f32 0.5, %v1643
        %v1645 = vsub.f32 1.5, %v1644
        %v1646 = vmul.f32 %v1641, %v1645
        %vm1647 = vweird.f32 %v1640
        %vm1648 = vweird.f32 %v1641
        %vm1649 = vmor %vm1647, %vm1648
        %v1650 = vsel %vm1649, %v1641, %v1646
        %v1651 = vmul.f32 %v1634, %v1650
        %v1653 = vperm.slane %v1628, 0
        %v1655 = vmul.f32 %v1651, %v1653
        %v1657 = vperm.slane %v1629, 0
        %v1659 = vadd.f32 %v1655, %v1657
        %1660 = vst.msk [vmem:[%s934] sm:$0xff] %vm962, %v1659
        %s1661 = sand.u32 %s584, 1
        %s1662 = scalar_lea.sflag [#allocation5], %s1661
        %s1663 = sand.u32 %s584, 1
        %s1664 = smul.addr %s1663, 8
        %s1665 = scalar_lea.vmem [#allocation23], %s1664
        // Predicated region
        $region169: #{tpu_custom_call.1} parent=119 // pred_check
          %p1666 = pneg %p594
        $region170: #{tpu_custom_call.1} parent=119 // pred_check_branch
          %1668 = sbr.rel (%p1666) target = $region172
        $region171: #{tpu_custom_call.1} parent=119 // pred_region
          %1670 = vsyncadd %s1662, 0
          %s1671 = smul.addr %s46, 8
          %s1672 = scalar_lea.hbm %s25, %s1671
          %s1674 = sshll.u32 %s1665, 4
          %s1675 = int_to_ptr.vmem [resolvable:$true] %s1674
          %s1676 = sshll.u32 %s1672, 4
          %s1677 = int_to_ptr.hbm [resolvable:$true] %s1676
          %1679 = dma.vmem_to_hbm [thread:$0]  %s1675, 128, %s1677, %s1662
        $region172: #{tpu_custom_call.1} parent=119 // pred_fallthru
          _
      $region120: #{tpu_custom_call.1} parent=5 // pred_fallthru
        _
      %p1680 = scmp.le.s32.totalorder 2, %s41
      // Predicated region
      $region173: #{tpu_custom_call.1} parent=5 // pred_check
        %p1681 = pneg %p1680
      $region174: #{tpu_custom_call.1} parent=5 // pred_check_branch
        %1683 = sbr.rel (%p1681) target = $region176
      $region175: #{tpu_custom_call.1} parent=5 // pred_region
        %s1684 = ssub.s32 %s41, 2
        // Predicated region
        $region177: #{tpu_custom_call.1} parent=175 // pred_check
          %p1685 = pneg %p600
        $region178: #{tpu_custom_call.1} parent=175 // pred_check_branch
          %1687 = sbr.rel (%p1685) target = $region180
        $region179: #{tpu_custom_call.1} parent=175 // pred_region
          %s1688 = sand.u32 %s585, 1
          %s1689 = scalar_lea.sflag [#allocation5], %s1688
          %s1690 = sand.u32 %s585, 1
          %s1691 = smul.addr %s1690, 8
          %s1692 = scalar_lea.vmem [#allocation23], %s1691
          %1694 = dma.done %s1689, 128
        $region180: #{tpu_custom_call.1} parent=175 // pred_fallthru
          _
      $region176: #{tpu_custom_call.1} parent=5 // pred_fallthru
        _
    $region6: #{tpu_custom_call.1} parent=1 // loop_footer
      %s45 = sadd.s32 1, %s41
    $region7: #{tpu_custom_call.1} parent=1 // loop_footer_branch
      %40 = sbr.rel target = $region3
    $region8: #{tpu_custom_call.1} parent=1 // loop_exit
      _
    %1695 = vsyncpa [#allocation4], 1
    %s1696 = scalar_lea.sflag [#allocation4], 1
    %1697 = vsyncpa %s1696, 1
    %1698 = vsyncpa [#allocation7], 1
    %1699 = vsyncpa [#allocation10], 1
    %1700 = vsyncpa [#allocation13], 1
    %1701 = vsyncpa [#allocation16], 1
    %1702 = vsyncpa [#allocation19], 1
    %1703 = vsyncpa [#allocation22], 1
    %1704 = vsyncpa [#allocation5], 1
    %s1705 = scalar_lea.sflag [#allocation5], 1
    %1706 = vsyncpa %s1705, 1

// kernel: tpu_custom_call.1
$region0: #{tpu_custom_call.1}
  #allocation0 [shape = 'u32[]', space=smem, size = 0x4, offset = 0x4, fixed_abs, tag = 'smem constant byte address 0x4 - core index']
  #allocation1 [shape = 'u32[72,128]{1,0:T(1,128)}', space=vmem, size = 0x9000, scoped, tag = 'internal scratch']
  #allocation2 [shape = 'f32[1,8,32]{2,1,0:T(8,128)}', space=vmem, size = 0x1000, scoped, tag = 'scratch operand']
  %s0 = inlined_call_operand.vmem [shape: f32[2,8,32], index: 0, kind: input, shape index: {}]
  %s1 = inlined_call_operand.vmem [shape: bf16[32,32], index: 1, kind: input, shape index: {}]
  %s2 = inlined_call_operand.hbm [shape: f32[1,32], index: 2, kind: input, shape index: {}]
  %s3 = inlined_call_operand.vmem [shape: bf16[32,32], index: 3, kind: input, shape index: {}]
  %s4 = inlined_call_operand.hbm [shape: f32[1,32], index: 4, kind: input, shape index: {}]
  %s5 = inlined_call_operand.vmem [shape: bf16[32,32], index: 5, kind: input, shape index: {}]
  %s6 = inlined_call_operand.hbm [shape: f32[1,32], index: 6, kind: input, shape index: {}]
  %s7 = inlined_call_operand.hbm [shape: bf16[32,32], index: 7, kind: input, shape index: {}]
  %s8 = inlined_call_operand.hbm [shape: f32[1,32], index: 8, kind: input, shape index: {}]
  %s9 = inlined_call_operand.hbm [shape: f32[1,32], index: 9, kind: input, shape index: {}]
  %s10 = inlined_call_operand.hbm [shape: f32[1,32], index: 10, kind: input, shape index: {}]
  %s11 = inlined_call_operand.vmem [shape: bf16[32,64], index: 11, kind: input, shape index: {}]
  %s12 = inlined_call_operand.hbm [shape: f32[1,64], index: 12, kind: input, shape index: {}]
  %s13 = inlined_call_operand.vmem [shape: bf16[64,32], index: 13, kind: input, shape index: {}]
  %s14 = inlined_call_operand.hbm [shape: f32[1,32], index: 14, kind: input, shape index: {}]
  %s15 = inlined_call_operand.hbm [shape: f32[1,32], index: 15, kind: input, shape index: {}]
  %s16 = inlined_call_operand.hbm [shape: f32[1,32], index: 16, kind: input, shape index: {}]
  %s17 = inlined_call_operand.vmem [shape: bf16[32,16], index: 17, kind: input, shape index: {}]
  %s18 = inlined_call_operand.vmem [shape: f32[1,16], index: 18, kind: input, shape index: {}]
  %s19 = inlined_call_operand.vmem [shape: bf16[16,32], index: 19, kind: input, shape index: {}]
  %s20 = inlined_call_operand.vmem [shape: f32[1,32], index: 20, kind: input, shape index: {}]
  %s21 = inlined_call_operand.hbm [shape: bf16[16,32], index: 21, kind: input, shape index: {}]
  %s22 = inlined_call_operand.vmem [shape: f32[1,32], index: 22, kind: input, shape index: {}]
  %s23 = inlined_call_operand.vmem [shape: f32[1,32], index: 23, kind: input, shape index: {}]
  %s24 = inlined_call_operand.vmem [shape: f32[1,32], index: 24, kind: input, shape index: {}]
  %s25 = inlined_call_operand.hbm [shape: f32[2,8,32], index: 25, kind: output, shape index: {}]
  %s26 = sld [smem:[#allocation0]]
  $region181: #{tpu_custom_call.1} parent=0
    _
  %s28 = ssub.s32 1, %s26
  %s29 = scalar_select 0, %s28, %s26
  $region1: #{tpu_custom_call.1} parent=0
    #allocation3 [shape = 'u8[512]{0}', space=vmem, size = 0x400, scoped, tag = 'input window, operand 2, single buffered']
    #allocation4 [shape = 's32[2]{0}', space=sflag, size = 0x8, scoped, tag = 'scoped memory for tpu_custom_call.1']
    #allocation5 [shape = 's32[2]{0}', space=sflag, size = 0x8, scoped, tag = 'scoped memory for tpu_custom_call.1']
    #allocation6 [shape = 'u8[512]{0}', space=vmem, size = 0x400, scoped, tag = 'input window, operand 4, single buffered']
    #allocation7 [shape = 's32[1]{0}', space=sflag, size = 0x4, scoped, tag = 'scoped memory for tpu_custom_call.1']
    #allocation8 [shape = 'u8[512]{0}', space=vmem, size = 0x400, scoped, tag = 'input window, operand 6, single buffered']
    #allocation9 [shape = 'u8[8192]{0}', space=vmem, size = 0x2000, scoped, tag = 'input window, operand 7, single buffered']
    #allocation10 [shape = 's32[1]{0}', space=sflag, size = 0x4, scoped, tag = 'scoped memory for tpu_custom_call.1']
    #allocation11 [shape = 'u8[512]{0}', space=vmem, size = 0x400, scoped, tag = 'input window, operand 8, single buffered']
    #allocation12 [shape = 'u8[512]{0}', space=vmem, size = 0x400, scoped, tag = 'input window, operand 9, single buffered']
    #allocation13 [shape = 's32[1]{0}', space=sflag, size = 0x4, scoped, tag = 'scoped memory for tpu_custom_call.1']
    #allocation14 [shape = 'u8[512]{0}', space=vmem, size = 0x400, scoped, tag = 'input window, operand 10, single buffered']
    #allocation15 [shape = 'u8[512]{0}', space=vmem, size = 0x400, scoped, tag = 'input window, operand 12, single buffered']
    #allocation16 [shape = 's32[1]{0}', space=sflag, size = 0x4, scoped, tag = 'scoped memory for tpu_custom_call.1']
    #allocation17 [shape = 'u8[512]{0}', space=vmem, size = 0x400, scoped, tag = 'input window, operand 14, single buffered']
    #allocation18 [shape = 'u8[512]{0}', space=vmem, size = 0x400, scoped, tag = 'input window, operand 15, single buffered']
    #allocation19 [shape = 's32[1]{0}', space=sflag, size = 0x4, scoped, tag = 'scoped memory for tpu_custom_call.1']
    #allocation20 [shape = 'u8[512]{0}', space=vmem, size = 0x400, scoped, tag = 'input window, operand 16, single buffered']
    #allocation21 [shape = 'u8[4096]{0}', space=vmem, size = 0x1000, scoped, tag = 'input window, operand 21, single buffered']
    #allocation22 [shape = 's32[1]{0}', space=sflag, size = 0x4, scoped, tag = 'scoped memory for tpu_custom_call.1']
    #allocation23 [shape = 'u8[8192]{0}', space=vmem, size = 0x2000, scoped, tag = 'output window, operand 0']
    %30 = vsyncpa [#allocation4], 0
    %31 = vsyncpa [#allocation7], 0
    %32 = vsyncpa [#allocation10], 0
    %33 = vsyncpa [#allocation13], 0
    %34 = vsyncpa [#allocation16], 0
    %35 = vsyncpa [#allocation19], 0
    %36 = vsyncpa [#allocation22], 0
    %37 = vsyncpa [#allocation5], 0
    %s38 = scalar_lea.sflag [#allocation5], 1
    %39 = vsyncpa %s38, 0
    loop: start=0, step=1, limit=4
    $region2: #{tpu_custom_call.1} parent=1 // loop_pre_header
      _
    $region3: #{tpu_custom_call.1} parent=1 // loop_header
      %s41 = sphi 0, %s45
      %p42 = scmp.ge.s32.totalorder %s41, 4
      %s51 = sphi 0, %s53
      %s54 = sphi 0, %s51
      %s55 = sphi 0, %s54
      %s71 = sphi 0, %s55
      %s75 = sphi 0, %s75
      %s77 = sphi 0, %s75
      %s78 = sphi 0, %s77
      %s92 = sphi 0, %s78
      %s96 = sphi 0, %s96
      %s98 = sphi 0, %s96
      %s99 = sphi 0, %s98
      %s113 = sphi 0, %s99
      %s117 = sphi 0, %s117
      %s119 = sphi 0, %s117
      %s120 = sphi 0, %s119
      %s134 = sphi 0, %s120
      %s138 = sphi 0, %s138
      %s140 = sphi 0, %s138
      %s141 = sphi 0, %s140
      %s155 = sphi 0, %s141
      %s159 = sphi 0, %s159
      %s161 = sphi 0, %s159
      %s162 = sphi 0, %s161
      %s176 = sphi 0, %s162
      %s180 = sphi 0, %s180
      %s182 = sphi 0, %s180
      %s183 = sphi 0, %s182
      %s197 = sphi 0, %s183
      %s201 = sphi 0, %s201
      %s203 = sphi 0, %s201
      %s204 = sphi 0, %s203
      %s218 = sphi 0, %s204
      %s222 = sphi 0, %s222
      %s224 = sphi 0, %s222
      %s225 = sphi 0, %s224
      %s239 = sphi 0, %s225
      %s243 = sphi 0, %s243
      %s245 = sphi 0, %s243
      %s246 = sphi 0, %s245
      %s260 = sphi 0, %s246
      %s264 = sphi 0, %s264
      %s266 = sphi 0, %s264
      %s267 = sphi 0, %s266
      %s281 = sphi 0, %s267
      %s285 = sphi 0, %s285
      %s287 = sphi 0, %s285
      %s288 = sphi 0, %s287
      %s302 = sphi 0, %s288
      %s306 = sphi 0, %s306
      %s308 = sphi 0, %s306
      %s309 = sphi 0, %s308
      %s323 = sphi 0, %s309
      %s327 = sphi 0, %s327
      %s329 = sphi 0, %s327
      %s330 = sphi 0, %s329
      %s344 = sphi 0, %s330
      %s348 = sphi 0, %s348
      %s350 = sphi 0, %s348
      %s351 = sphi 0, %s350
      %s365 = sphi 0, %s351
      %s369 = sphi 0, %s369
      %s371 = sphi 0, %s369
      %s372 = sphi 0, %s371
      %s386 = sphi 0, %s372
      %s390 = sphi 0, %s390
      %s392 = sphi 0, %s390
      %s393 = sphi 0, %s392
      %s407 = sphi 0, %s393
      %s411 = sphi 0, %s411
      %s413 = sphi 0, %s411
      %s414 = sphi 0, %s413
      %s428 = sphi 0, %s414
      %s432 = sphi 0, %s432
      %s434 = sphi 0, %s432
      %s435 = sphi 0, %s434
      %s449 = sphi 0, %s435
      %s453 = sphi 0, %s453
      %s455 = sphi 0, %s453
      %s456 = sphi 0, %s455
      %s470 = sphi 0, %s456
      %s474 = sphi 0, %s474
      %s476 = sphi 0, %s474
      %s477 = sphi 0, %s476
      %s491 = sphi 0, %s477
      %s495 = sphi 0, %s495
      %s497 = sphi 0, %s495
      %s498 = sphi 0, %s497
      %s512 = sphi 0, %s498
      %s516 = sphi 0, %s516
      %s518 = sphi 0, %s516
      %s519 = sphi 0, %s518
      %s533 = sphi 0, %s519
      %s537 = sphi 0, %s537
      %s539 = sphi 0, %s537
      %s540 = sphi 0, %s539
      %s554 = sphi 0, %s540
      %s558 = sphi 0, %s558
      %s560 = sphi 0, %s558
      %s561 = sphi 0, %s560
      %s575 = sphi 0, %s561
      %s581 = sphi 0, %s583
      %s584 = sphi 0, %s581
      %s585 = sphi 0, %s584
      %s601 = sphi 0, %s585
    $region4: #{tpu_custom_call.1} parent=1 // loop_header_branch
      %44 = sbr.rel (%p42) target = $region8
    $region5: #{tpu_custom_call.1} parent=1 // loop_body
      %s46 = ssub.s32 %s41, 1
      %s47 = ssub.s32 %s41, 2
      %s48 = sadd.s32 %s41, 1
      %s49 = ssub.s32 %s41, %s48
      %p50 = scmp.eq.s32.totalorder %s49, 0
      %s52 = sadd.s32 %s51, 1
      %s53 = scalar_select %p50, %s51, %s52
      %p56 = pneg %p50
      %p57 = scmp.eq.s32.totalorder %s41, 1
      %p58 = por %p56, %p57
      %p59 = scmp.ne.s32.totalorder %s51, %s54
      %p60 = scmp.eq.s32.totalorder %s41, 0
      %p61 = por %p59, %p60
      %p62 = scmp.ne.s32.totalorder %s51, %s54
      %p63 = scmp.eq.s32.totalorder %s46, 1
      %p64 = por %p62, %p63
      %p65 = scmp.ne.s32.totalorder %s54, %s55
      %p66 = scmp.eq.s32.totalorder %s46, 0
      %p67 = por %p65, %p66
      %p68 = scmp.ne.s32.totalorder %s54, %s55
      %p69 = scmp.eq.s32.totalorder %s47, 1
      %p70 = por %p68, %p69
      %p72 = scmp.ne.s32.totalorder %s55, %s71
      %p73 = scmp.eq.s32.totalorder %s47, 0
      %p74 = por %p72, %p73
      %s76 = sadd.s32 %s75, 1
      %p79 = scmp.eq.s32.totalorder %s41, 1
      %p80 = scmp.ne.s32.totalorder %s75, %s77
      %p81 = scmp.eq.s32.totalorder %s41, 0
      %p82 = por %p80, %p81
      %p83 = scmp.ne.s32.totalorder %s75, %s77
      %p84 = scmp.eq.s32.totalorder %s46, 1
      %p85 = por %p83, %p84
      %p86 = scmp.ne.s32.totalorder %s77, %s78
      %p87 = scmp.eq.s32.totalorder %s46, 0
      %p88 = por %p86, %p87
      %p89 = scmp.ne.s32.totalorder %s77, %s78
      %p90 = scmp.eq.s32.totalorder %s47, 1
      %p91 = por %p89, %p90
      %p93 = scmp.ne.s32.totalorder %s78, %s92
      %p94 = scmp.eq.s32.totalorder %s47, 0
      %p95 = por %p93, %p94
      %s97 = sadd.s32 %s96, 1
      %p100 = scmp.eq.s32.totalorder %s41, 1
      %p101 = scmp.ne.s32.totalorder %s96, %s98
      %p102 = scmp.eq.s32.totalorder %s41, 0
      %p103 = por %p101, %p102
      %p104 = scmp.ne.s32.totalorder %s96, %s98
      %p105 = scmp.eq.s32.totalorder %s46, 1
      %p106 = por %p104, %p105
      %p107 = scmp.ne.s32.totalorder %s98, %s99
      %p108 = scmp.eq.s32.totalorder %s46, 0
      %p109 = por %p107, %p108
      %p110 = scmp.ne.s32.totalorder %s98, %s99
      %p111 = scmp.eq.s32.totalorder %s47, 1
      %p112 = por %p110, %p111
      %p114 = scmp.ne.s32.totalorder %s99, %s113
      %p115 = scmp.eq.s32.totalorder %s47, 0
      %p116 = por %p114, %p115
      %s118 = sadd.s32 %s117, 1
      %p121 = scmp.eq.s32.totalorder %s41, 1
      %p122 = scmp.ne.s32.totalorder %s117, %s119
      %p123 = scmp.eq.s32.totalorder %s41, 0
      %p124 = por %p122, %p123
      %p125 = scmp.ne.s32.totalorder %s117, %s119
      %p126 = scmp.eq.s32.totalorder %s46, 1
      %p127 = por %p125, %p126
      %p128 = scmp.ne.s32.totalorder %s119, %s120
      %p129 = scmp.eq.s32.totalorder %s46, 0
      %p130 = por %p128, %p129
      %p131 = scmp.ne.s32.totalorder %s119, %s120
      %p132 = scmp.eq.s32.totalorder %s47, 1
      %p133 = por %p131, %p132
      %p135 = scmp.ne.s32.totalorder %s120, %s134
      %p136 = scmp.eq.s32.totalorder %s47, 0
      %p137 = por %p135, %p136
      %s139 = sadd.s32 %s138, 1
      %p142 = scmp.eq.s32.totalorder %s41, 1
      %p143 = scmp.ne.s32.totalorder %s138, %s140
      %p144 = scmp.eq.s32.totalorder %s41, 0
      %p145 = por %p143, %p144
      %p146 = scmp.ne.s32.totalorder %s138, %s140
      %p147 = scmp.eq.s32.totalorder %s46, 1
      %p148 = por %p146, %p147
      %p149 = scmp.ne.s32.totalorder %s140, %s141
      %p150 = scmp.eq.s32.totalorder %s46, 0
      %p151 = por %p149, %p150
      %p152 = scmp.ne.s32.totalorder %s140, %s141
      %p153 = scmp.eq.s32.totalorder %s47, 1
      %p154 = por %p152, %p153
      %p156 = scmp.ne.s32.totalorder %s141, %s155
      %p157 = scmp.eq.s32.totalorder %s47, 0
      %p158 = por %p156, %p157
      %s160 = sadd.s32 %s159, 1
      %p163 = scmp.eq.s32.totalorder %s41, 1
      %p164 = scmp.ne.s32.totalorder %s159, %s161
      %p165 = scmp.eq.s32.totalorder %s41, 0
      %p166 = por %p164, %p165
      %p167 = scmp.ne.s32.totalorder %s159, %s161
      %p168 = scmp.eq.s32.totalorder %s46, 1
      %p169 = por %p167, %p168
      %p170 = scmp.ne.s32.totalorder %s161, %s162
      %p171 = scmp.eq.s32.totalorder %s46, 0
      %p172 = por %p170, %p171
      %p173 = scmp.ne.s32.totalorder %s161, %s162
      %p174 = scmp.eq.s32.totalorder %s47, 1
      %p175 = por %p173, %p174
      %p177 = scmp.ne.s32.totalorder %s162, %s176
      %p178 = scmp.eq.s32.totalorder %s47, 0
      %p179 = por %p177, %p178
      %s181 = sadd.s32 %s180, 1
      %p184 = scmp.eq.s32.totalorder %s41, 1
      %p185 = scmp.ne.s32.totalorder %s180, %s182
      %p186 = scmp.eq.s32.totalorder %s41, 0
      %p187 = por %p185, %p186
      %p188 = scmp.ne.s32.totalorder %s180, %s182
      %p189 = scmp.eq.s32.totalorder %s46, 1
      %p190 = por %p188, %p189
      %p191 = scmp.ne.s32.totalorder %s182, %s183
      %p192 = scmp.eq.s32.totalorder %s46, 0
      %p193 = por %p191, %p192
      %p194 = scmp.ne.s32.totalorder %s182, %s183
      %p195 = scmp.eq.s32.totalorder %s47, 1
      %p196 = por %p194, %p195
      %p198 = scmp.ne.s32.totalorder %s183, %s197
      %p199 = scmp.eq.s32.totalorder %s47, 0
      %p200 = por %p198, %p199
      %s202 = sadd.s32 %s201, 1
      %p205 = scmp.eq.s32.totalorder %s41, 1
      %p206 = scmp.ne.s32.totalorder %s201, %s203
      %p207 = scmp.eq.s32.totalorder %s41, 0
      %p208 = por %p206, %p207
      %p209 = scmp.ne.s32.totalorder %s201, %s203
      %p210 = scmp.eq.s32.totalorder %s46, 1
      %p211 = por %p209, %p210
      %p212 = scmp.ne.s32.totalorder %s203, %s204
      %p213 = scmp.eq.s32.totalorder %s46, 0
      %p214 = por %p212, %p213
      %p215 = scmp.ne.s32.totalorder %s203, %s204
      %p216 = scmp.eq.s32.totalorder %s47, 1
      %p217 = por %p215, %p216
      %p219 = scmp.ne.s32.totalorder %s204, %s218
      %p220 = scmp.eq.s32.totalorder %s47, 0
      %p221 = por %p219, %p220
      %s223 = sadd.s32 %s222, 1
      %p226 = scmp.eq.s32.totalorder %s41, 1
      %p227 = scmp.ne.s32.totalorder %s222, %s224
      %p228 = scmp.eq.s32.totalorder %s41, 0
      %p229 = por %p227, %p228
      %p230 = scmp.ne.s32.totalorder %s222, %s224
      %p231 = scmp.eq.s32.totalorder %s46, 1
      %p232 = por %p230, %p231
      %p233 = scmp.ne.s32.totalorder %s224, %s225
      %p234 = scmp.eq.s32.totalorder %s46, 0
      %p235 = por %p233, %p234
      %p236 = scmp.ne.s32.totalorder %s224, %s225
      %p237 = scmp.eq.s32.totalorder %s47, 1
      %p238 = por %p236, %p237
      %p240 = scmp.ne.s32.totalorder %s225, %s239
      %p241 = scmp.eq.s32.totalorder %s47, 0
      %p242 = por %p240, %p241
      %s244 = sadd.s32 %s243, 1
      %p247 = scmp.eq.s32.totalorder %s41, 1
      %p248 = scmp.ne.s32.totalorder %s243, %s245
      %p249 = scmp.eq.s32.totalorder %s41, 0
      %p250 = por %p248, %p249
      %p251 = scmp.ne.s32.totalorder %s243, %s245
      %p252 = scmp.eq.s32.totalorder %s46, 1
      %p253 = por %p251, %p252
      %p254 = scmp.ne.s32.totalorder %s245, %s246
      %p255 = scmp.eq.s32.totalorder %s46, 0
      %p256 = por %p254, %p255
      %p257 = scmp.ne.s32.totalorder %s245, %s246
      %p258 = scmp.eq.s32.totalorder %s47, 1
      %p259 = por %p257, %p258
      %p261 = scmp.ne.s32.totalorder %s246, %s260
      %p262 = scmp.eq.s32.totalorder %s47, 0
      %p263 = por %p261, %p262
      %s265 = sadd.s32 %s264, 1
      %p268 = scmp.eq.s32.totalorder %s41, 1
      %p269 = scmp.ne.s32.totalorder %s264, %s266
      %p270 = scmp.eq.s32.totalorder %s41, 0
      %p271 = por %p269, %p270
      %p272 = scmp.ne.s32.totalorder %s264, %s266
      %p273 = scmp.eq.s32.totalorder %s46, 1
      %p274 = por %p272, %p273
      %p275 = scmp.ne.s32.totalorder %s266, %s267
      %p276 = scmp.eq.s32.totalorder %s46, 0
      %p277 = por %p275, %p276
      %p278 = scmp.ne.s32.totalorder %s266, %s267
      %p279 = scmp.eq.s32.totalorder %s47, 1
      %p280 = por %p278, %p279
      %p282 = scmp.ne.s32.totalorder %s267, %s281
      %p283 = scmp.eq.s32.totalorder %s47, 0
      %p284 = por %p282, %p283
      %s286 = sadd.s32 %s285, 1
      %p289 = scmp.eq.s32.totalorder %s41, 1
      %p290 = scmp.ne.s32.totalorder %s285, %s287
      %p291 = scmp.eq.s32.totalorder %s41, 0
      %p292 = por %p290, %p291
      %p293 = scmp.ne.s32.totalorder %s285, %s287
      %p294 = scmp.eq.s32.totalorder %s46, 1
      %p295 = por %p293, %p294
      %p296 = scmp.ne.s32.totalorder %s287, %s288
      %p297 = scmp.eq.s32.totalorder %s46, 0
      %p298 = por %p296, %p297
      %p299 = scmp.ne.s32.totalorder %s287, %s288
      %p300 = scmp.eq.s32.totalorder %s47, 1
      %p301 = por %p299, %p300
      %p303 = scmp.ne.s32.totalorder %s288, %s302
      %p304 = scmp.eq.s32.totalorder %s47, 0
      %p305 = por %p303, %p304
      %s307 = sadd.s32 %s306, 1
      %p310 = scmp.eq.s32.totalorder %s41, 1
      %p311 = scmp.ne.s32.totalorder %s306, %s308
      %p312 = scmp.eq.s32.totalorder %s41, 0
      %p313 = por %p311, %p312
      %p314 = scmp.ne.s32.totalorder %s306, %s308
      %p315 = scmp.eq.s32.totalorder %s46, 1
      %p316 = por %p314, %p315
      %p317 = scmp.ne.s32.totalorder %s308, %s309
      %p318 = scmp.eq.s32.totalorder %s46, 0
      %p319 = por %p317, %p318
      %p320 = scmp.ne.s32.totalorder %s308, %s309
      %p321 = scmp.eq.s32.totalorder %s47, 1
      %p322 = por %p320, %p321
      %p324 = scmp.ne.s32.totalorder %s309, %s323
      %p325 = scmp.eq.s32.totalorder %s47, 0
      %p326 = por %p324, %p325
      %s328 = sadd.s32 %s327, 1
      %p331 = scmp.eq.s32.totalorder %s41, 1
      %p332 = scmp.ne.s32.totalorder %s327, %s329
      %p333 = scmp.eq.s32.totalorder %s41, 0
      %p334 = por %p332, %p333
      %p335 = scmp.ne.s32.totalorder %s327, %s329
      %p336 = scmp.eq.s32.totalorder %s46, 1
      %p337 = por %p335, %p336
      %p338 = scmp.ne.s32.totalorder %s329, %s330
      %p339 = scmp.eq.s32.totalorder %s46, 0
      %p340 = por %p338, %p339
      %p341 = scmp.ne.s32.totalorder %s329, %s330
      %p342 = scmp.eq.s32.totalorder %s47, 1
      %p343 = por %p341, %p342
      %p345 = scmp.ne.s32.totalorder %s330, %s344
      %p346 = scmp.eq.s32.totalorder %s47, 0
      %p347 = por %p345, %p346
      %s349 = sadd.s32 %s348, 1
      %p352 = scmp.eq.s32.totalorder %s41, 1
      %p353 = scmp.ne.s32.totalorder %s348, %s350
      %p354 = scmp.eq.s32.totalorder %s41, 0
      %p355 = por %p353, %p354
      %p356 = scmp.ne.s32.totalorder %s348, %s350
      %p357 = scmp.eq.s32.totalorder %s46, 1
      %p358 = por %p356, %p357
      %p359 = scmp.ne.s32.totalorder %s350, %s351
      %p360 = scmp.eq.s32.totalorder %s46, 0
      %p361 = por %p359, %p360
      %p362 = scmp.ne.s32.totalorder %s350, %s351
      %p363 = scmp.eq.s32.totalorder %s47, 1
      %p364 = por %p362, %p363
      %p366 = scmp.ne.s32.totalorder %s351, %s365
      %p367 = scmp.eq.s32.totalorder %s47, 0
      %p368 = por %p366, %p367
      %s370 = sadd.s32 %s369, 1
      %p373 = scmp.eq.s32.totalorder %s41, 1
      %p374 = scmp.ne.s32.totalorder %s369, %s371
      %p375 = scmp.eq.s32.totalorder %s41, 0
      %p376 = por %p374, %p375
      %p377 = scmp.ne.s32.totalorder %s369, %s371
      %p378 = scmp.eq.s32.totalorder %s46, 1
      %p379 = por %p377, %p378
      %p380 = scmp.ne.s32.totalorder %s371, %s372
      %p381 = scmp.eq.s32.totalorder %s46, 0
      %p382 = por %p380, %p381
      %p383 = scmp.ne.s32.totalorder %s371, %s372
      %p384 = scmp.eq.s32.totalorder %s47, 1
      %p385 = por %p383, %p384
      %p387 = scmp.ne.s32.totalorder %s372, %s386
      %p388 = scmp.eq.s32.totalorder %s47, 0
      %p389 = por %p387, %p388
      %s391 = sadd.s32 %s390, 1
      %p394 = scmp.eq.s32.totalorder %s41, 1
      %p395 = scmp.ne.s32.totalorder %s390, %s392
      %p396 = scmp.eq.s32.totalorder %s41, 0
      %p397 = por %p395, %p396
      %p398 = scmp.ne.s32.totalorder %s390, %s392
      %p399 = scmp.eq.s32.totalorder %s46, 1
      %p400 = por %p398, %p399
      %p401 = scmp.ne.s32.totalorder %s392, %s393
      %p402 = scmp.eq.s32.totalorder %s46, 0
      %p403 = por %p401, %p402
      %p404 = scmp.ne.s32.totalorder %s392, %s393
      %p405 = scmp.eq.s32.totalorder %s47, 1
      %p406 = por %p404, %p405
      %p408 = scmp.ne.s32.totalorder %s393, %s407
      %p409 = scmp.eq.s32.totalorder %s47, 0
      %p410 = por %p408, %p409
      %s412 = sadd.s32 %s411, 1
      %p415 = scmp.eq.s32.totalorder %s41, 1
      %p416 = scmp.ne.s32.totalorder %s411, %s413
      %p417 = scmp.eq.s32.totalorder %s41, 0
      %p418 = por %p416, %p417
      %p419 = scmp.ne.s32.totalorder %s411, %s413
      %p420 = scmp.eq.s32.totalorder %s46, 1
      %p421 = por %p419, %p420
      %p422 = scmp.ne.s32.totalorder %s413, %s414
      %p423 = scmp.eq.s32.totalorder %s46, 0
      %p424 = por %p422, %p423
      %p425 = scmp.ne.s32.totalorder %s413, %s414
      %p426 = scmp.eq.s32.totalorder %s47, 1
      %p427 = por %p425, %p426
      %p429 = scmp.ne.s32.totalorder %s414, %s428
      %p430 = scmp.eq.s32.totalorder %s47, 0
      %p431 = por %p429, %p430
      %s433 = sadd.s32 %s432, 1
      %p436 = scmp.eq.s32.totalorder %s41, 1
      %p437 = scmp.ne.s32.totalorder %s432, %s434
      %p438 = scmp.eq.s32.totalorder %s41, 0
      %p439 = por %p437, %p438
      %p440 = scmp.ne.s32.totalorder %s432, %s434
      %p441 = scmp.eq.s32.totalorder %s46, 1
      %p442 = por %p440, %p441
      %p443 = scmp.ne.s32.totalorder %s434, %s435
      %p444 = scmp.eq.s32.totalorder %s46, 0
      %p445 = por %p443, %p444
      %p446 = scmp.ne.s32.totalorder %s434, %s435
      %p447 = scmp.eq.s32.totalorder %s47, 1
      %p448 = por %p446, %p447
      %p450 = scmp.ne.s32.totalorder %s435, %s449
      %p451 = scmp.eq.s32.totalorder %s47, 0
      %p452 = por %p450, %p451
      %s454 = sadd.s32 %s453, 1
      %p457 = scmp.eq.s32.totalorder %s41, 1
      %p458 = scmp.ne.s32.totalorder %s453, %s455
      %p459 = scmp.eq.s32.totalorder %s41, 0
      %p460 = por %p458, %p459
      %p461 = scmp.ne.s32.totalorder %s453, %s455
      %p462 = scmp.eq.s32.totalorder %s46, 1
      %p463 = por %p461, %p462
      %p464 = scmp.ne.s32.totalorder %s455, %s456
      %p465 = scmp.eq.s32.totalorder %s46, 0
      %p466 = por %p464, %p465
      %p467 = scmp.ne.s32.totalorder %s455, %s456
      %p468 = scmp.eq.s32.totalorder %s47, 1
      %p469 = por %p467, %p468
      %p471 = scmp.ne.s32.totalorder %s456, %s470
      %p472 = scmp.eq.s32.totalorder %s47, 0
      %p473 = por %p471, %p472
      %s475 = sadd.s32 %s474, 1
      %p478 = scmp.eq.s32.totalorder %s41, 1
      %p479 = scmp.ne.s32.totalorder %s474, %s476
      %p480 = scmp.eq.s32.totalorder %s41, 0
      %p481 = por %p479, %p480
      %p482 = scmp.ne.s32.totalorder %s474, %s476
      %p483 = scmp.eq.s32.totalorder %s46, 1
      %p484 = por %p482, %p483
      %p485 = scmp.ne.s32.totalorder %s476, %s477
      %p486 = scmp.eq.s32.totalorder %s46, 0
      %p487 = por %p485, %p486
      %p488 = scmp.ne.s32.totalorder %s476, %s477
      %p489 = scmp.eq.s32.totalorder %s47, 1
      %p490 = por %p488, %p489
      %p492 = scmp.ne.s32.totalorder %s477, %s491
      %p493 = scmp.eq.s32.totalorder %s47, 0
      %p494 = por %p492, %p493
      %s496 = sadd.s32 %s495, 1
      %p499 = scmp.eq.s32.totalorder %s41, 1
      %p500 = scmp.ne.s32.totalorder %s495, %s497
      %p501 = scmp.eq.s32.totalorder %s41, 0
      %p502 = por %p500, %p501
      %p503 = scmp.ne.s32.totalorder %s495, %s497
      %p504 = scmp.eq.s32.totalorder %s46, 1
      %p505 = por %p503, %p504
      %p506 = scmp.ne.s32.totalorder %s497, %s498
      %p507 = scmp.eq.s32.totalorder %s46, 0
      %p508 = por %p506, %p507
      %p509 = scmp.ne.s32.totalorder %s497, %s498
      %p510 = scmp.eq.s32.totalorder %s47, 1
      %p511 = por %p509, %p510
      %p513 = scmp.ne.s32.totalorder %s498, %s512
      %p514 = scmp.eq.s32.totalorder %s47, 0
      %p515 = por %p513, %p514
      %s517 = sadd.s32 %s516, 1
      %p520 = scmp.eq.s32.totalorder %s41, 1
      %p521 = scmp.ne.s32.totalorder %s516, %s518
      %p522 = scmp.eq.s32.totalorder %s41, 0
      %p523 = por %p521, %p522
      %p524 = scmp.ne.s32.totalorder %s516, %s518
      %p525 = scmp.eq.s32.totalorder %s46, 1
      %p526 = por %p524, %p525
      %p527 = scmp.ne.s32.totalorder %s518, %s519
      %p528 = scmp.eq.s32.totalorder %s46, 0
      %p529 = por %p527, %p528
      %p530 = scmp.ne.s32.totalorder %s518, %s519
      %p531 = scmp.eq.s32.totalorder %s47, 1
      %p532 = por %p530, %p531
      %p534 = scmp.ne.s32.totalorder %s519, %s533
      %p535 = scmp.eq.s32.totalorder %s47, 0
      %p536 = por %p534, %p535
      %s538 = sadd.s32 %s537, 1
      %p541 = scmp.eq.s32.totalorder %s41, 1
      %p542 = scmp.ne.s32.totalorder %s537, %s539
      %p543 = scmp.eq.s32.totalorder %s41, 0
      %p544 = por %p542, %p543
      %p545 = scmp.ne.s32.totalorder %s537, %s539
      %p546 = scmp.eq.s32.totalorder %s46, 1
      %p547 = por %p545, %p546
      %p548 = scmp.ne.s32.totalorder %s539, %s540
      %p549 = scmp.eq.s32.totalorder %s46, 0
      %p550 = por %p548, %p549
      %p551 = scmp.ne.s32.totalorder %s539, %s540
      %p552 = scmp.eq.s32.totalorder %s47, 1
      %p553 = por %p551, %p552
      %p555 = scmp.ne.s32.totalorder %s540, %s554
      %p556 = scmp.eq.s32.totalorder %s47, 0
      %p557 = por %p555, %p556
      %s559 = sadd.s32 %s558, 1
      %p562 = scmp.eq.s32.totalorder %s41, 1
      %p563 = scmp.ne.s32.totalorder %s558, %s560
      %p564 = scmp.eq.s32.totalorder %s41, 0
      %p565 = por %p563, %p564
      %p566 = scmp.ne.s32.totalorder %s558, %s560
      %p567 = scmp.eq.s32.totalorder %s46, 1
      %p568 = por %p566, %p567
      %p569 = scmp.ne.s32.totalorder %s560, %s561
      %p570 = scmp.eq.s32.totalorder %s46, 0
      %p571 = por %p569, %p570
      %p572 = scmp.ne.s32.totalorder %s560, %s561
      %p573 = scmp.eq.s32.totalorder %s47, 1
      %p574 = por %p572, %p573
      %p576 = scmp.ne.s32.totalorder %s561, %s575
      %p577 = scmp.eq.s32.totalorder %s47, 0
      %p578 = por %p576, %p577
      %s579 = ssub.s32 %s41, %s48
      %p580 = scmp.eq.s32.totalorder %s579, 0
      %s582 = sadd.s32 %s581, 1
      %s583 = scalar_select %p580, %s581, %s582
      %p586 = pneg %p580
      %p587 = scmp.eq.s32.totalorder %s41, 1
      %p588 = por %p586, %p587
      %p589 = scmp.ne.s32.totalorder %s581, %s584
      %p590 = scmp.eq.s32.totalorder %s41, 0
      %p591 = por %p589, %p590
      %p592 = scmp.ne.s32.totalorder %s581, %s584
      %p593 = scmp.eq.s32.totalorder %s46, 1
      %p594 = por %p592, %p593
      %p595 = scmp.ne.s32.totalorder %s584, %s585
      %p596 = scmp.eq.s32.totalorder %s46, 0
      %p597 = por %p595, %p596
      %p598 = scmp.ne.s32.totalorder %s584, %s585
      %p599 = scmp.eq.s32.totalorder %s47, 1
      %p600 = por %p598, %p599
      %p602 = scmp.ne.s32.totalorder %s585, %s601
      %p603 = scmp.eq.s32.totalorder %s47, 0
      %p604 = por %p602, %p603
      %p605 = scmp.le.s32.totalorder 1, %s41
      %p606 = scmp.lt.s32.totalorder %s41, 3
      %p607 = pnand %p605, %p606
      %p608 = pneg %p607
      // Predicated region
      $region9: #{tpu_custom_call.1} parent=5 // pred_check
        _
      $region10: #{tpu_custom_call.1} parent=5 // pred_check_branch
        %610 = sbr.rel (%p607) target = $region12
      $region11: #{tpu_custom_call.1} parent=5 // pred_region
        %s611 = ssub.s32 %s41, 1
        // Predicated region
        $region13: #{tpu_custom_call.1} parent=11 // pred_check
          %p612 = pneg %p88
        $region14: #{tpu_custom_call.1} parent=11 // pred_check_branch
          %614 = sbr.rel (%p612) target = $region16
        $region15: #{tpu_custom_call.1} parent=11 // pred_region
          _
        $region16: #{tpu_custom_call.1} parent=11 // pred_fallthru
          _
        // Predicated region
        $region17: #{tpu_custom_call.1} parent=11 // pred_check
          %p615 = pneg %p109
        $region18: #{tpu_custom_call.1} parent=11 // pred_check_branch
          %617 = sbr.rel (%p615) target = $region20
        $region19: #{tpu_custom_call.1} parent=11 // pred_region
          %619 = vsyncadd [#allocation4], 0
          %s621 = sshll.u32 %s2, 4
          %s622 = int_to_ptr.hbm [resolvable:$true] %s621
          %s623 = sshll.u32 [#allocation3], 4
          %s624 = int_to_ptr.vmem [resolvable:$true] %s623
          %626 = dma.hbm_to_vmem [thread:$0]  %s622, 16, %s624, [#allocation4]
        $region20: #{tpu_custom_call.1} parent=11 // pred_fallthru
          _
        // Predicated region
        $region21: #{tpu_custom_call.1} parent=11 // pred_check
          %p627 = pneg %p130
        $region22: #{tpu_custom_call.1} parent=11 // pred_check_branch
          %629 = sbr.rel (%p627) target = $region24
        $region23: #{tpu_custom_call.1} parent=11 // pred_region
          _
        $region24: #{tpu_custom_call.1} parent=11 // pred_fallthru
          _
        // Predicated region
        $region25: #{tpu_custom_call.1} parent=11 // pred_check
          %p630 = pneg %p151
        $region26: #{tpu_custom_call.1} parent=11 // pred_check_branch
          %632 = sbr.rel (%p630) target = $region28
        $region27: #{tpu_custom_call.1} parent=11 // pred_region
          %634 = vsyncadd [#allocation7], 0
          %s636 = sshll.u32 %s4, 4
          %s637 = int_to_ptr.hbm [resolvable:$true] %s636
          %s638 = sshll.u32 [#allocation6], 4
          %s639 = int_to_ptr.vmem [resolvable:$true] %s638
          %641 = dma.hbm_to_vmem [thread:$0]  %s637, 16, %s639, [#allocation7]
        $region28: #{tpu_custom_call.1} parent=11 // pred_fallthru
          _
        // Predicated region
        $region29: #{tpu_custom_call.1} parent=11 // pred_check
          %p642 = pneg %p172
        $region30: #{tpu_custom_call.1} parent=11 // pred_check_branch
          %644 = sbr.rel (%p642) target = $region32
        $region31: #{tpu_custom_call.1} parent=11 // pred_region
          _
        $region32: #{tpu_custom_call.1} parent=11 // pred_fallthru
          _
        // Predicated region
        $region33: #{tpu_custom_call.1} parent=11 // pred_check
          %p645 = pneg %p193
        $region34: #{tpu_custom_call.1} parent=11 // pred_check_branch
          %647 = sbr.rel (%p645) target = $region36
        $region35: #{tpu_custom_call.1} parent=11 // pred_region
          %649 = vsyncadd [#allocation7], 0
          %s651 = sshll.u32 %s6, 4
          %s652 = int_to_ptr.hbm [resolvable:$true] %s651
          %s653 = sshll.u32 [#allocation8], 4
          %s654 = int_to_ptr.vmem [resolvable:$true] %s653
          %656 = dma.hbm_to_vmem [thread:$0]  %s652, 16, %s654, [#allocation7]
        $region36: #{tpu_custom_call.1} parent=11 // pred_fallthru
          _
        // Predicated region
        $region37: #{tpu_custom_call.1} parent=11 // pred_check
          %p657 = pneg %p214
        $region38: #{tpu_custom_call.1} parent=11 // pred_check_branch
          %659 = sbr.rel (%p657) target = $region40
        $region39: #{tpu_custom_call.1} parent=11 // pred_region
          %661 = vsyncadd [#allocation10], 0
          %s662 = sshll.u32 %s7, 4
          %s663 = int_to_ptr.hbm [resolvable:$true] %s662
          %s664 = sshll.u32 [#allocation9], 4
          %s665 = int_to_ptr.vmem [resolvable:$true] %s664
          %670 = dma.hbm_to_vmem [thread:$0]  %s663, 256, %s665, [#allocation10], 64, 64, 4
        $region40: #{tpu_custom_call.1} parent=11 // pred_fallthru
          _
        // Predicated region
        $region41: #{tpu_custom_call.1} parent=11 // pred_check
          %p671 = pneg %p235
        $region42: #{tpu_custom_call.1} parent=11 // pred_check_branch
          %673 = sbr.rel (%p671) target = $region44
        $region43: #{tpu_custom_call.1} parent=11 // pred_region
          %675 = vsyncadd [#allocation10], 0
          %s677 = sshll.u32 %s8, 4
          %s678 = int_to_ptr.hbm [resolvable:$true] %s677
          %s679 = sshll.u32 [#allocation11], 4
          %s680 = int_to_ptr.vmem [resolvable:$true] %s679
          %682 = dma.hbm_to_vmem [thread:$0]  %s678, 16, %s680, [#allocation10]
        $region44: #{tpu_custom_call.1} parent=11 // pred_fallthru
          _
        // Predicated region
        $region45: #{tpu_custom_call.1} parent=11 // pred_check
          %p683 = pneg %p256
        $region46: #{tpu_custom_call.1} parent=11 // pred_check_branch
          %685 = sbr.rel (%p683) target = $region48
        $region47: #{tpu_custom_call.1} parent=11 // pred_region
          %687 = vsyncadd [#allocation13], 0
          %s689 = sshll.u32 %s9, 4
          %s690 = int_to_ptr.hbm [resolvable:$true] %s689
          %s691 = sshll.u32 [#allocation12], 4
          %s692 = int_to_ptr.vmem [resolvable:$true] %s691
          %694 = dma.hbm_to_vmem [thread:$0]  %s690, 16, %s692, [#allocation13]
        $region48: #{tpu_custom_call.1} parent=11 // pred_fallthru
          _
        // Predicated region
        $region49: #{tpu_custom_call.1} parent=11 // pred_check
          %p695 = pneg %p277
        $region50: #{tpu_custom_call.1} parent=11 // pred_check_branch
          %697 = sbr.rel (%p695) target = $region52
        $region51: #{tpu_custom_call.1} parent=11 // pred_region
          %699 = vsyncadd [#allocation13], 0
          %s701 = sshll.u32 %s10, 4
          %s702 = int_to_ptr.hbm [resolvable:$true] %s701
          %s703 = sshll.u32 [#allocation14], 4
          %s704 = int_to_ptr.vmem [resolvable:$true] %s703
          %706 = dma.hbm_to_vmem [thread:$0]  %s702, 16, %s704, [#allocation13]
        $region52: #{tpu_custom_call.1} parent=11 // pred_fallthru
          _
        // Predicated region
        $region53: #{tpu_custom_call.1} parent=11 // pred_check
          %p707 = pneg %p298
        $region54: #{tpu_custom_call.1} parent=11 // pred_check_branch
          %709 = sbr.rel (%p707) target = $region56
        $region55: #{tpu_custom_call.1} parent=11 // pred_region
          _
        $region56: #{tpu_custom_call.1} parent=11 // pred_fallthru
          _
        // Predicated region
        $region57: #{tpu_custom_call.1} parent=11 // pred_check
          %p710 = pneg %p319
        $region58: #{tpu_custom_call.1} parent=11 // pred_check_branch
          %712 = sbr.rel (%p710) target = $region60
        $region59: #{tpu_custom_call.1} parent=11 // pred_region
          %714 = vsyncadd [#allocation16], 0
          %s716 = sshll.u32 %s12, 4
          %s717 = int_to_ptr.hbm [resolvable:$true] %s716
          %s718 = sshll.u32 [#allocation15], 4
          %s719 = int_to_ptr.vmem [resolvable:$true] %s718
          %721 = dma.hbm_to_vmem [thread:$0]  %s717, 16, %s719, [#allocation16]
        $region60: #{tpu_custom_call.1} parent=11 // pred_fallthru
          _
        // Predicated region
        $region61: #{tpu_custom_call.1} parent=11 // pred_check
          %p722 = pneg %p340
        $region62: #{tpu_custom_call.1} parent=11 // pred_check_branch
          %724 = sbr.rel (%p722) target = $region64
        $region63: #{tpu_custom_call.1} parent=11 // pred_region
          _
        $region64: #{tpu_custom_call.1} parent=11 // pred_fallthru
          _
        // Predicated region
        $region65: #{tpu_custom_call.1} parent=11 // pred_check
          %p725 = pneg %p361
        $region66: #{tpu_custom_call.1} parent=11 // pred_check_branch
          %727 = sbr.rel (%p725) target = $region68
        $region67: #{tpu_custom_call.1} parent=11 // pred_region
          %729 = vsyncadd [#allocation16], 0
          %s731 = sshll.u32 %s14, 4
          %s732 = int_to_ptr.hbm [resolvable:$true] %s731
          %s733 = sshll.u32 [#allocation17], 4
          %s734 = int_to_ptr.vmem [resolvable:$true] %s733
          %736 = dma.hbm_to_vmem [thread:$0]  %s732, 16, %s734, [#allocation16]
        $region68: #{tpu_custom_call.1} parent=11 // pred_fallthru
          _
        // Predicated region
        $region69: #{tpu_custom_call.1} parent=11 // pred_check
          %p737 = pneg %p382
        $region70: #{tpu_custom_call.1} parent=11 // pred_check_branch
          %739 = sbr.rel (%p737) target = $region72
        $region71: #{tpu_custom_call.1} parent=11 // pred_region
          %741 = vsyncadd [#allocation19], 0
          %s743 = sshll.u32 %s15, 4
          %s744 = int_to_ptr.hbm [resolvable:$true] %s743
          %s745 = sshll.u32 [#allocation18], 4
          %s746 = int_to_ptr.vmem [resolvable:$true] %s745
          %748 = dma.hbm_to_vmem [thread:$0]  %s744, 16, %s746, [#allocation19]
        $region72: #{tpu_custom_call.1} parent=11 // pred_fallthru
          _
        // Predicated region
        $region73: #{tpu_custom_call.1} parent=11 // pred_check
          %p749 = pneg %p403
        $region74: #{tpu_custom_call.1} parent=11 // pred_check_branch
          %751 = sbr.rel (%p749) target = $region76
        $region75: #{tpu_custom_call.1} parent=11 // pred_region
          %753 = vsyncadd [#allocation19], 0
          %s755 = sshll.u32 %s16, 4
          %s756 = int_to_ptr.hbm [resolvable:$true] %s755
          %s757 = sshll.u32 [#allocation20], 4
          %s758 = int_to_ptr.vmem [resolvable:$true] %s757
          %760 = dma.hbm_to_vmem [thread:$0]  %s756, 16, %s758, [#allocation19]
        $region76: #{tpu_custom_call.1} parent=11 // pred_fallthru
          _
        // Predicated region
        $region77: #{tpu_custom_call.1} parent=11 // pred_check
          %p761 = pneg %p424
        $region78: #{tpu_custom_call.1} parent=11 // pred_check_branch
          %763 = sbr.rel (%p761) target = $region80
        $region79: #{tpu_custom_call.1} parent=11 // pred_region
          _
        $region80: #{tpu_custom_call.1} parent=11 // pred_fallthru
          _
        // Predicated region
        $region81: #{tpu_custom_call.1} parent=11 // pred_check
          %p764 = pneg %p445
        $region82: #{tpu_custom_call.1} parent=11 // pred_check_branch
          %766 = sbr.rel (%p764) target = $region84
        $region83: #{tpu_custom_call.1} parent=11 // pred_region
          _
        $region84: #{tpu_custom_call.1} parent=11 // pred_fallthru
          _
        // Predicated region
        $region85: #{tpu_custom_call.1} parent=11 // pred_check
          %p767 = pneg %p466
        $region86: #{tpu_custom_call.1} parent=11 // pred_check_branch
          %769 = sbr.rel (%p767) target = $region88
        $region87: #{tpu_custom_call.1} parent=11 // pred_region
          _
        $region88: #{tpu_custom_call.1} parent=11 // pred_fallthru
          _
        // Predicated region
        $region89: #{tpu_custom_call.1} parent=11 // pred_check
          %p770 = pneg %p487
        $region90: #{tpu_custom_call.1} parent=11 // pred_check_branch
          %772 = sbr.rel (%p770) target = $region92
        $region91: #{tpu_custom_call.1} parent=11 // pred_region
          _
        $region92: #{tpu_custom_call.1} parent=11 // pred_fallthru
          _
        // Predicated region
        $region93: #{tpu_custom_call.1} parent=11 // pred_check
          %p773 = pneg %p508
        $region94: #{tpu_custom_call.1} parent=11 // pred_check_branch
          %775 = sbr.rel (%p773) target = $region96
        $region95: #{tpu_custom_call.1} parent=11 // pred_region
          %777 = vsyncadd [#allocation22], 0
          %s778 = sshll.u32 %s21, 4
          %s779 = int_to_ptr.hbm [resolvable:$true] %s778
          %s780 = sshll.u32 [#allocation21], 4
          %s781 = int_to_ptr.vmem [resolvable:$true] %s780
          %786 = dma.hbm_to_vmem [thread:$0]  %s779, 128, %s781, [#allocation22], 64, 64, 4
        $region96: #{tpu_custom_call.1} parent=11 // pred_fallthru
          _
        // Predicated region
        $region97: #{tpu_custom_call.1} parent=11 // pred_check
          %p787 = pneg %p529
        $region98: #{tpu_custom_call.1} parent=11 // pred_check_branch
          %789 = sbr.rel (%p787) target = $region100
        $region99: #{tpu_custom_call.1} parent=11 // pred_region
          _
        $region100: #{tpu_custom_call.1} parent=11 // pred_fallthru
          _
        // Predicated region
        $region101: #{tpu_custom_call.1} parent=11 // pred_check
          %p790 = pneg %p550
        $region102: #{tpu_custom_call.1} parent=11 // pred_check_branch
          %792 = sbr.rel (%p790) target = $region104
        $region103: #{tpu_custom_call.1} parent=11 // pred_region
          _
        $region104: #{tpu_custom_call.1} parent=11 // pred_fallthru
          _
        // Predicated region
        $region105: #{tpu_custom_call.1} parent=11 // pred_check
          %p793 = pneg %p571
        $region106: #{tpu_custom_call.1} parent=11 // pred_check_branch
          %795 = sbr.rel (%p793) target = $region108
        $region107: #{tpu_custom_call.1} parent=11 // pred_region
          _
        $region108: #{tpu_custom_call.1} parent=11 // pred_fallthru
          _
      $region12: #{tpu_custom_call.1} parent=5 // pred_fallthru
        _
      %p796 = scmp.lt.s32.totalorder %s41, 2
      // Predicated region
      $region109: #{tpu_custom_call.1} parent=5 // pred_check
        %p797 = pneg %p796
      $region110: #{tpu_custom_call.1} parent=5 // pred_check_branch
        %799 = sbr.rel (%p797) target = $region112
      $region111: #{tpu_custom_call.1} parent=5 // pred_region
        // Predicated region
        $region113: #{tpu_custom_call.1} parent=111 // pred_check
          %p800 = pneg %p61
        $region114: #{tpu_custom_call.1} parent=111 // pred_check_branch
          %802 = sbr.rel (%p800) target = $region116
        $region115: #{tpu_custom_call.1} parent=111 // pred_region
          %p803 = scmp.lt.s32.totalorder %s41, 1
          %s804 = scalar_select %p803, %s41, 1
          %s805 = smul.addr %s804, 8
          %s806 = scalar_lea.vmem %s0, %s805
        $region116: #{tpu_custom_call.1} parent=111 // pred_fallthru
          _
      $region112: #{tpu_custom_call.1} parent=5 // pred_fallthru
        _
      %p807 = scmp.le.s32.totalorder 1, %s41
      %p808 = scmp.lt.s32.totalorder %s41, 3
      %p809 = pnand %p807, %p808
      %p810 = pneg %p809
      // Predicated region
      $region117: #{tpu_custom_call.1} parent=5 // pred_check
        _
      $region118: #{tpu_custom_call.1} parent=5 // pred_check_branch
        %812 = sbr.rel (%p809) target = $region120
      $region119: #{tpu_custom_call.1} parent=5 // pred_region
        %s813 = ssub.s32 %s41, 1
        // Predicated region
        $region121: #{tpu_custom_call.1} parent=119 // pred_check
          %p814 = pneg %p109
        $region122: #{tpu_custom_call.1} parent=119 // pred_check_branch
          %816 = sbr.rel (%p814) target = $region124
        $region123: #{tpu_custom_call.1} parent=119 // pred_region
          %818 = dma.done [#allocation4], 16
        $region124: #{tpu_custom_call.1} parent=119 // pred_fallthru
          _
        // Predicated region
        $region125: #{tpu_custom_call.1} parent=119 // pred_check
          %p819 = pneg %p151
        $region126: #{tpu_custom_call.1} parent=119 // pred_check_branch
          %821 = sbr.rel (%p819) target = $region128
        $region127: #{tpu_custom_call.1} parent=119 // pred_region
          %823 = dma.done [#allocation7], 16
        $region128: #{tpu_custom_call.1} parent=119 // pred_fallthru
          _
        // Predicated region
        $region129: #{tpu_custom_call.1} parent=119 // pred_check
          %p824 = pneg %p193
        $region130: #{tpu_custom_call.1} parent=119 // pred_check_branch
          %826 = sbr.rel (%p824) target = $region132
        $region131: #{tpu_custom_call.1} parent=119 // pred_region
          %828 = dma.done [#allocation7], 16
        $region132: #{tpu_custom_call.1} parent=119 // pred_fallthru
          _
        // Predicated region
        $region133: #{tpu_custom_call.1} parent=119 // pred_check
          %p829 = pneg %p214
        $region134: #{tpu_custom_call.1} parent=119 // pred_check_branch
          %831 = sbr.rel (%p829) target = $region136
        $region135: #{tpu_custom_call.1} parent=119 // pred_region
          %833 = dma.done [#allocation10], 256
        $region136: #{tpu_custom_call.1} parent=119 // pred_fallthru
          _
        // Predicated region
        $region137: #{tpu_custom_call.1} parent=119 // pred_check
          %p834 = pneg %p235
        $region138: #{tpu_custom_call.1} parent=119 // pred_check_branch
          %836 = sbr.rel (%p834) target = $region140
        $region139: #{tpu_custom_call.1} parent=119 // pred_region
          %838 = dma.done [#allocation10], 16
        $region140: #{tpu_custom_call.1} parent=119 // pred_fallthru
          _
        // Predicated region
        $region141: #{tpu_custom_call.1} parent=119 // pred_check
          %p839 = pneg %p256
        $region142: #{tpu_custom_call.1} parent=119 // pred_check_branch
          %841 = sbr.rel (%p839) target = $region144
        $region143: #{tpu_custom_call.1} parent=119 // pred_region
          %843 = dma.done [#allocation13], 16
        $region144: #{tpu_custom_call.1} parent=119 // pred_fallthru
          _
        // Predicated region
        $region145: #{tpu_custom_call.1} parent=119 // pred_check
          %p844 = pneg %p277
        $region146: #{tpu_custom_call.1} parent=119 // pred_check_branch
          %846 = sbr.rel (%p844) target = $region148
        $region147: #{tpu_custom_call.1} parent=119 // pred_region
          %848 = dma.done [#allocation13], 16
        $region148: #{tpu_custom_call.1} parent=119 // pred_fallthru
          _
        // Predicated region
        $region149: #{tpu_custom_call.1} parent=119 // pred_check
          %p849 = pneg %p319
        $region150: #{tpu_custom_call.1} parent=119 // pred_check_branch
          %851 = sbr.rel (%p849) target = $region152
        $region151: #{tpu_custom_call.1} parent=119 // pred_region
          %853 = dma.done [#allocation16], 16
        $region152: #{tpu_custom_call.1} parent=119 // pred_fallthru
          _
        // Predicated region
        $region153: #{tpu_custom_call.1} parent=119 // pred_check
          %p854 = pneg %p361
        $region154: #{tpu_custom_call.1} parent=119 // pred_check_branch
          %856 = sbr.rel (%p854) target = $region156
        $region155: #{tpu_custom_call.1} parent=119 // pred_region
          %858 = dma.done [#allocation16], 16
        $region156: #{tpu_custom_call.1} parent=119 // pred_fallthru
          _
        // Predicated region
        $region157: #{tpu_custom_call.1} parent=119 // pred_check
          %p859 = pneg %p382
        $region158: #{tpu_custom_call.1} parent=119 // pred_check_branch
          %861 = sbr.rel (%p859) target = $region160
        $region159: #{tpu_custom_call.1} parent=119 // pred_region
          %863 = dma.done [#allocation19], 16
        $region160: #{tpu_custom_call.1} parent=119 // pred_fallthru
          _
        // Predicated region
        $region161: #{tpu_custom_call.1} parent=119 // pred_check
          %p864 = pneg %p403
        $region162: #{tpu_custom_call.1} parent=119 // pred_check_branch
          %866 = sbr.rel (%p864) target = $region164
        $region163: #{tpu_custom_call.1} parent=119 // pred_region
          %868 = dma.done [#allocation19], 16
        $region164: #{tpu_custom_call.1} parent=119 // pred_fallthru
          _
        // Predicated region
        $region165: #{tpu_custom_call.1} parent=119 // pred_check
          %p869 = pneg %p508
        $region166: #{tpu_custom_call.1} parent=119 // pred_check_branch
          %871 = sbr.rel (%p869) target = $region168
        $region167: #{tpu_custom_call.1} parent=119 // pred_region
          %873 = dma.done [#allocation22], 128
        $region168: #{tpu_custom_call.1} parent=119 // pred_fallthru
          _
        %p874 = scmp.lt.s32.totalorder %s46, 1
        %s875 = scalar_select %p874, %s46, 1
        %s876 = smul.addr %s875, 8
        %s877 = scalar_lea.vmem %s0, %s876
        %p878 = pneg %p67
        %p879 = pneg %p64
        %p880 = pneg %p88
        %p881 = pneg %p85
        %p882 = pneg %p109
        %p883 = pneg %p106
        %p884 = pneg %p130
        %p885 = pneg %p127
        %p886 = pneg %p151
        %p887 = pneg %p148
        %p888 = pneg %p172
        %p889 = pneg %p169
        %p890 = pneg %p193
        %p891 = pneg %p190
        %p892 = pneg %p214
        %p893 = pneg %p211
        %p894 = pneg %p235
        %p895 = pneg %p232
        %p896 = pneg %p256
        %p897 = pneg %p253
        %p898 = pneg %p277
        %p899 = pneg %p274
        %p900 = pneg %p298
        %p901 = pneg %p295
        %p902 = pneg %p319
        %p903 = pneg %p316
        %p904 = pneg %p340
        %p905 = pneg %p337
        %p906 = pneg %p361
        %p907 = pneg %p358
        %p908 = pneg %p382
        %p909 = pneg %p379
        %p910 = pneg %p403
        %p911 = pneg %p400
        %p912 = pneg %p424
        %p913 = pneg %p421
        %p914 = pneg %p445
        %p915 = pneg %p442
        %p916 = pneg %p466
        %p917 = pneg %p463
        %p918 = pneg %p487
        %p919 = pneg %p484
        %p920 = pneg %p508
        %p921 = pneg %p505
        %p922 = pneg %p529
        %p923 = pneg %p526
        %p924 = pneg %p550
        %p925 = pneg %p547
        %p926 = pneg %p571
        %p927 = pneg %p568
        %p928 = pneg %p597
        %p929 = pneg %p594
        %s930 = sand.u32 %s584, 1
        %s931 = scalar_lea.sflag [#allocation5], %s930
        %s932 = sand.u32 %s584, 1
        %s933 = smul.addr %s932, 8
        %s934 = scalar_lea.vmem [#allocation23], %s933
        %p935 = scmp.lt.s32.totalorder %s46, 1
        %s936 = scalar_select %p935, %s46, 1
        %s937 = smul.addr %s936, 8
        %s938 = scalar_lea.vmem %s0, %s937
        %v940 = vld [vmem:[%s938] sm:$0xff]
        %v941 = vpack.c.bf16 %v940, %v940
        %v942 = vld [vmem:[%s1] sm:$0xf]
        %v943 = vld [vmem:[%s1 + $0x4] sm:$0xf]
        %v944 = vld [vmem:[%s1 + $0x8] sm:$0xf]
        %v945 = vld [vmem:[%s1 + $0xc] sm:$0xf]
        %v946 = vld [vmem:[#allocation3] sm:$0x1]
        %v948 = vperm.slane %v946, 0
        %v954 = vunpack.c.l.b16 %v942
        %v955 = vunpack.c.l.b16 %v943
        %v956 = vunpack.c.l.b16 %v944
        %v957 = vunpack.c.l.b16 %v945
        %v958 = vpack.c.b16 %v955, %v954
        %v959 = vpack.c.b16 %v957, %v956
        %vm962 = vcmask 261120
        %v964 = vsel %vm962, %v941, 0
        %966 = vmatpush.bf16.msra.mxu0 0
        %967 = vmatpush.bf16.msra.mxu0 0
        %968 = vmatpush.bf16.msra.mxu0 0
        %969 = vmatpush.bf16.msra.mxu0 0
        %970 = vmatpush.bf16.msra.mxu0 0
        %971 = vmatpush.bf16.msra.mxu0 0
        %972 = vmatpush.bf16.msra.mxu0 %v959
        %973 = vmatpush.bf16.msra.mxu0 %v958
        %974 = vmatmul.bf16.gmra.mxu0 %v964
        %v975 = vpop.f32.mrf.mxu0
        %v976 = vadd.f32 %v948, %v975
        %v977 = vpop.f32.mrf.mxu0
        %978 = vdwg.mxu0
        %v979 = vld [vmem:[%s3] sm:$0xf]
        %v980 = vld [vmem:[%s3 + $0x4] sm:$0xf]
        %v981 = vld [vmem:[%s3 + $0x8] sm:$0xf]
        %v982 = vld [vmem:[%s3 + $0xc] sm:$0xf]
        %v983 = vld [vmem:[#allocation6] sm:$0x1]
        %v985 = vperm.slane %v983, 0
        %v991 = vunpack.c.l.b16 %v979
        %v992 = vunpack.c.l.b16 %v980
        %v993 = vunpack.c.l.b16 %v981
        %v994 = vunpack.c.l.b16 %v982
        %v995 = vpack.c.b16 %v992, %v991
        %v996 = vpack.c.b16 %v994, %v993
        %999 = vmatpush.bf16.msra.mxu0 0
        %1000 = vmatpush.bf16.msra.mxu0 0
        %1001 = vmatpush.bf16.msra.mxu0 0
        %1002 = vmatpush.bf16.msra.mxu0 0
        %1003 = vmatpush.bf16.msra.mxu0 0
        %1004 = vmatpush.bf16.msra.mxu0 0
        %1005 = vmatpush.bf16.msra.mxu0 %v996
        %1006 = vmatpush.bf16.msra.mxu0 %v995
        %1007 = vmatmul.bf16.gmra.mxu0 %v964
        %v1008 = vpop.f32.mrf.mxu0
        %v1009 = vadd.f32 %v985, %v1008
        %v1010 = vpop.f32.mrf.mxu0
        %1011 = vdwg.mxu0
        %v1012 = vld [vmem:[%s5] sm:$0xf]
        %v1013 = vld [vmem:[%s5 + $0x4] sm:$0xf]
        %v1014 = vld [vmem:[%s5 + $0x8] sm:$0xf]
        %v1015 = vld [vmem:[%s5 + $0xc] sm:$0xf]
        %v1016 = vld [vmem:[#allocation8] sm:$0x1]
        %v1018 = vperm.slane %v1016, 0
        %v1024 = vunpack.c.l.b16 %v1012
        %v1025 = vunpack.c.l.b16 %v1013
        %v1026 = vunpack.c.l.b16 %v1014
        %v1027 = vunpack.c.l.b16 %v1015
        %v1028 = vpack.c.b16 %v1025, %v1024
        %v1029 = vpack.c.b16 %v1027, %v1026
        %1032 = vmatpush.bf16.msra.mxu0 0
        %1033 = vmatpush.bf16.msra.mxu0 0
        %1034 = vmatpush.bf16.msra.mxu0 0
        %1035 = vmatpush.bf16.msra.mxu0 0
        %1036 = vmatpush.bf16.msra.mxu0 0
        %1037 = vmatpush.bf16.msra.mxu0 0
        %1038 = vmatpush.bf16.msra.mxu0 %v1029
        %1039 = vmatpush.bf16.msra.mxu0 %v1028
        %1040 = vmatmul.bf16.gmra.mxu0 %v964
        %v1041 = vpop.f32.mrf.mxu0
        %v1042 = vadd.f32 %v1018, %v1041
        %v1043 = vpop.f32.mrf.mxu0
        %1044 = vdwg.mxu0
        %v1045 = vpack.c.bf16 %v976, %v976
        %v1046 = vpack.c.bf16 %v1009, %v1009
        %v1047 = vpack.c.bf16 %v1042, %v1042
        %vm1048 = vcmask 64512
        %v1050 = vsel %vm1048, %v1045, 0
        %v1053 = vsel %vm1048, %v1046, 0
        %1055 = vmatpush.bf16.xpose.msra.mxu0 0
        %1056 = vmatpush.bf16.xpose.msra.mxu0 0
        %1057 = vmatpush.bf16.xpose.msra.mxu0 0
        %1058 = vmatpush.bf16.xpose.msra.mxu0 0
        %1059 = vmatpush.bf16.xpose.msra.mxu0 0
        %1060 = vmatpush.bf16.xpose.msra.mxu0 0
        %1061 = vmatpush.bf16.xpose.msra.mxu0 0
        %1062 = vmatpush.bf16.xpose.msra.mxu0 %v1053
        %1063 = vmatmul.bf16.gmra.mxu0 %v1050
        %v1064 = vpop.f32.mrf.mxu0
        %v1065 = vadd.f32 0.0, %v1064
        %v1066 = vpop.f32.mrf.mxu0
        %1067 = vdwg.mxu0
        %v1068 = vmul.f32 %v1065, 0.35355338
        %v1069 = vsel %vm1048, %v1068, -inf
        %1070 = vmax.xlane.f32.xlu0 %v1069
        %v1071 = vpop.xlane.xlu0 %1070
        %v1072 = vsub.f32 %v1068, %v1071
        %v1073 = vmul.f32 %v1072, 1.442695
        %v1074 = vpow.pop %v1073
        %v1075 = vsel %vm1048, %v1074, 0.0
        %1076 = vadd.xlane.f32.xlu0 %v1075
        %v1077 = vpop.xlane.xlu0 %1076
        %v1078 = vrcp.pop %v1077
        %v1079 = vmul.f32 %v1074, %v1078
        %v1080 = vpack.c.bf16 %v1079, %v1079
        %v1082 = vsel %vm1048, %v1080, 0
        %vm1084 = vcmask 1043456
        %v1086 = vsel %vm1084, %v1047, 0
        %1088 = vmatpush.bf16.msra.mxu0 0
        %1089 = vmatpush.bf16.msra.mxu0 0
        %1090 = vmatpush.bf16.msra.mxu0 0
        %1091 = vmatpush.bf16.msra.mxu0 0
        %1092 = vmatpush.bf16.msra.mxu0 0
        %1093 = vmatpush.bf16.msra.mxu0 0
        %1094 = vmatpush.bf16.msra.mxu0 0
        %1095 = vmatpush.bf16.msra.mxu0 %v1086
        %1096 = vmatmul.bf16.gmra.mxu0 %v1082
        %v1097 = vpop.f32.mrf.mxu0
        %v1098 = vadd.f32 0.0, %v1097
        %v1099 = vpop.f32.mrf.mxu0
        %1100 = vdwg.mxu0
        %1101 = vst.msk [vmem:[#allocation2] sm:$0xff] %vm1048, %v1098
        %v1103 = vunpack.c.l.b16 %v1045
        %v1104 = vpack.c.b16 %v1103, %v1103
        %1105 = vrot.lane.b32.xlu0 %v1104, 120
        %v1106 = vpop.permute.xlu0 %1105
        %v1108 = vunpack.c.l.b16 %v1046
        %v1109 = vpack.c.b16 %v1108, %v1108
        %1110 = vrot.lane.b32.xlu0 %v1109, 120
        %v1111 = vpop.permute.xlu0 %1110
        %v1113 = vsel %vm1048, %v1106, 0
        %v1116 = vsel %vm1048, %v1111, 0
        %1118 = vmatpush.bf16.xpose.msra.mxu0 0
        %1119 = vmatpush.bf16.xpose.msra.mxu0 0
        %1120 = vmatpush.bf16.xpose.msra.mxu0 0
        %1121 = vmatpush.bf16.xpose.msra.mxu0 0
        %1122 = vmatpush.bf16.xpose.msra.mxu0 0
        %1123 = vmatpush.bf16.xpose.msra.mxu0 0
        %1124 = vmatpush.bf16.xpose.msra.mxu0 0
        %1125 = vmatpush.bf16.xpose.msra.mxu0 %v1116
        %1126 = vmatmul.bf16.gmra.mxu0 %v1113
        %v1127 = vpop.f32.mrf.mxu0
        %v1128 = vadd.f32 0.0, %v1127
        %v1129 = vpop.f32.mrf.mxu0
        %1130 = vdwg.mxu0
        %v1131 = vmul.f32 %v1128, 0.35355338
        %v1132 = vsel %vm1048, %v1131, -inf
        %1133 = vmax.xlane.f32.xlu0 %v1132
        %v1134 = vpop.xlane.xlu0 %1133
        %v1135 = vsub.f32 %v1131, %v1134
        %v1136 = vmul.f32 %v1135, 1.442695
        %v1137 = vpow.pop %v1136
        %v1138 = vsel %vm1048, %v1137, 0.0
        %1139 = vadd.xlane.f32.xlu0 %v1138
        %v1140 = vpop.xlane.xlu0 %1139
        %v1141 = vrcp.pop %v1140
        %v1142 = vmul.f32 %v1137, %v1141
        %v1143 = vpack.c.bf16 %v1142, %v1142
        %v1145 = vunpack.c.l.b16 %v1047
        %v1146 = vpack.c.b16 %v1145, %v1145
        %1147 = vrot.lane.b32.xlu0 %v1146, 120
        %v1148 = vpop.permute.xlu0 %1147
        %v1150 = vsel %vm1048, %v1143, 0
        %v1153 = vsel %vm1084, %v1148, 0
        %1155 = vmatpush.bf16.msra.mxu0 0
        %1156 = vmatpush.bf16.msra.mxu0 0
        %1157 = vmatpush.bf16.msra.mxu0 0
        %1158 = vmatpush.bf16.msra.mxu0 0
        %1159 = vmatpush.bf16.msra.mxu0 0
        %1160 = vmatpush.bf16.msra.mxu0 0
        %1161 = vmatpush.bf16.msra.mxu0 0
        %1162 = vmatpush.bf16.msra.mxu0 %v1153
        %1163 = vmatmul.bf16.gmra.mxu0 %v1150
        %v1164 = vpop.f32.mrf.mxu0
        %v1165 = vadd.f32 0.0, %v1164
        %v1166 = vpop.f32.mrf.mxu0
        %1167 = vdwg.mxu0
        %1169 = vrot.lane.b32.xlu0 %v1165, 8
        %v1170 = vpop.permute.xlu0 %1169
        %vm1172 = vcmask 130112
        %1173 = vst.msk [vmem:[#allocation2] sm:$0xff] %vm1172, %v1170
        %1174 = vrot.lane.b32.xlu0 %v1104, 112
        %v1175 = vpop.permute.xlu0 %1174
        %1176 = vrot.lane.b32.xlu0 %v1109, 112
        %v1177 = vpop.permute.xlu0 %1176
        %v1179 = vsel %vm1048, %v1175, 0
        %v1182 = vsel %vm1048, %v1177, 0
        %1184 = vmatpush.bf16.xpose.msra.mxu0 0
        %1185 = vmatpush.bf16.xpose.msra.mxu0 0
        %1186 = vmatpush.bf16.xpose.msra.mxu0 0
        %1187 = vmatpush.bf16.xpose.msra.mxu0 0
        %1188 = vmatpush.bf16.xpose.msra.mxu0 0
        %1189 = vmatpush.bf16.xpose.msra.mxu0 0
        %1190 = vmatpush.bf16.xpose.msra.mxu0 0
        %1191 = vmatpush.bf16.xpose.msra.mxu0 %v1182
        %1192 = vmatmul.bf16.gmra.mxu0 %v1179
        %v1193 = vpop.f32.mrf.mxu0
        %v1194 = vadd.f32 0.0, %v1193
        %v1195 = vpop.f32.mrf.mxu0
        %1196 = vdwg.mxu0
        %v1197 = vmul.f32 %v1194, 0.35355338
        %v1198 = vsel %vm1048, %v1197, -inf
        %1199 = vmax.xlane.f32.xlu0 %v1198
        %v1200 = vpop.xlane.xlu0 %1199
        %v1201 = vsub.f32 %v1197, %v1200
        %v1202 = vmul.f32 %v1201, 1.442695
        %v1203 = vpow.pop %v1202
        %v1204 = vsel %vm1048, %v1203, 0.0
        %1205 = vadd.xlane.f32.xlu0 %v1204
        %v1206 = vpop.xlane.xlu0 %1205
        %v1207 = vrcp.pop %v1206
        %v1208 = vmul.f32 %v1203, %v1207
        %v1209 = vpack.c.bf16 %v1208, %v1208
        %1210 = vrot.lane.b32.xlu0 %v1146, 112
        %v1211 = vpop.permute.xlu0 %1210
        %v1213 = vsel %vm1048, %v1209, 0
        %v1216 = vsel %vm1084, %v1211, 0
        %1218 = vmatpush.bf16.msra.mxu0 0
        %1219 = vmatpush.bf16.msra.mxu0 0
        %1220 = vmatpush.bf16.msra.mxu0 0
        %1221 = vmatpush.bf16.msra.mxu0 0
        %1222 = vmatpush.bf16.msra.mxu0 0
        %1223 = vmatpush.bf16.msra.mxu0 0
        %1224 = vmatpush.bf16.msra.mxu0 0
        %1225 = vmatpush.bf16.msra.mxu0 %v1216
        %1226 = vmatmul.bf16.gmra.mxu0 %v1213
        %v1227 = vpop.f32.mrf.mxu0
        %v1228 = vadd.f32 0.0, %v1227
        %v1229 = vpop.f32.mrf.mxu0
        %1230 = vdwg.mxu0
        %1232 = vrot.lane.b32.xlu0 %v1228, 16
        %v1233 = vpop.permute.xlu0 %1232
        %vm1235 = vcmask 195712
        %1236 = vst.msk [vmem:[#allocation2] sm:$0xff] %vm1235, %v1233
        %1237 = vrot.lane.b32.xlu0 %v1104, 104
        %v1238 = vpop.permute.xlu0 %1237
        %1239 = vrot.lane.b32.xlu0 %v1109, 104
        %v1240 = vpop.permute.xlu0 %1239
        %v1242 = vsel %vm1048, %v1238, 0
        %v1245 = vsel %vm1048, %v1240, 0
        %1247 = vmatpush.bf16.xpose.msra.mxu0 0
        %1248 = vmatpush.bf16.xpose.msra.mxu0 0
        %1249 = vmatpush.bf16.xpose.msra.mxu0 0
        %1250 = vmatpush.bf16.xpose.msra.mxu0 0
        %1251 = vmatpush.bf16.xpose.msra.mxu0 0
        %1252 = vmatpush.bf16.xpose.msra.mxu0 0
        %1253 = vmatpush.bf16.xpose.msra.mxu0 0
        %1254 = vmatpush.bf16.xpose.msra.mxu0 %v1245
        %1255 = vmatmul.bf16.gmra.mxu0 %v1242
        %v1256 = vpop.f32.mrf.mxu0
        %v1257 = vadd.f32 0.0, %v1256
        %v1258 = vpop.f32.mrf.mxu0
        %1259 = vdwg.mxu0
        %v1260 = vmul.f32 %v1257, 0.35355338
        %v1261 = vsel %vm1048, %v1260, -inf
        %1262 = vmax.xlane.f32.xlu0 %v1261
        %v1263 = vpop.xlane.xlu0 %1262
        %v1264 = vsub.f32 %v1260, %v1263
        %v1265 = vmul.f32 %v1264, 1.442695
        %v1266 = vpow.pop %v1265
        %v1267 = vsel %vm1048, %v1266, 0.0
        %1268 = vadd.xlane.f32.xlu0 %v1267
        %v1269 = vpop.xlane.xlu0 %1268
        %v1270 = vrcp.pop %v1269
        %v1271 = vmul.f32 %v1266, %v1270
        %v1272 = vpack.c.bf16 %v1271, %v1271
        %1273 = vrot.lane.b32.xlu0 %v1146, 104
        %v1274 = vpop.permute.xlu0 %1273
        %v1276 = vsel %vm1048, %v1272, 0
        %v1279 = vsel %vm1084, %v1274, 0
        %1281 = vmatpush.bf16.msra.mxu0 0
        %1282 = vmatpush.bf16.msra.mxu0 0
        %1283 = vmatpush.bf16.msra.mxu0 0
        %1284 = vmatpush.bf16.msra.mxu0 0
        %1285 = vmatpush.bf16.msra.mxu0 0
        %1286 = vmatpush.bf16.msra.mxu0 0
        %1287 = vmatpush.bf16.msra.mxu0 0
        %1288 = vmatpush.bf16.msra.mxu0 %v1279
        %1289 = vmatmul.bf16.gmra.mxu0 %v1276
        %v1290 = vpop.f32.mrf.mxu0
        %v1291 = vadd.f32 0.0, %v1290
        %v1292 = vpop.f32.mrf.mxu0
        %1293 = vdwg.mxu0
        %1295 = vrot.lane.b32.xlu0 %v1291, 24
        %v1296 = vpop.permute.xlu0 %1295
        %vm1298 = vcmask 261312
        %1299 = vst.msk [vmem:[#allocation2] sm:$0xff] %vm1298, %v1296
        %v1300 = vld [vmem:[#allocation2] sm:$0xff]
        %v1301 = vpack.c.bf16 %v1300, %v1300
        %v1302 = vld [vmem:[#allocation9] sm:$0xf]
        %v1303 = vld [vmem:[#allocation9 + $0x4] sm:$0xf]
        %v1304 = vld [vmem:[#allocation9 + $0x8] sm:$0xf]
        %v1305 = vld [vmem:[#allocation9 + $0xc] sm:$0xf]
        %v1306 = vld [vmem:[#allocation11] sm:$0x1]
        %v1308 = vperm.slane %v1306, 0
        %v1314 = vunpack.c.l.b16 %v1302
        %v1315 = vunpack.c.l.b16 %v1303
        %v1316 = vunpack.c.l.b16 %v1304
        %v1317 = vunpack.c.l.b16 %v1305
        %v1318 = vpack.c.b16 %v1315, %v1314
        %v1319 = vpack.c.b16 %v1317, %v1316
        %v1323 = vsel %vm962, %v1301, 0
        %1325 = vmatpush.bf16.msra.mxu0 0
        %1326 = vmatpush.bf16.msra.mxu0 0
        %1327 = vmatpush.bf16.msra.mxu0 0
        %1328 = vmatpush.bf16.msra.mxu0 0
        %1329 = vmatpush.bf16.msra.mxu0 0
        %1330 = vmatpush.bf16.msra.mxu0 0
        %1331 = vmatpush.bf16.msra.mxu0 %v1319
        %1332 = vmatpush.bf16.msra.mxu0 %v1318
        %1333 = vmatmul.bf16.gmra.mxu0 %v1323
        %v1334 = vpop.f32.mrf.mxu0
        %v1335 = vadd.f32 %v1308, %v1334
        %v1336 = vpop.f32.mrf.mxu0
        %1337 = vdwg.mxu0
        %v1338 = vadd.f32 %v1335, %v940
        %v1339 = vld [vmem:[#allocation12] sm:$0x1]
        %v1340 = vld [vmem:[#allocation14] sm:$0x1]
        %v1341 = vsel %vm962, %v1338, 0.0
        %1342 = vadd.xlane.f32.xlu0 %v1341
        %v1343 = vpop.xlane.xlu0 %1342
        %v1344 = vrcp.pop 32.0
        %v1345 = vmul.f32 32.0, %v1344
        %v1346 = vsub.f32 1.0, %v1345
        %v1347 = vmul.f32 %v1344, %v1346
        %v1348 = vadd.f32 %v1344, %v1347
        %vm1349 = vweird.f32 %v1344
        %v1350 = vsel %vm1349, %v1344, %v1348
        %v1351 = vmul.f32 %v1343, %v1350
        %v1352 = vsub.f32 %v1338, %v1351
        %v1353 = vmul.f32 %v1352, %v1352
        %v1354 = vsel %vm962, %v1353, 0.0
        %1355 = vadd.xlane.f32.xlu0 %v1354
        %v1356 = vpop.xlane.xlu0 %1355
        %v1357 = vmul.f32 %v1356, %v1350
        %v1358 = vadd.f32 %v1357, 1e-12
        %v1359 = vrsqrt.pop %v1358
        %v1360 = vmul.f32 %v1359, %v1358
        %v1361 = vmul.f32 %v1360, %v1359
        %v1362 = vmul.f32 0.5, %v1361
        %v1363 = vsub.f32 1.5, %v1362
        %v1364 = vmul.f32 %v1359, %v1363
        %vm1365 = vweird.f32 %v1358
        %vm1366 = vweird.f32 %v1359
        %vm1367 = vmor %vm1365, %vm1366
        %v1368 = vsel %vm1367, %v1359, %v1364
        %v1369 = vmul.f32 %v1352, %v1368
        %v1371 = vperm.slane %v1339, 0
        %v1373 = vmul.f32 %v1369, %v1371
        %v1375 = vperm.slane %v1340, 0
        %v1377 = vadd.f32 %v1373, %v1375
        %v1378 = vpack.c.bf16 %v1377, %v1377
        %v1379 = vld [vmem:[%s11] sm:$0xf]
        %v1380 = vld [vmem:[%s11 + $0x4] sm:$0xf]
        %v1381 = vld [vmem:[%s11 + $0x8] sm:$0xf]
        %v1382 = vld [vmem:[%s11 + $0xc] sm:$0xf]
        %v1383 = vld [vmem:[#allocation15] sm:$0x1]
        %v1385 = vperm.slane %v1383, 0
        %v1391 = vunpack.c.l.b16 %v1379
        %v1392 = vunpack.c.l.b16 %v1380
        %v1393 = vunpack.c.l.b16 %v1381
        %v1394 = vunpack.c.l.b16 %v1382
        %v1395 = vpack.c.b16 %v1392, %v1391
        %v1396 = vpack.c.b16 %v1394, %v1393
        %v1400 = vsel %vm962, %v1378, 0
        %1402 = vmatpush.bf16.msra.mxu0 0
        %1403 = vmatpush.bf16.msra.mxu0 0
        %1404 = vmatpush.bf16.msra.mxu0 0
        %1405 = vmatpush.bf16.msra.mxu0 0
        %1406 = vmatpush.bf16.msra.mxu0 0
        %1407 = vmatpush.bf16.msra.mxu0 0
        %1408 = vmatpush.bf16.msra.mxu0 %v1396
        %1409 = vmatpush.bf16.msra.mxu0 %v1395
        %1410 = vmatmul.bf16.gmra.mxu0 %v1400
        %v1411 = vpop.f32.mrf.mxu0
        %v1412 = vadd.f32 %v1385, %v1411
        %v1413 = vpop.f32.mrf.mxu0
        %1414 = vdwg.mxu0
        %v1415 = vmul.f32 %v1412, 0.5
        %v1416 = vmul.f32 %v1412, 0.044715
        %v1417 = vmul.f32 %v1416, %v1412
        %v1418 = vmul.f32 %v1417, %v1412
        %v1419 = vadd.f32 %v1412, %v1418
        %v1420 = vmul.f32 %v1419, 0.7978846
        %v1421 = vtanh.pop %v1420
        %v1422 = vadd.f32 %v1421, 1.0
        %v1423 = vmul.f32 %v1415, %v1422
        %v1424 = vpack.c.bf16 %v1423, %v1423
        %v1425 = vld [vmem:[%s13] sm:$0xf]
        %v1426 = vld [vmem:[%s13 + $0x4] sm:$0xf]
        %v1427 = vld [vmem:[%s13 + $0x8] sm:$0xf]
        %v1428 = vld [vmem:[%s13 + $0xc] sm:$0xf]
        %v1429 = vld [vmem:[%s13 + $0x10] sm:$0xf]
        %v1430 = vld [vmem:[%s13 + $0x14] sm:$0xf]
        %v1431 = vld [vmem:[%s13 + $0x18] sm:$0xf]
        %v1432 = vld [vmem:[%s13 + $0x1c] sm:$0xf]
        %v1433 = vld [vmem:[#allocation17] sm:$0x1]
        %v1435 = vperm.slane %v1433, 0
        %v1445 = vunpack.c.l.b16 %v1425
        %v1446 = vunpack.c.l.b16 %v1426
        %v1447 = vunpack.c.l.b16 %v1427
        %v1448 = vunpack.c.l.b16 %v1428
        %v1449 = vunpack.c.l.b16 %v1429
        %v1450 = vunpack.c.l.b16 %v1430
        %v1451 = vunpack.c.l.b16 %v1431
        %v1452 = vunpack.c.l.b16 %v1432
        %v1453 = vpack.c.b16 %v1446, %v1445
        %v1454 = vpack.c.b16 %v1448, %v1447
        %v1455 = vpack.c.b16 %v1450, %v1449
        %v1456 = vpack.c.b16 %v1452, %v1451
        %vm1461 = vcmask 523264
        %v1463 = vsel %vm1461, %v1424, 0
        %1465 = vmatpush.bf16.msra.mxu0 0
        %1466 = vmatpush.bf16.msra.mxu0 0
        %1467 = vmatpush.bf16.msra.mxu0 0
        %1468 = vmatpush.bf16.msra.mxu0 0
        %1469 = vmatpush.bf16.msra.mxu0 %v1456
        %1470 = vmatpush.bf16.msra.mxu0 %v1455
        %1471 = vmatpush.bf16.msra.mxu0 %v1454
        %1472 = vmatpush.bf16.msra.mxu0 %v1453
        %1473 = vmatmul.bf16.gmra.mxu0 %v1463
        %v1474 = vpop.f32.mrf.mxu0
        %v1475 = vadd.f32 %v1435, %v1474
        %v1476 = vpop.f32.mrf.mxu0
        %1477 = vdwg.mxu0
        %v1478 = vadd.f32 %v1475, %v1377
        %v1479 = vld [vmem:[#allocation18] sm:$0x1]
        %v1480 = vld [vmem:[#allocation20] sm:$0x1]
        %v1481 = vsel %vm962, %v1478, 0.0
        %1482 = vadd.xlane.f32.xlu0 %v1481
        %v1483 = vpop.xlane.xlu0 %1482
        %v1484 = vmul.f32 %v1483, %v1350
        %v1485 = vsub.f32 %v1478, %v1484
        %v1486 = vmul.f32 %v1485, %v1485
        %v1487 = vsel %vm962, %v1486, 0.0
        %1488 = vadd.xlane.f32.xlu0 %v1487
        %v1489 = vpop.xlane.xlu0 %1488
        %v1490 = vmul.f32 %v1489, %v1350
        %v1491 = vadd.f32 %v1490, 1e-12
        %v1492 = vrsqrt.pop %v1491
        %v1493 = vmul.f32 %v1492, %v1491
        %v1494 = vmul.f32 %v1493, %v1492
        %v1495 = vmul.f32 0.5, %v1494
        %v1496 = vsub.f32 1.5, %v1495
        %v1497 = vmul.f32 %v1492, %v1496
        %vm1498 = vweird.f32 %v1491
        %vm1499 = vweird.f32 %v1492
        %vm1500 = vmor %vm1498, %vm1499
        %v1501 = vsel %vm1500, %v1492, %v1497
        %v1502 = vmul.f32 %v1485, %v1501
        %v1504 = vperm.slane %v1479, 0
        %v1506 = vmul.f32 %v1502, %v1504
        %v1508 = vperm.slane %v1480, 0
        %v1510 = vadd.f32 %v1506, %v1508
        %v1511 = vpack.c.bf16 %v1510, %v1510
        %v1512 = vld [vmem:[%s17] sm:$0xf]
        %v1513 = vld [vmem:[%s17 + $0x4] sm:$0xf]
        %v1514 = vld [vmem:[%s17 + $0x8] sm:$0xf]
        %v1515 = vld [vmem:[%s17 + $0xc] sm:$0xf]
        %v1516 = vld [vmem:[%s18] sm:$0x1]
        %v1518 = vperm.slane %v1516, 0
        %v1524 = vunpack.c.l.b16 %v1512
        %v1525 = vunpack.c.l.b16 %v1513
        %v1526 = vunpack.c.l.b16 %v1514
        %v1527 = vunpack.c.l.b16 %v1515
        %v1528 = vpack.c.b16 %v1525, %v1524
        %v1529 = vpack.c.b16 %v1527, %v1526
        %v1533 = vsel %vm962, %v1511, 0
        %1535 = vmatpush.bf16.msra.mxu0 0
        %1536 = vmatpush.bf16.msra.mxu0 0
        %1537 = vmatpush.bf16.msra.mxu0 0
        %1538 = vmatpush.bf16.msra.mxu0 0
        %1539 = vmatpush.bf16.msra.mxu0 0
        %1540 = vmatpush.bf16.msra.mxu0 0
        %1541 = vmatpush.bf16.msra.mxu0 %v1529
        %1542 = vmatpush.bf16.msra.mxu0 %v1528
        %1543 = vmatmul.bf16.gmra.mxu0 %v1533
        %v1544 = vpop.f32.mrf.mxu0
        %v1545 = vadd.f32 %v1518, %v1544
        %v1546 = vpop.f32.mrf.mxu0
        %1547 = vdwg.mxu0
        %v1548 = vmax.f32 %v1545, 0.0
        %v1549 = vpack.c.bf16 %v1548, %v1548
        %v1550 = vld [vmem:[%s19] sm:$0xf]
        %v1551 = vld [vmem:[%s19 + $0x4] sm:$0xf]
        %v1552 = vld [vmem:[%s20] sm:$0x1]
        %v1554 = vperm.slane %v1552, 0
        %v1558 = vunpack.c.l.b16 %v1550
        %v1559 = vunpack.c.l.b16 %v1551
        %v1560 = vpack.c.b16 %v1559, %v1558
        %vm1562 = vcmask 130048
        %v1564 = vsel %vm1562, %v1549, 0
        %1566 = vmatpush.bf16.msra.mxu0 0
        %1567 = vmatpush.bf16.msra.mxu0 0
        %1568 = vmatpush.bf16.msra.mxu0 0
        %1569 = vmatpush.bf16.msra.mxu0 0
        %1570 = vmatpush.bf16.msra.mxu0 0
        %1571 = vmatpush.bf16.msra.mxu0 0
        %1572 = vmatpush.bf16.msra.mxu0 0
        %1573 = vmatpush.bf16.msra.mxu0 %v1560
        %1574 = vmatmul.bf16.gmra.mxu0 %v1564
        %v1575 = vpop.f32.mrf.mxu0
        %v1576 = vadd.f32 %v1554, %v1575
        %v1577 = vpop.f32.mrf.mxu0
        %1578 = vdwg.mxu0
        %v1579 = vld [vmem:[#allocation21] sm:$0xf]
        %v1580 = vld [vmem:[#allocation21 + $0x4] sm:$0xf]
        %v1581 = vld [vmem:[%s22] sm:$0x1]
        %v1583 = vperm.slane %v1581, 0
        %v1587 = vunpack.c.l.b16 %v1579
        %v1588 = vunpack.c.l.b16 %v1580
        %v1589 = vpack.c.b16 %v1588, %v1587
        %1591 = vmatpush.bf16.msra.mxu0 0
        %1592 = vmatpush.bf16.msra.mxu0 0
        %1593 = vmatpush.bf16.msra.mxu0 0
        %1594 = vmatpush.bf16.msra.mxu0 0
        %1595 = vmatpush.bf16.msra.mxu0 0
        %1596 = vmatpush.bf16.msra.mxu0 0
        %1597 = vmatpush.bf16.msra.mxu0 0
        %1598 = vmatpush.bf16.msra.mxu0 %v1589
        %1599 = vmatmul.bf16.gmra.mxu0 %v1564
        %v1600 = vpop.f32.mrf.mxu0
        %v1601 = vadd.f32 %v1583, %v1600
        %v1602 = vpop.f32.mrf.mxu0
        %1603 = vdwg.mxu0
        %v1604 = vadd.f32 %v1601, -3.3
        %v1605 = vxor.u32 %v1604, 2147483648
        %v1606 = vmul.f32 %v1605, 1.442695
        %v1607 = vpow.pop %v1606
        %v1608 = vadd.f32 %v1607, 1.0
        %v1609 = vrcp.pop %v1608
        %v1610 = vmul.f32 %v1608, %v1609
        %v1611 = vsub.f32 1.0, %v1610
        %v1612 = vmul.f32 %v1609, %v1611
        %v1613 = vadd.f32 %v1609, %v1612
        %vm1614 = vweird.f32 %v1608
        %vm1615 = vweird.f32 %v1609
        %vm1616 = vmor %vm1614, %vm1615
        %v1617 = vsel %vm1616, %v1609, %v1613
        %v1618 = vand.u32 2147483647, %v1608
        %vm1619 = vcmp.eq.f32.partialorder %v1618, 8.507059e+37
        %v1620 = vand.u32 %v1608, 2147483648
        %v1621 = vor.u32 1.1754944e-38, %v1620
        %v1622 = vsel %vm1619, %v1621, %v1617
        %v1623 = vmul.f32 1.0, %v1622
        %v1624 = vmul.f32 %v1576, %v1623
        %v1625 = vsub.f32 1.0, %v1623
        %v1626 = vmul.f32 %v1510, %v1625
        %v1627 = vadd.f32 %v1624, %v1626
        %v1628 = vld [vmem:[%s23] sm:$0x1]
        %v1629 = vld [vmem:[%s24] sm:$0x1]
        %v1630 = vsel %vm962, %v1627, 0.0
        %1631 = vadd.xlane.f32.xlu0 %v1630
        %v1632 = vpop.xlane.xlu0 %1631
        %v1633 = vmul.f32 %v1632, %v1350
        %v1634 = vsub.f32 %v1627, %v1633
        %v1635 = vmul.f32 %v1634, %v1634
        %v1636 = vsel %vm962, %v1635, 0.0
        %1637 = vadd.xlane.f32.xlu0 %v1636
        %v1638 = vpop.xlane.xlu0 %1637
        %v1639 = vmul.f32 %v1638, %v1350
        %v1640 = vadd.f32 %v1639, 1e-05
        %v1641 = vrsqrt.pop %v1640
        %v1642 = vmul.f32 %v1641, %v1640
        %v1643 = vmul.f32 %v1642, %v1641
        %v1644 = vmul.f32 0.5, %v1643
        %v1645 = vsub.f32 1.5, %v1644
        %v1646 = vmul.f32 %v1641, %v1645
        %vm1647 = vweird.f32 %v1640
        %vm1648 = vweird.f32 %v1641
        %vm1649 = vmor %vm1647, %vm1648
        %v1650 = vsel %vm1649, %v1641, %v1646
        %v1651 = vmul.f32 %v1634, %v1650
        %v1653 = vperm.slane %v1628, 0
        %v1655 = vmul.f32 %v1651, %v1653
        %v1657 = vperm.slane %v1629, 0
        %v1659 = vadd.f32 %v1655, %v1657
        %1660 = vst.msk [vmem:[%s934] sm:$0xff] %vm962, %v1659
        %s1661 = sand.u32 %s584, 1
        %s1662 = scalar_lea.sflag [#allocation5], %s1661
        %s1663 = sand.u32 %s584, 1
        %s1664 = smul.addr %s1663, 8
        %s1665 = scalar_lea.vmem [#allocation23], %s1664
        // Predicated region
        $region169: #{tpu_custom_call.1} parent=119 // pred_check
          %p1666 = pneg %p594
        $region170: #{tpu_custom_call.1} parent=119 // pred_check_branch
          %1668 = sbr.rel (%p1666) target = $region172
        $region171: #{tpu_custom_call.1} parent=119 // pred_region
          %1670 = vsyncadd %s1662, 0
          %s1671 = smul.addr %s46, 8
          %s1672 = scalar_lea.hbm %s25, %s1671
          %s1674 = sshll.u32 %s1665, 4
          %s1675 = int_to_ptr.vmem [resolvable:$true] %s1674
          %s1676 = sshll.u32 %s1672, 4
          %s1677 = int_to_ptr.hbm [resolvable:$true] %s1676
          %1679 = dma.vmem_to_hbm [thread:$0]  %s1675, 128, %s1677, %s1662
        $region172: #{tpu_custom_call.1} parent=119 // pred_fallthru
          _
      $region120: #{tpu_custom_call.1} parent=5 // pred_fallthru
        _
      %p1680 = scmp.le.s32.totalorder 2, %s41
      // Predicated region
      $region173: #{tpu_custom_call.1} parent=5 // pred_check
        %p1681 = pneg %p1680
      $region174: #{tpu_custom_call.1} parent=5 // pred_check_branch
        %1683 = sbr.rel (%p1681) target = $region176
      $region175: #{tpu_custom_call.1} parent=5 // pred_region
        %s1684 = ssub.s32 %s41, 2
        // Predicated region
        $region177: #{tpu_custom_call.1} parent=175 // pred_check
          %p1685 = pneg %p600
        $region178: #{tpu_custom_call.1} parent=175 // pred_check_branch
          %1687 = sbr.rel (%p1685) target = $region180
        $region179: #{tpu_custom_call.1} parent=175 // pred_region
          %s1688 = sand.u32 %s585, 1
          %s1689 = scalar_lea.sflag [#allocation5], %s1688
          %s1690 = sand.u32 %s585, 1
          %s1691 = smul.addr %s1690, 8
          %s1692 = scalar_lea.vmem [#allocation23], %s1691
          %1694 = dma.done %s1689, 128
        $region180: #{tpu_custom_call.1} parent=175 // pred_fallthru
          _
      $region176: #{tpu_custom_call.1} parent=5 // pred_fallthru
        _
    $region6: #{tpu_custom_call.1} parent=1 // loop_footer
      %s45 = sadd.s32 1, %s41
    $region7: #{tpu_custom_call.1} parent=1 // loop_footer_branch
      %40 = sbr.rel target = $region3
    $region8: #{tpu_custom_call.1} parent=1 // loop_exit
      _
    %1695 = vsyncpa [#allocation4], 1
    %s1696 = scalar_lea.sflag [#allocation4], 1
    %1697 = vsyncpa %s1696, 1
    %1698 = vsyncpa [#allocation7], 1
    %1699 = vsyncpa [#allocation10], 1
    %1700 = vsyncpa [#allocation13], 1
    %1701 = vsyncpa [#allocation16], 1
    %1702 = vsyncpa [#allocation19], 1
    %1703 = vsyncpa [#allocation22], 1
    %1704 = vsyncpa [#allocation5], 1
    %s1705 = scalar_lea.sflag [#allocation5], 1
    %1706 = vsyncpa %s1705, 1

</llo_original>
